<compile_context>
chip_gen: v7x
topology: tpu7x:2x2x1
jax: 0.10.0
libtpu: 0.0.40
codegen_flags: <defaults>
</compile_context>

<pallas_src>
import math
import jax
import jax.numpy as jnp
from jax.experimental import pallas as pl
from jax.experimental.pallas import tpu as pltpu

# ---------------- config (args of DiscriminatorNetwork) ----------------
HIDDEN_DIM = 32       # args.hidden_dim  (GRU input_size == hidden_size)
NUM_LAYERS = 2        # args.num_layers
MAX_SEQ_LEN = 8       # args.max_seq_len
PADDING_VALUE = -1.0  # args.padding_value
BATCH = 2


# ---------------- Pallas kernel ----------------
def disc_kernel(h_ref, t_ref, wih_ref, whh_ref, bih_ref, bhh_ref,
                wlin_ref, blin_ref, out_ref):
    """Everything lives fully in VMEM (shapes are tiny); all intermediates stay
    as values (vregs) — no scratch buffers.

    h_ref    : (S*B, E)    latent input, rows ordered t*B + b
    t_ref    : (B, 1)      int32 valid lengths
    wih_ref  : (3L, E, E)  GRU input weights, gate-major [3l+g], pre-transposed
    whh_ref  : (3L, E, E)  GRU hidden weights, gate-major, pre-transposed
    bih_ref  : (3L, 1, E)
    bhh_ref  : (3L, 1, E)
    wlin_ref : (1, E)      Linear(hidden_dim -> 1) weight
    blin_ref : (1, 1)
    out_ref  : (S*B, 1)    logits (flattened, rows ordered t*B + b)
    """
    SB, E = h_ref.shape
    B = t_ref.shape[0]
    S = SB // B
    L = wih_ref.shape[0] // 3

    # per-step validity: m_t[b] = (t < T[b]) — plain vector compare vs. const,
    # no mask tensor input, no tiny masked loads in the serial loop.
    lens_col = t_ref[...]                                          # (B, 1) int32
    ms = [(lens_col > t).astype(jnp.float32) for t in range(S)]    # S x (B, 1)
    mflat = jnp.concatenate(ms, axis=0)                            # (S*B, 1)

    x = h_ref[...]                                                 # (S*B, E) layer-0 input

    # GRU stack (L and S are small compile-time constants -> static unroll)
    for l in range(L):
        # hoisted input-side matmuls: whole sequence at once, one per gate
        gi_r = jnp.dot(x, wih_ref[3 * l + 0], preferred_element_type=jnp.float32) + bih_ref[3 * l + 0]
        gi_z = jnp.dot(x, wih_ref[3 * l + 1], preferred_element_type=jnp.float32) + bih_ref[3 * l + 1]
        gi_n = jnp.dot(x, wih_ref[3 * l + 2], preferred_element_type=jnp.float32) + bih_ref[3 * l + 2]

        whh_r = whh_ref[3 * l + 0]
        whh_z = whh_ref[3 * l + 1]
        whh_n = whh_ref[3 * l + 2]
        bhh_r = bhh_ref[3 * l + 0]
        bhh_z = bhh_ref[3 * l + 1]
        bhh_n = bhh_ref[3 * l + 2]

        h = jnp.zeros((B, E), jnp.float32)
        outs = []
        for t in range(S):
            lo = t * B
            # only the hidden-side (serially dependent) matmuls remain in the loop
            gh_r = jnp.dot(h, whh_r, preferred_element_type=jnp.float32) + bhh_r
            gh_z = jnp.dot(h, whh_z, preferred_element_type=jnp.float32) + bhh_z
            gh_n = jnp.dot(h, whh_n, preferred_element_type=jnp.float32) + bhh_n
            r = jax.nn.sigmoid(gi_r[lo:lo + B] + gh_r)
            z = jax.nn.sigmoid(gi_z[lo:lo + B] + gh_z)
            n = jnp.tanh(gi_n[lo:lo + B] + r * gh_n)
            h_new = (1.0 - z) * n + z * h
            # packed-sequence semantics: freeze carry past the valid length
            m = ms[t]
            h = m * h_new + (1.0 - m) * h
            outs.append(h)
        x = jnp.concatenate(outs, axis=0)                          # (S*B, E) next-layer input

    # fused pad_packed (padding_value) + Linear epilogue: one vectorized block,
    # one lane-reduce (Linear to 1 output), one store.
    y = mflat * x + (1.0 - mflat) * PADDING_VALUE                  # (S*B, E)
    logits = jnp.sum(y * wlin_ref[...], axis=1, keepdims=True) + blin_ref[...]
    out_ref[...] = logits


# ---------------- wrapper ----------------
def discriminator_forward(H, T, params):
    """H: (B, S, E) float32, T: (B,) int lengths. Returns logits (B, S)."""
    B, S, E = H.shape
    L = params["w_ih"].shape[0]

    # glue: time-major flatten (rows ordered t*B + b)
    Hs2d = jnp.transpose(H, (1, 0, 2)).reshape(S * B, E).astype(jnp.float32)
    lens = T.astype(jnp.int32)[:, None]                            # (B, 1)

    # gate-major, pre-transposed weights: index 3*l + g, g in {0:r, 1:z, 2:n}
    wih_g = jnp.transpose(params["w_ih"].reshape(L, 3, E, E), (0, 1, 3, 2)).reshape(3 * L, E, E)
    whh_g = jnp.transpose(params["w_hh"].reshape(L, 3, E, E), (0, 1, 3, 2)).reshape(3 * L, E, E)
    bih_g = params["b_ih"].reshape(3 * L, 1, E)
    bhh_g = params["b_hh"].reshape(3 * L, 1, E)
    wlin = params["w_lin"]                                         # (1, E)
    blin = params["b_lin"][None, :]                                # (1, 1)

    vmem = pl.BlockSpec(memory_space=pltpu.MemorySpace.VMEM)
    logits_flat = pl.pallas_call(
        disc_kernel,
        out_shape=jax.ShapeDtypeStruct((S * B, 1), jnp.float32),
        in_specs=[vmem] * 8,
        out_specs=vmem,
    )(Hs2d, lens, wih_g, whh_g, bih_g, bhh_g, wlin, blin)

    # TODO(synk): for throughput, batch many sequences so B is a multiple of 8
    # (and on v7x add a batch grid axis with dimension_semantics=("parallel",)).
    return jnp.transpose(logits_flat.reshape(S, B), (1, 0))        # (B, S)


# ---------------- deterministic parameter init (mirrors module __init__) ----------------
def xavier_uniform(key, shape):
    fan_out, fan_in = shape
    bound = math.sqrt(6.0 / (fan_in + fan_out))
    return jax.random.uniform(key, shape, jnp.float32, -bound, bound)


def init_params(key, hidden_dim, num_layers):
    E, L = hidden_dim, num_layers
    keys = jax.random.split(key, 2 * L + 1)
    w_ih = jnp.stack([xavier_uniform(keys[2 * l], (3 * E, E)) for l in range(L)])
    w_hh = jnp.stack([xavier_uniform(keys[2 * l + 1], (3 * E, E)) for l in range(L)])
    b_ih = jnp.ones((L, 3 * E), jnp.float32)    # bias_ih filled with 1
    b_hh = jnp.zeros((L, 3 * E), jnp.float32)   # bias_hh filled with 0
    w_lin = xavier_uniform(keys[-1], (1, E))    # Linear(hidden_dim, 1)
    b_lin = jnp.zeros((1,), jnp.float32)
    return dict(w_ih=w_ih, w_hh=w_hh, b_ih=b_ih, b_hh=b_hh, w_lin=w_lin, b_lin=b_lin)


# ---------------- pure-JAX reference (PyTorch GRU + packed-seq semantics) ----------------
def discriminator_reference(H, T, params):
    B, S, E = H.shape
    L = params["w_ih"].shape[0]
    x = H.astype(jnp.float32)
    for l in range(L):
        h = jnp.zeros((B, E), jnp.float32)
        outs = []
        for t in range(S):
            gi = x[:, t, :] @ params["w_ih"][l].T + params["b_ih"][l]
            gh = h @ params["w_hh"][l].T + params["b_hh"][l]
            r = jax.nn.sigmoid(gi[:, :E] + gh[:, :E])
            z = jax.nn.sigmoid(gi[:, E:2 * E] + gh[:, E:2 * E])
            n = jnp.tanh(gi[:, 2 * E:] + r * gh[:, 2 * E:])
            h_new = (1.0 - z) * n + z * h
            m = (t < T).astype(jnp.float32)[:, None]
            h = m * h_new + (1.0 - m) * h
            outs.append(h)
        x = jnp.stack(outs, axis=1)
    valid = (jnp.arange(S)[None, :] < T[:, None])[..., None]
    y = jnp.where(valid, x, PADDING_VALUE)
    logits = y @ params["w_lin"].T + params["b_lin"]
    return logits[..., 0]                                          # (B, S)


if __name__ == "__main__":
    key = jax.random.PRNGKey(0)
    k_param, k_h = jax.random.split(key)

    params = init_params(k_param, HIDDEN_DIM, NUM_LAYERS)

    H = jax.random.normal(k_h, (BATCH, MAX_SEQ_LEN, HIDDEN_DIM), jnp.float32)
    T = jnp.array([MAX_SEQ_LEN, 5], dtype=jnp.int32)   # per-sequence valid lengths

    logits = discriminator_forward(H, T, params)
    logits = jax.block_until_ready(logits)

    ref = discriminator_reference(H, T, params)
    assert logits.shape == (BATCH, MAX_SEQ_LEN)
    assert jnp.allclose(logits, ref, atol=1e-5, rtol=1e-5), "mismatch vs reference"

    print("KERNEL_OK")
</pallas_src>

<mosaic_0001>
module attributes {stable_mosaic.version = 11 : i64} {
  func.func @disc_kernel(%arg0: memref<16x32xf32, #tpu.memory_space<vmem>>, %arg1: memref<2x1xi32, #tpu.memory_space<vmem>>, %arg2: memref<6x32x32xf32, #tpu.memory_space<vmem>>, %arg3: memref<6x32x32xf32, #tpu.memory_space<vmem>>, %arg4: memref<6x1x32xf32, #tpu.memory_space<vmem>>, %arg5: memref<6x1x32xf32, #tpu.memory_space<vmem>>, %arg6: memref<1x32xf32, #tpu.memory_space<vmem>>, %arg7: memref<1x1xf32, #tpu.memory_space<vmem>>, %arg8: memref<16x1xf32, #tpu.memory_space<vmem>>) attributes {dimension_semantics = [], scalar_prefetch = 0 : i64, scratch_operands = 0 : i64, tpu.core_type = #tpu.core_type<tc>} {
    %c0 = arith.constant 0 : index
    %c0_0 = arith.constant 0 : index
    %0 = vector.load %arg1[%c0, %c0_0] : memref<2x1xi32, #tpu.memory_space<vmem>>, vector<2x1xi32>
    %c0_i32 = arith.constant 0 : i32
    %1 = vector.broadcast %c0_i32 : i32 to vector<2x1xi32>
    %2 = arith.cmpi sgt, %0, %1 : vector<2x1xi32>
    %3 = arith.extui %2 : vector<2x1xi1> to vector<2x1xi32>
    %4 = arith.sitofp %3 : vector<2x1xi32> to vector<2x1xf32>
    %c1_i32 = arith.constant 1 : i32
    %5 = vector.broadcast %c1_i32 : i32 to vector<2x1xi32>
    %6 = arith.cmpi sgt, %0, %5 : vector<2x1xi32>
    %7 = arith.extui %6 : vector<2x1xi1> to vector<2x1xi32>
    %8 = arith.sitofp %7 : vector<2x1xi32> to vector<2x1xf32>
    %c2_i32 = arith.constant 2 : i32
    %9 = vector.broadcast %c2_i32 : i32 to vector<2x1xi32>
    %10 = arith.cmpi sgt, %0, %9 : vector<2x1xi32>
    %11 = arith.extui %10 : vector<2x1xi1> to vector<2x1xi32>
    %12 = arith.sitofp %11 : vector<2x1xi32> to vector<2x1xf32>
    %c3_i32 = arith.constant 3 : i32
    %13 = vector.broadcast %c3_i32 : i32 to vector<2x1xi32>
    %14 = arith.cmpi sgt, %0, %13 : vector<2x1xi32>
    %15 = arith.extui %14 : vector<2x1xi1> to vector<2x1xi32>
    %16 = arith.sitofp %15 : vector<2x1xi32> to vector<2x1xf32>
    %c4_i32 = arith.constant 4 : i32
    %17 = vector.broadcast %c4_i32 : i32 to vector<2x1xi32>
    %18 = arith.cmpi sgt, %0, %17 : vector<2x1xi32>
    %19 = arith.extui %18 : vector<2x1xi1> to vector<2x1xi32>
    %20 = arith.sitofp %19 : vector<2x1xi32> to vector<2x1xf32>
    %c5_i32 = arith.constant 5 : i32
    %21 = vector.broadcast %c5_i32 : i32 to vector<2x1xi32>
    %22 = arith.cmpi sgt, %0, %21 : vector<2x1xi32>
    %23 = arith.extui %22 : vector<2x1xi1> to vector<2x1xi32>
    %24 = arith.sitofp %23 : vector<2x1xi32> to vector<2x1xf32>
    %c6_i32 = arith.constant 6 : i32
    %25 = vector.broadcast %c6_i32 : i32 to vector<2x1xi32>
    %26 = arith.cmpi sgt, %0, %25 : vector<2x1xi32>
    %27 = arith.extui %26 : vector<2x1xi1> to vector<2x1xi32>
    %28 = arith.sitofp %27 : vector<2x1xi32> to vector<2x1xf32>
    %c7_i32 = arith.constant 7 : i32
    %29 = vector.broadcast %c7_i32 : i32 to vector<2x1xi32>
    %30 = arith.cmpi sgt, %0, %29 : vector<2x1xi32>
    %31 = arith.extui %30 : vector<2x1xi1> to vector<2x1xi32>
    %32 = arith.sitofp %31 : vector<2x1xi32> to vector<2x1xf32>
    %33 = tpu.concatenate %4, %8, %12, %16, %20, %24, %28, %32 in 0 : vector<2x1xf32>, vector<2x1xf32>, vector<2x1xf32>, vector<2x1xf32>, vector<2x1xf32>, vector<2x1xf32>, vector<2x1xf32>, vector<2x1xf32> -> vector<16x1xf32>
    %c0_1 = arith.constant 0 : index
    %c0_2 = arith.constant 0 : index
    %34 = vector.load %arg0[%c0_1, %c0_2] : memref<16x32xf32, #tpu.memory_space<vmem>>, vector<16x32xf32>
    %c0_3 = arith.constant 0 : index
    %c0_4 = arith.constant 0 : index
    %c0_5 = arith.constant 0 : index
    %35 = vector.load %arg2[%c0_3, %c0_4, %c0_5] : memref<6x32x32xf32, #tpu.memory_space<vmem>>, vector<1x32x32xf32>
    %36 = vector.shape_cast %35 : vector<1x32x32xf32> to vector<32x32xf32>
    %cst = arith.constant dense<0.000000e+00> : vector<16x32xf32>
    %37 = tpu.matmul %34, %36, %cst {dimension_numbers = #tpu.dot_dimension_numbers<[1], [0], [0], [1], [0, 0, 1, 1], [], []>} : vector<16x32xf32>, vector<32x32xf32>, vector<16x32xf32> -> vector<16x32xf32>
    %c0_6 = arith.constant 0 : index
    %c0_7 = arith.constant 0 : index
    %c0_8 = arith.constant 0 : index
    %38 = vector.load %arg4[%c0_6, %c0_7, %c0_8] : memref<6x1x32xf32, #tpu.memory_space<vmem>>, vector<1x1x32xf32>
    %39 = vector.shape_cast %38 : vector<1x1x32xf32> to vector<1x32xf32>
    %40 = vector.broadcast %39 : vector<1x32xf32> to vector<16x32xf32>
    %41 = arith.addf %37, %40 : vector<16x32xf32>
    %c1 = arith.constant 1 : index
    %c0_9 = arith.constant 0 : index
    %c0_10 = arith.constant 0 : index
    %42 = vector.load %arg2[%c1, %c0_9, %c0_10] : memref<6x32x32xf32, #tpu.memory_space<vmem>>, vector<1x32x32xf32>
    %43 = vector.shape_cast %42 : vector<1x32x32xf32> to vector<32x32xf32>
    %cst_11 = arith.constant dense<0.000000e+00> : vector<16x32xf32>
    %44 = tpu.matmul %34, %43, %cst_11 {dimension_numbers = #tpu.dot_dimension_numbers<[1], [0], [0], [1], [0, 0, 1, 1], [], []>} : vector<16x32xf32>, vector<32x32xf32>, vector<16x32xf32> -> vector<16x32xf32>
    %c1_12 = arith.constant 1 : index
    %c0_13 = arith.constant 0 : index
    %c0_14 = arith.constant 0 : index
    %45 = vector.load %arg4[%c1_12, %c0_13, %c0_14] : memref<6x1x32xf32, #tpu.memory_space<vmem>>, vector<1x1x32xf32>
    %46 = vector.shape_cast %45 : vector<1x1x32xf32> to vector<1x32xf32>
    %47 = vector.broadcast %46 : vector<1x32xf32> to vector<16x32xf32>
    %48 = arith.addf %44, %47 : vector<16x32xf32>
    %c2 = arith.constant 2 : index
    %c0_15 = arith.constant 0 : index
    %c0_16 = arith.constant 0 : index
    %49 = vector.load %arg2[%c2, %c0_15, %c0_16] : memref<6x32x32xf32, #tpu.memory_space<vmem>>, vector<1x32x32xf32>
    %50 = vector.shape_cast %49 : vector<1x32x32xf32> to vector<32x32xf32>
    %cst_17 = arith.constant dense<0.000000e+00> : vector<16x32xf32>
    %51 = tpu.matmul %34, %50, %cst_17 {dimension_numbers = #tpu.dot_dimension_numbers<[1], [0], [0], [1], [0, 0, 1, 1], [], []>} : vector<16x32xf32>, vector<32x32xf32>, vector<16x32xf32> -> vector<16x32xf32>
    %c2_18 = arith.constant 2 : index
    %c0_19 = arith.constant 0 : index
    %c0_20 = arith.constant 0 : index
    %52 = vector.load %arg4[%c2_18, %c0_19, %c0_20] : memref<6x1x32xf32, #tpu.memory_space<vmem>>, vector<1x1x32xf32>
    %53 = vector.shape_cast %52 : vector<1x1x32xf32> to vector<1x32xf32>
    %54 = vector.broadcast %53 : vector<1x32xf32> to vector<16x32xf32>
    %55 = arith.addf %51, %54 : vector<16x32xf32>
    %c0_21 = arith.constant 0 : index
    %c0_22 = arith.constant 0 : index
    %c0_23 = arith.constant 0 : index
    %56 = vector.load %arg3[%c0_21, %c0_22, %c0_23] : memref<6x32x32xf32, #tpu.memory_space<vmem>>, vector<1x32x32xf32>
    %57 = vector.shape_cast %56 : vector<1x32x32xf32> to vector<32x32xf32>
    %c1_24 = arith.constant 1 : index
    %c0_25 = arith.constant 0 : index
    %c0_26 = arith.constant 0 : index
    %58 = vector.load %arg3[%c1_24, %c0_25, %c0_26] : memref<6x32x32xf32, #tpu.memory_space<vmem>>, vector<1x32x32xf32>
    %59 = vector.shape_cast %58 : vector<1x32x32xf32> to vector<32x32xf32>
    %c2_27 = arith.constant 2 : index
    %c0_28 = arith.constant 0 : index
    %c0_29 = arith.constant 0 : index
    %60 = vector.load %arg3[%c2_27, %c0_28, %c0_29] : memref<6x32x32xf32, #tpu.memory_space<vmem>>, vector<1x32x32xf32>
    %61 = vector.shape_cast %60 : vector<1x32x32xf32> to vector<32x32xf32>
    %c0_30 = arith.constant 0 : index
    %c0_31 = arith.constant 0 : index
    %c0_32 = arith.constant 0 : index
    %62 = vector.load %arg5[%c0_30, %c0_31, %c0_32] : memref<6x1x32xf32, #tpu.memory_space<vmem>>, vector<1x1x32xf32>
    %63 = vector.shape_cast %62 : vector<1x1x32xf32> to vector<1x32xf32>
    %c1_33 = arith.constant 1 : index
    %c0_34 = arith.constant 0 : index
    %c0_35 = arith.constant 0 : index
    %64 = vector.load %arg5[%c1_33, %c0_34, %c0_35] : memref<6x1x32xf32, #tpu.memory_space<vmem>>, vector<1x1x32xf32>
    %65 = vector.shape_cast %64 : vector<1x1x32xf32> to vector<1x32xf32>
    %c2_36 = arith.constant 2 : index
    %c0_37 = arith.constant 0 : index
    %c0_38 = arith.constant 0 : index
    %66 = vector.load %arg5[%c2_36, %c0_37, %c0_38] : memref<6x1x32xf32, #tpu.memory_space<vmem>>, vector<1x1x32xf32>
    %67 = vector.shape_cast %66 : vector<1x1x32xf32> to vector<1x32xf32>
    %cst_39 = arith.constant 0.000000e+00 : f32
    %68 = vector.broadcast %cst_39 : f32 to vector<2x32xf32>
    %cst_40 = arith.constant dense<0.000000e+00> : vector<2x32xf32>
    %69 = tpu.matmul %68, %57, %cst_40 {dimension_numbers = #tpu.dot_dimension_numbers<[1], [0], [0], [1], [0, 0, 1, 1], [], []>} : vector<2x32xf32>, vector<32x32xf32>, vector<2x32xf32> -> vector<2x32xf32>
    %70 = vector.broadcast %63 : vector<1x32xf32> to vector<2x32xf32>
    %71 = arith.addf %69, %70 : vector<2x32xf32>
    %cst_41 = arith.constant dense<0.000000e+00> : vector<2x32xf32>
    %72 = tpu.matmul %68, %59, %cst_41 {dimension_numbers = #tpu.dot_dimension_numbers<[1], [0], [0], [1], [0, 0, 1, 1], [], []>} : vector<2x32xf32>, vector<32x32xf32>, vector<2x32xf32> -> vector<2x32xf32>
    %73 = vector.broadcast %65 : vector<1x32xf32> to vector<2x32xf32>
    %74 = arith.addf %72, %73 : vector<2x32xf32>
    %cst_42 = arith.constant dense<0.000000e+00> : vector<2x32xf32>
    %75 = tpu.matmul %68, %61, %cst_42 {dimension_numbers = #tpu.dot_dimension_numbers<[1], [0], [0], [1], [0, 0, 1, 1], [], []>} : vector<2x32xf32>, vector<32x32xf32>, vector<2x32xf32> -> vector<2x32xf32>
    %76 = vector.broadcast %67 : vector<1x32xf32> to vector<2x32xf32>
    %77 = arith.addf %75, %76 : vector<2x32xf32>
    %78 = vector.extract_strided_slice %41 {offsets = [0, 0], sizes = [2, 32], strides = [1, 1]} : vector<16x32xf32> to vector<2x32xf32>
    %79 = arith.addf %78, %71 : vector<2x32xf32>
    %80 = arith.negf %79 : vector<2x32xf32>
    %81 = math.exp %80 : vector<2x32xf32>
    %cst_43 = arith.constant 1.000000e+00 : f32
    %82 = vector.broadcast %cst_43 : f32 to vector<2x32xf32>
    %83 = arith.addf %82, %81 : vector<2x32xf32>
    %84 = arith.divf %82, %83 : vector<2x32xf32>
    %85 = vector.extract_strided_slice %48 {offsets = [0, 0], sizes = [2, 32], strides = [1, 1]} : vector<16x32xf32> to vector<2x32xf32>
    %86 = arith.addf %85, %74 : vector<2x32xf32>
    %87 = arith.negf %86 : vector<2x32xf32>
    %88 = math.exp %87 : vector<2x32xf32>
    %cst_44 = arith.constant 1.000000e+00 : f32
    %89 = vector.broadcast %cst_44 : f32 to vector<2x32xf32>
    %90 = arith.addf %89, %88 : vector<2x32xf32>
    %91 = arith.divf %89, %90 : vector<2x32xf32>
    %92 = vector.extract_strided_slice %55 {offsets = [0, 0], sizes = [2, 32], strides = [1, 1]} : vector<16x32xf32> to vector<2x32xf32>
    %93 = arith.mulf %84, %77 : vector<2x32xf32>
    %94 = arith.addf %92, %93 : vector<2x32xf32>
    %95 = math.tanh %94 : vector<2x32xf32>
    %cst_45 = arith.constant 1.000000e+00 : f32
    %96 = vector.broadcast %cst_45 : f32 to vector<2x32xf32>
    %97 = arith.subf %96, %91 : vector<2x32xf32>
    %98 = arith.mulf %97, %95 : vector<2x32xf32>
    %99 = arith.mulf %91, %68 : vector<2x32xf32>
    %100 = arith.addf %98, %99 : vector<2x32xf32>
    %101 = vector.broadcast %4 : vector<2x1xf32> to vector<2x32xf32>
    %102 = arith.mulf %101, %100 : vector<2x32xf32>
    %cst_46 = arith.constant 1.000000e+00 : f32
    %103 = vector.broadcast %cst_46 : f32 to vector<2x1xf32>
    %104 = arith.subf %103, %4 : vector<2x1xf32>
    %105 = vector.broadcast %104 : vector<2x1xf32> to vector<2x32xf32>
    %106 = arith.mulf %105, %68 : vector<2x32xf32>
    %107 = arith.addf %102, %106 : vector<2x32xf32>
    %cst_47 = arith.constant dense<0.000000e+00> : vector<2x32xf32>
    %108 = tpu.matmul %107, %57, %cst_47 {dimension_numbers = #tpu.dot_dimension_numbers<[1], [0], [0], [1], [0, 0, 1, 1], [], []>} : vector<2x32xf32>, vector<32x32xf32>, vector<2x32xf32> -> vector<2x32xf32>
    %109 = vector.broadcast %63 : vector<1x32xf32> to vector<2x32xf32>
    %110 = arith.addf %108, %109 : vector<2x32xf32>
    %cst_48 = arith.constant dense<0.000000e+00> : vector<2x32xf32>
    %111 = tpu.matmul %107, %59, %cst_48 {dimension_numbers = #tpu.dot_dimension_numbers<[1], [0], [0], [1], [0, 0, 1, 1], [], []>} : vector<2x32xf32>, vector<32x32xf32>, vector<2x32xf32> -> vector<2x32xf32>
    %112 = vector.broadcast %65 : vector<1x32xf32> to vector<2x32xf32>
    %113 = arith.addf %111, %112 : vector<2x32xf32>
    %cst_49 = arith.constant dense<0.000000e+00> : vector<2x32xf32>
    %114 = tpu.matmul %107, %61, %cst_49 {dimension_numbers = #tpu.dot_dimension_numbers<[1], [0], [0], [1], [0, 0, 1, 1], [], []>} : vector<2x32xf32>, vector<32x32xf32>, vector<2x32xf32> -> vector<2x32xf32>
    %115 = vector.broadcast %67 : vector<1x32xf32> to vector<2x32xf32>
    %116 = arith.addf %114, %115 : vector<2x32xf32>
    %117 = vector.extract_strided_slice %41 {offsets = [2, 0], sizes = [2, 32], strides = [1, 1]} : vector<16x32xf32> to vector<2x32xf32>
    %118 = arith.addf %117, %110 : vector<2x32xf32>
    %119 = arith.negf %118 : vector<2x32xf32>
    %120 = math.exp %119 : vector<2x32xf32>
    %cst_50 = arith.constant 1.000000e+00 : f32
    %121 = vector.broadcast %cst_50 : f32 to vector<2x32xf32>
    %122 = arith.addf %121, %120 : vector<2x32xf32>
    %123 = arith.divf %121, %122 : vector<2x32xf32>
    %124 = vector.extract_strided_slice %48 {offsets = [2, 0], sizes = [2, 32], strides = [1, 1]} : vector<16x32xf32> to vector<2x32xf32>
    %125 = arith.addf %124, %113 : vector<2x32xf32>
    %126 = arith.negf %125 : vector<2x32xf32>
    %127 = math.exp %126 : vector<2x32xf32>
    %cst_51 = arith.constant 1.000000e+00 : f32
    %128 = vector.broadcast %cst_51 : f32 to vector<2x32xf32>
    %129 = arith.addf %128, %127 : vector<2x32xf32>
    %130 = arith.divf %128, %129 : vector<2x32xf32>
    %131 = vector.extract_strided_slice %55 {offsets = [2, 0], sizes = [2, 32], strides = [1, 1]} : vector<16x32xf32> to vector<2x32xf32>
    %132 = arith.mulf %123, %116 : vector<2x32xf32>
    %133 = arith.addf %131, %132 : vector<2x32xf32>
    %134 = math.tanh %133 : vector<2x32xf32>
    %cst_52 = arith.constant 1.000000e+00 : f32
    %135 = vector.broadcast %cst_52 : f32 to vector<2x32xf32>
    %136 = arith.subf %135, %130 : vector<2x32xf32>
    %137 = arith.mulf %136, %134 : vector<2x32xf32>
    %138 = arith.mulf %130, %107 : vector<2x32xf32>
    %139 = arith.addf %137, %138 : vector<2x32xf32>
    %140 = vector.broadcast %8 : vector<2x1xf32> to vector<2x32xf32>
    %141 = arith.mulf %140, %139 : vector<2x32xf32>
    %cst_53 = arith.constant 1.000000e+00 : f32
    %142 = vector.broadcast %cst_53 : f32 to vector<2x1xf32>
    %143 = arith.subf %142, %8 : vector<2x1xf32>
    %144 = vector.broadcast %143 : vector<2x1xf32> to vector<2x32xf32>
    %145 = arith.mulf %144, %107 : vector<2x32xf32>
    %146 = arith.addf %141, %145 : vector<2x32xf32>
    %cst_54 = arith.constant dense<0.000000e+00> : vector<2x32xf32>
    %147 = tpu.matmul %146, %57, %cst_54 {dimension_numbers = #tpu.dot_dimension_numbers<[1], [0], [0], [1], [0, 0, 1, 1], [], []>} : vector<2x32xf32>, vector<32x32xf32>, vector<2x32xf32> -> vector<2x32xf32>
    %148 = vector.broadcast %63 : vector<1x32xf32> to vector<2x32xf32>
    %149 = arith.addf %147, %148 : vector<2x32xf32>
    %cst_55 = arith.constant dense<0.000000e+00> : vector<2x32xf32>
    %150 = tpu.matmul %146, %59, %cst_55 {dimension_numbers = #tpu.dot_dimension_numbers<[1], [0], [0], [1], [0, 0, 1, 1], [], []>} : vector<2x32xf32>, vector<32x32xf32>, vector<2x32xf32> -> vector<2x32xf32>
    %151 = vector.broadcast %65 : vector<1x32xf32> to vector<2x32xf32>
    %152 = arith.addf %150, %151 : vector<2x32xf32>
    %cst_56 = arith.constant dense<0.000000e+00> : vector<2x32xf32>
    %153 = tpu.matmul %146, %61, %cst_56 {dimension_numbers = #tpu.dot_dimension_numbers<[1], [0], [0], [1], [0, 0, 1, 1], [], []>} : vector<2x32xf32>, vector<32x32xf32>, vector<2x32xf32> -> vector<2x32xf32>
    %154 = vector.broadcast %67 : vector<1x32xf32> to vector<2x32xf32>
    %155 = arith.addf %153, %154 : vector<2x32xf32>
    %156 = vector.extract_strided_slice %41 {offsets = [4, 0], sizes = [2, 32], strides = [1, 1]} : vector<16x32xf32> to vector<2x32xf32>
    %157 = arith.addf %156, %149 : vector<2x32xf32>
    %158 = arith.negf %157 : vector<2x32xf32>
    %159 = math.exp %158 : vector<2x32xf32>
    %cst_57 = arith.constant 1.000000e+00 : f32
    %160 = vector.broadcast %cst_57 : f32 to vector<2x32xf32>
    %161 = arith.addf %160, %159 : vector<2x32xf32>
    %162 = arith.divf %160, %161 : vector<2x32xf32>
    %163 = vector.extract_strided_slice %48 {offsets = [4, 0], sizes = [2, 32], strides = [1, 1]} : vector<16x32xf32> to vector<2x32xf32>
    %164 = arith.addf %163, %152 : vector<2x32xf32>
    %165 = arith.negf %164 : vector<2x32xf32>
    %166 = math.exp %165 : vector<2x32xf32>
    %cst_58 = arith.constant 1.000000e+00 : f32
    %167 = vector.broadcast %cst_58 : f32 to vector<2x32xf32>
    %168 = arith.addf %167, %166 : vector<2x32xf32>
    %169 = arith.divf %167, %168 : vector<2x32xf32>
    %170 = vector.extract_strided_slice %55 {offsets = [4, 0], sizes = [2, 32], strides = [1, 1]} : vector<16x32xf32> to vector<2x32xf32>
    %171 = arith.mulf %162, %155 : vector<2x32xf32>
    %172 = arith.addf %170, %171 : vector<2x32xf32>
    %173 = math.tanh %172 : vector<2x32xf32>
    %cst_59 = arith.constant 1.000000e+00 : f32
    %174 = vector.broadcast %cst_59 : f32 to vector<2x32xf32>
    %175 = arith.subf %174, %169 : vector<2x32xf32>
    %176 = arith.mulf %175, %173 : vector<2x32xf32>
    %177 = arith.mulf %169, %146 : vector<2x32xf32>
    %178 = arith.addf %176, %177 : vector<2x32xf32>
    %179 = vector.broadcast %12 : vector<2x1xf32> to vector<2x32xf32>
    %180 = arith.mulf %179, %178 : vector<2x32xf32>
    %cst_60 = arith.constant 1.000000e+00 : f32
    %181 = vector.broadcast %cst_60 : f32 to vector<2x1xf32>
    %182 = arith.subf %181, %12 : vector<2x1xf32>
    %183 = vector.broadcast %182 : vector<2x1xf32> to vector<2x32xf32>
    %184 = arith.mulf %183, %146 : vector<2x32xf32>
    %185 = arith.addf %180, %184 : vector<2x32xf32>
    %cst_61 = arith.constant dense<0.000000e+00> : vector<2x32xf32>
    %186 = tpu.matmul %185, %57, %cst_61 {dimension_numbers = #tpu.dot_dimension_numbers<[1], [0], [0], [1], [0, 0, 1, 1], [], []>} : vector<2x32xf32>, vector<32x32xf32>, vector<2x32xf32> -> vector<2x32xf32>
    %187 = vector.broadcast %63 : vector<1x32xf32> to vector<2x32xf32>
    %188 = arith.addf %186, %187 : vector<2x32xf32>
    %cst_62 = arith.constant dense<0.000000e+00> : vector<2x32xf32>
    %189 = tpu.matmul %185, %59, %cst_62 {dimension_numbers = #tpu.dot_dimension_numbers<[1], [0], [0], [1], [0, 0, 1, 1], [], []>} : vector<2x32xf32>, vector<32x32xf32>, vector<2x32xf32> -> vector<2x32xf32>
    %190 = vector.broadcast %65 : vector<1x32xf32> to vector<2x32xf32>
    %191 = arith.addf %189, %190 : vector<2x32xf32>
    %cst_63 = arith.constant dense<0.000000e+00> : vector<2x32xf32>
    %192 = tpu.matmul %185, %61, %cst_63 {dimension_numbers = #tpu.dot_dimension_numbers<[1], [0], [0], [1], [0, 0, 1, 1], [], []>} : vector<2x32xf32>, vector<32x32xf32>, vector<2x32xf32> -> vector<2x32xf32>
    %193 = vector.broadcast %67 : vector<1x32xf32> to vector<2x32xf32>
    %194 = arith.addf %192, %193 : vector<2x32xf32>
    %195 = vector.extract_strided_slice %41 {offsets = [6, 0], sizes = [2, 32], strides = [1, 1]} : vector<16x32xf32> to vector<2x32xf32>
    %196 = arith.addf %195, %188 : vector<2x32xf32>
    %197 = arith.negf %196 : vector<2x32xf32>
    %198 = math.exp %197 : vector<2x32xf32>
    %cst_64 = arith.constant 1.000000e+00 : f32
    %199 = vector.broadcast %cst_64 : f32 to vector<2x32xf32>
    %200 = arith.addf %199, %198 : vector<2x32xf32>
    %201 = arith.divf %199, %200 : vector<2x32xf32>
    %202 = vector.extract_strided_slice %48 {offsets = [6, 0], sizes = [2, 32], strides = [1, 1]} : vector<16x32xf32> to vector<2x32xf32>
    %203 = arith.addf %202, %191 : vector<2x32xf32>
    %204 = arith.negf %203 : vector<2x32xf32>
    %205 = math.exp %204 : vector<2x32xf32>
    %cst_65 = arith.constant 1.000000e+00 : f32
    %206 = vector.broadcast %cst_65 : f32 to vector<2x32xf32>
    %207 = arith.addf %206, %205 : vector<2x32xf32>
    %208 = arith.divf %206, %207 : vector<2x32xf32>
    %209 = vector.extract_strided_slice %55 {offsets = [6, 0], sizes = [2, 32], strides = [1, 1]} : vector<16x32xf32> to vector<2x32xf32>
    %210 = arith.mulf %201, %194 : vector<2x32xf32>
    %211 = arith.addf %209, %210 : vector<2x32xf32>
    %212 = math.tanh %211 : vector<2x32xf32>
    %cst_66 = arith.constant 1.000000e+00 : f32
    %213 = vector.broadcast %cst_66 : f32 to vector<2x32xf32>
    %214 = arith.subf %213, %208 : vector<2x32xf32>
    %215 = arith.mulf %214, %212 : vector<2x32xf32>
    %216 = arith.mulf %208, %185 : vector<2x32xf32>
    %217 = arith.addf %215, %216 : vector<2x32xf32>
    %218 = vector.broadcast %16 : vector<2x1xf32> to vector<2x32xf32>
    %219 = arith.mulf %218, %217 : vector<2x32xf32>
    %cst_67 = arith.constant 1.000000e+00 : f32
    %220 = vector.broadcast %cst_67 : f32 to vector<2x1xf32>
    %221 = arith.subf %220, %16 : vector<2x1xf32>
    %222 = vector.broadcast %221 : vector<2x1xf32> to vector<2x32xf32>
    %223 = arith.mulf %222, %185 : vector<2x32xf32>
    %224 = arith.addf %219, %223 : vector<2x32xf32>
    %cst_68 = arith.constant dense<0.000000e+00> : vector<2x32xf32>
    %225 = tpu.matmul %224, %57, %cst_68 {dimension_numbers = #tpu.dot_dimension_numbers<[1], [0], [0], [1], [0, 0, 1, 1], [], []>} : vector<2x32xf32>, vector<32x32xf32>, vector<2x32xf32> -> vector<2x32xf32>
    %226 = vector.broadcast %63 : vector<1x32xf32> to vector<2x32xf32>
    %227 = arith.addf %225, %226 : vector<2x32xf32>
    %cst_69 = arith.constant dense<0.000000e+00> : vector<2x32xf32>
    %228 = tpu.matmul %224, %59, %cst_69 {dimension_numbers = #tpu.dot_dimension_numbers<[1], [0], [0], [1], [0, 0, 1, 1], [], []>} : vector<2x32xf32>, vector<32x32xf32>, vector<2x32xf32> -> vector<2x32xf32>
    %229 = vector.broadcast %65 : vector<1x32xf32> to vector<2x32xf32>
    %230 = arith.addf %228, %229 : vector<2x32xf32>
    %cst_70 = arith.constant dense<0.000000e+00> : vector<2x32xf32>
    %231 = tpu.matmul %224, %61, %cst_70 {dimension_numbers = #tpu.dot_dimension_numbers<[1], [0], [0], [1], [0, 0, 1, 1], [], []>} : vector<2x32xf32>, vector<32x32xf32>, vector<2x32xf32> -> vector<2x32xf32>
    %232 = vector.broadcast %67 : vector<1x32xf32> to vector<2x32xf32>
    %233 = arith.addf %231, %232 : vector<2x32xf32>
    %234 = vector.extract_strided_slice %41 {offsets = [8, 0], sizes = [2, 32], strides = [1, 1]} : vector<16x32xf32> to vector<2x32xf32>
    %235 = arith.addf %234, %227 : vector<2x32xf32>
    %236 = arith.negf %235 : vector<2x32xf32>
    %237 = math.exp %236 : vector<2x32xf32>
    %cst_71 = arith.constant 1.000000e+00 : f32
    %238 = vector.broadcast %cst_71 : f32 to vector<2x32xf32>
    %239 = arith.addf %238, %237 : vector<2x32xf32>
    %240 = arith.divf %238, %239 : vector<2x32xf32>
    %241 = vector.extract_strided_slice %48 {offsets = [8, 0], sizes = [2, 32], strides = [1, 1]} : vector<16x32xf32> to vector<2x32xf32>
    %242 = arith.addf %241, %230 : vector<2x32xf32>
    %243 = arith.negf %242 : vector<2x32xf32>
    %244 = math.exp %243 : vector<2x32xf32>
    %cst_72 = arith.constant 1.000000e+00 : f32
    %245 = vector.broadcast %cst_72 : f32 to vector<2x32xf32>
    %246 = arith.addf %245, %244 : vector<2x32xf32>
    %247 = arith.divf %245, %246 : vector<2x32xf32>
    %248 = vector.extract_strided_slice %55 {offsets = [8, 0], sizes = [2, 32], strides = [1, 1]} : vector<16x32xf32> to vector<2x32xf32>
    %249 = arith.mulf %240, %233 : vector<2x32xf32>
    %250 = arith.addf %248, %249 : vector<2x32xf32>
    %251 = math.tanh %250 : vector<2x32xf32>
    %cst_73 = arith.constant 1.000000e+00 : f32
    %252 = vector.broadcast %cst_73 : f32 to vector<2x32xf32>
    %253 = arith.subf %252, %247 : vector<2x32xf32>
    %254 = arith.mulf %253, %251 : vector<2x32xf32>
    %255 = arith.mulf %247, %224 : vector<2x32xf32>
    %256 = arith.addf %254, %255 : vector<2x32xf32>
    %257 = vector.broadcast %20 : vector<2x1xf32> to vector<2x32xf32>
    %258 = arith.mulf %257, %256 : vector<2x32xf32>
    %cst_74 = arith.constant 1.000000e+00 : f32
    %259 = vector.broadcast %cst_74 : f32 to vector<2x1xf32>
    %260 = arith.subf %259, %20 : vector<2x1xf32>
    %261 = vector.broadcast %260 : vector<2x1xf32> to vector<2x32xf32>
    %262 = arith.mulf %261, %224 : vector<2x32xf32>
    %263 = arith.addf %258, %262 : vector<2x32xf32>
    %cst_75 = arith.constant dense<0.000000e+00> : vector<2x32xf32>
    %264 = tpu.matmul %263, %57, %cst_75 {dimension_numbers = #tpu.dot_dimension_numbers<[1], [0], [0], [1], [0, 0, 1, 1], [], []>} : vector<2x32xf32>, vector<32x32xf32>, vector<2x32xf32> -> vector<2x32xf32>
    %265 = vector.broadcast %63 : vector<1x32xf32> to vector<2x32xf32>
    %266 = arith.addf %264, %265 : vector<2x32xf32>
    %cst_76 = arith.constant dense<0.000000e+00> : vector<2x32xf32>
    %267 = tpu.matmul %263, %59, %cst_76 {dimension_numbers = #tpu.dot_dimension_numbers<[1], [0], [0], [1], [0, 0, 1, 1], [], []>} : vector<2x32xf32>, vector<32x32xf32>, vector<2x32xf32> -> vector<2x32xf32>
    %268 = vector.broadcast %65 : vector<1x32xf32> to vector<2x32xf32>
    %269 = arith.addf %267, %268 : vector<2x32xf32>
    %cst_77 = arith.constant dense<0.000000e+00> : vector<2x32xf32>
    %270 = tpu.matmul %263, %61, %cst_77 {dimension_numbers = #tpu.dot_dimension_numbers<[1], [0], [0], [1], [0, 0, 1, 1], [], []>} : vector<2x32xf32>, vector<32x32xf32>, vector<2x32xf32> -> vector<2x32xf32>
    %271 = vector.broadcast %67 : vector<1x32xf32> to vector<2x32xf32>
    %272 = arith.addf %270, %271 : vector<2x32xf32>
    %273 = vector.extract_strided_slice %41 {offsets = [10, 0], sizes = [2, 32], strides = [1, 1]} : vector<16x32xf32> to vector<2x32xf32>
    %274 = arith.addf %273, %266 : vector<2x32xf32>
    %275 = arith.negf %274 : vector<2x32xf32>
    %276 = math.exp %275 : vector<2x32xf32>
    %cst_78 = arith.constant 1.000000e+00 : f32
    %277 = vector.broadcast %cst_78 : f32 to vector<2x32xf32>
    %278 = arith.addf %277, %276 : vector<2x32xf32>
    %279 = arith.divf %277, %278 : vector<2x32xf32>
    %280 = vector.extract_strided_slice %48 {offsets = [10, 0], sizes = [2, 32], strides = [1, 1]} : vector<16x32xf32> to vector<2x32xf32>
    %281 = arith.addf %280, %269 : vector<2x32xf32>
    %282 = arith.negf %281 : vector<2x32xf32>
    %283 = math.exp %282 : vector<2x32xf32>
    %cst_79 = arith.constant 1.000000e+00 : f32
    %284 = vector.broadcast %cst_79 : f32 to vector<2x32xf32>
    %285 = arith.addf %284, %283 : vector<2x32xf32>
    %286 = arith.divf %284, %285 : vector<2x32xf32>
    %287 = vector.extract_strided_slice %55 {offsets = [10, 0], sizes = [2, 32], strides = [1, 1]} : vector<16x32xf32> to vector<2x32xf32>
    %288 = arith.mulf %279, %272 : vector<2x32xf32>
    %289 = arith.addf %287, %288 : vector<2x32xf32>
    %290 = math.tanh %289 : vector<2x32xf32>
    %cst_80 = arith.constant 1.000000e+00 : f32
    %291 = vector.broadcast %cst_80 : f32 to vector<2x32xf32>
    %292 = arith.subf %291, %286 : vector<2x32xf32>
    %293 = arith.mulf %292, %290 : vector<2x32xf32>
    %294 = arith.mulf %286, %263 : vector<2x32xf32>
    %295 = arith.addf %293, %294 : vector<2x32xf32>
    %296 = vector.broadcast %24 : vector<2x1xf32> to vector<2x32xf32>
    %297 = arith.mulf %296, %295 : vector<2x32xf32>
    %cst_81 = arith.constant 1.000000e+00 : f32
    %298 = vector.broadcast %cst_81 : f32 to vector<2x1xf32>
    %299 = arith.subf %298, %24 : vector<2x1xf32>
    %300 = vector.broadcast %299 : vector<2x1xf32> to vector<2x32xf32>
    %301 = arith.mulf %300, %263 : vector<2x32xf32>
    %302 = arith.addf %297, %301 : vector<2x32xf32>
    %cst_82 = arith.constant dense<0.000000e+00> : vector<2x32xf32>
    %303 = tpu.matmul %302, %57, %cst_82 {dimension_numbers = #tpu.dot_dimension_numbers<[1], [0], [0], [1], [0, 0, 1, 1], [], []>} : vector<2x32xf32>, vector<32x32xf32>, vector<2x32xf32> -> vector<2x32xf32>
    %304 = vector.broadcast %63 : vector<1x32xf32> to vector<2x32xf32>
    %305 = arith.addf %303, %304 : vector<2x32xf32>
    %cst_83 = arith.constant dense<0.000000e+00> : vector<2x32xf32>
    %306 = tpu.matmul %302, %59, %cst_83 {dimension_numbers = #tpu.dot_dimension_numbers<[1], [0], [0], [1], [0, 0, 1, 1], [], []>} : vector<2x32xf32>, vector<32x32xf32>, vector<2x32xf32> -> vector<2x32xf32>
    %307 = vector.broadcast %65 : vector<1x32xf32> to vector<2x32xf32>
    %308 = arith.addf %306, %307 : vector<2x32xf32>
    %cst_84 = arith.constant dense<0.000000e+00> : vector<2x32xf32>
    %309 = tpu.matmul %302, %61, %cst_84 {dimension_numbers = #tpu.dot_dimension_numbers<[1], [0], [0], [1], [0, 0, 1, 1], [], []>} : vector<2x32xf32>, vector<32x32xf32>, vector<2x32xf32> -> vector<2x32xf32>
    %310 = vector.broadcast %67 : vector<1x32xf32> to vector<2x32xf32>
    %311 = arith.addf %309, %310 : vector<2x32xf32>
    %312 = vector.extract_strided_slice %41 {offsets = [12, 0], sizes = [2, 32], strides = [1, 1]} : vector<16x32xf32> to vector<2x32xf32>
    %313 = arith.addf %312, %305 : vector<2x32xf32>
    %314 = arith.negf %313 : vector<2x32xf32>
    %315 = math.exp %314 : vector<2x32xf32>
    %cst_85 = arith.constant 1.000000e+00 : f32
    %316 = vector.broadcast %cst_85 : f32 to vector<2x32xf32>
    %317 = arith.addf %316, %315 : vector<2x32xf32>
    %318 = arith.divf %316, %317 : vector<2x32xf32>
    %319 = vector.extract_strided_slice %48 {offsets = [12, 0], sizes = [2, 32], strides = [1, 1]} : vector<16x32xf32> to vector<2x32xf32>
    %320 = arith.addf %319, %308 : vector<2x32xf32>
    %321 = arith.negf %320 : vector<2x32xf32>
    %322 = math.exp %321 : vector<2x32xf32>
    %cst_86 = arith.constant 1.000000e+00 : f32
    %323 = vector.broadcast %cst_86 : f32 to vector<2x32xf32>
    %324 = arith.addf %323, %322 : vector<2x32xf32>
    %325 = arith.divf %323, %324 : vector<2x32xf32>
    %326 = vector.extract_strided_slice %55 {offsets = [12, 0], sizes = [2, 32], strides = [1, 1]} : vector<16x32xf32> to vector<2x32xf32>
    %327 = arith.mulf %318, %311 : vector<2x32xf32>
    %328 = arith.addf %326, %327 : vector<2x32xf32>
    %329 = math.tanh %328 : vector<2x32xf32>
    %cst_87 = arith.constant 1.000000e+00 : f32
    %330 = vector.broadcast %cst_87 : f32 to vector<2x32xf32>
    %331 = arith.subf %330, %325 : vector<2x32xf32>
    %332 = arith.mulf %331, %329 : vector<2x32xf32>
    %333 = arith.mulf %325, %302 : vector<2x32xf32>
    %334 = arith.addf %332, %333 : vector<2x32xf32>
    %335 = vector.broadcast %28 : vector<2x1xf32> to vector<2x32xf32>
    %336 = arith.mulf %335, %334 : vector<2x32xf32>
    %cst_88 = arith.constant 1.000000e+00 : f32
    %337 = vector.broadcast %cst_88 : f32 to vector<2x1xf32>
    %338 = arith.subf %337, %28 : vector<2x1xf32>
    %339 = vector.broadcast %338 : vector<2x1xf32> to vector<2x32xf32>
    %340 = arith.mulf %339, %302 : vector<2x32xf32>
    %341 = arith.addf %336, %340 : vector<2x32xf32>
    %cst_89 = arith.constant dense<0.000000e+00> : vector<2x32xf32>
    %342 = tpu.matmul %341, %57, %cst_89 {dimension_numbers = #tpu.dot_dimension_numbers<[1], [0], [0], [1], [0, 0, 1, 1], [], []>} : vector<2x32xf32>, vector<32x32xf32>, vector<2x32xf32> -> vector<2x32xf32>
    %343 = vector.broadcast %63 : vector<1x32xf32> to vector<2x32xf32>
    %344 = arith.addf %342, %343 : vector<2x32xf32>
    %cst_90 = arith.constant dense<0.000000e+00> : vector<2x32xf32>
    %345 = tpu.matmul %341, %59, %cst_90 {dimension_numbers = #tpu.dot_dimension_numbers<[1], [0], [0], [1], [0, 0, 1, 1], [], []>} : vector<2x32xf32>, vector<32x32xf32>, vector<2x32xf32> -> vector<2x32xf32>
    %346 = vector.broadcast %65 : vector<1x32xf32> to vector<2x32xf32>
    %347 = arith.addf %345, %346 : vector<2x32xf32>
    %cst_91 = arith.constant dense<0.000000e+00> : vector<2x32xf32>
    %348 = tpu.matmul %341, %61, %cst_91 {dimension_numbers = #tpu.dot_dimension_numbers<[1], [0], [0], [1], [0, 0, 1, 1], [], []>} : vector<2x32xf32>, vector<32x32xf32>, vector<2x32xf32> -> vector<2x32xf32>
    %349 = vector.broadcast %67 : vector<1x32xf32> to vector<2x32xf32>
    %350 = arith.addf %348, %349 : vector<2x32xf32>
    %351 = vector.extract_strided_slice %41 {offsets = [14, 0], sizes = [2, 32], strides = [1, 1]} : vector<16x32xf32> to vector<2x32xf32>
    %352 = arith.addf %351, %344 : vector<2x32xf32>
    %353 = arith.negf %352 : vector<2x32xf32>
    %354 = math.exp %353 : vector<2x32xf32>
    %cst_92 = arith.constant 1.000000e+00 : f32
    %355 = vector.broadcast %cst_92 : f32 to vector<2x32xf32>
    %356 = arith.addf %355, %354 : vector<2x32xf32>
    %357 = arith.divf %355, %356 : vector<2x32xf32>
    %358 = vector.extract_strided_slice %48 {offsets = [14, 0], sizes = [2, 32], strides = [1, 1]} : vector<16x32xf32> to vector<2x32xf32>
    %359 = arith.addf %358, %347 : vector<2x32xf32>
    %360 = arith.negf %359 : vector<2x32xf32>
    %361 = math.exp %360 : vector<2x32xf32>
    %cst_93 = arith.constant 1.000000e+00 : f32
    %362 = vector.broadcast %cst_93 : f32 to vector<2x32xf32>
    %363 = arith.addf %362, %361 : vector<2x32xf32>
    %364 = arith.divf %362, %363 : vector<2x32xf32>
    %365 = vector.extract_strided_slice %55 {offsets = [14, 0], sizes = [2, 32], strides = [1, 1]} : vector<16x32xf32> to vector<2x32xf32>
    %366 = arith.mulf %357, %350 : vector<2x32xf32>
    %367 = arith.addf %365, %366 : vector<2x32xf32>
    %368 = math.tanh %367 : vector<2x32xf32>
    %cst_94 = arith.constant 1.000000e+00 : f32
    %369 = vector.broadcast %cst_94 : f32 to vector<2x32xf32>
    %370 = arith.subf %369, %364 : vector<2x32xf32>
    %371 = arith.mulf %370, %368 : vector<2x32xf32>
    %372 = arith.mulf %364, %341 : vector<2x32xf32>
    %373 = arith.addf %371, %372 : vector<2x32xf32>
    %374 = vector.broadcast %32 : vector<2x1xf32> to vector<2x32xf32>
    %375 = arith.mulf %374, %373 : vector<2x32xf32>
    %cst_95 = arith.constant 1.000000e+00 : f32
    %376 = vector.broadcast %cst_95 : f32 to vector<2x1xf32>
    %377 = arith.subf %376, %32 : vector<2x1xf32>
    %378 = vector.broadcast %377 : vector<2x1xf32> to vector<2x32xf32>
    %379 = arith.mulf %378, %341 : vector<2x32xf32>
    %380 = arith.addf %375, %379 : vector<2x32xf32>
    %381 = tpu.concatenate %107, %146, %185, %224, %263, %302, %341, %380 in 0 : vector<2x32xf32>, vector<2x32xf32>, vector<2x32xf32>, vector<2x32xf32>, vector<2x32xf32>, vector<2x32xf32>, vector<2x32xf32>, vector<2x32xf32> -> vector<16x32xf32>
    %c3 = arith.constant 3 : index
    %c0_96 = arith.constant 0 : index
    %c0_97 = arith.constant 0 : index
    %382 = vector.load %arg2[%c3, %c0_96, %c0_97] : memref<6x32x32xf32, #tpu.memory_space<vmem>>, vector<1x32x32xf32>
    %383 = vector.shape_cast %382 : vector<1x32x32xf32> to vector<32x32xf32>
    %cst_98 = arith.constant dense<0.000000e+00> : vector<16x32xf32>
    %384 = tpu.matmul %381, %383, %cst_98 {dimension_numbers = #tpu.dot_dimension_numbers<[1], [0], [0], [1], [0, 0, 1, 1], [], []>} : vector<16x32xf32>, vector<32x32xf32>, vector<16x32xf32> -> vector<16x32xf32>
    %c3_99 = arith.constant 3 : index
    %c0_100 = arith.constant 0 : index
    %c0_101 = arith.constant 0 : index
    %385 = vector.load %arg4[%c3_99, %c0_100, %c0_101] : memref<6x1x32xf32, #tpu.memory_space<vmem>>, vector<1x1x32xf32>
    %386 = vector.shape_cast %385 : vector<1x1x32xf32> to vector<1x32xf32>
    %387 = vector.broadcast %386 : vector<1x32xf32> to vector<16x32xf32>
    %388 = arith.addf %384, %387 : vector<16x32xf32>
    %c4 = arith.constant 4 : index
    %c0_102 = arith.constant 0 : index
    %c0_103 = arith.constant 0 : index
    %389 = vector.load %arg2[%c4, %c0_102, %c0_103] : memref<6x32x32xf32, #tpu.memory_space<vmem>>, vector<1x32x32xf32>
    %390 = vector.shape_cast %389 : vector<1x32x32xf32> to vector<32x32xf32>
    %cst_104 = arith.constant dense<0.000000e+00> : vector<16x32xf32>
    %391 = tpu.matmul %381, %390, %cst_104 {dimension_numbers = #tpu.dot_dimension_numbers<[1], [0], [0], [1], [0, 0, 1, 1], [], []>} : vector<16x32xf32>, vector<32x32xf32>, vector<16x32xf32> -> vector<16x32xf32>
    %c4_105 = arith.constant 4 : index
    %c0_106 = arith.constant 0 : index
    %c0_107 = arith.constant 0 : index
    %392 = vector.load %arg4[%c4_105, %c0_106, %c0_107] : memref<6x1x32xf32, #tpu.memory_space<vmem>>, vector<1x1x32xf32>
    %393 = vector.shape_cast %392 : vector<1x1x32xf32> to vector<1x32xf32>
    %394 = vector.broadcast %393 : vector<1x32xf32> to vector<16x32xf32>
    %395 = arith.addf %391, %394 : vector<16x32xf32>
    %c5 = arith.constant 5 : index
    %c0_108 = arith.constant 0 : index
    %c0_109 = arith.constant 0 : index
    %396 = vector.load %arg2[%c5, %c0_108, %c0_109] : memref<6x32x32xf32, #tpu.memory_space<vmem>>, vector<1x32x32xf32>
    %397 = vector.shape_cast %396 : vector<1x32x32xf32> to vector<32x32xf32>
    %cst_110 = arith.constant dense<0.000000e+00> : vector<16x32xf32>
    %398 = tpu.matmul %381, %397, %cst_110 {dimension_numbers = #tpu.dot_dimension_numbers<[1], [0], [0], [1], [0, 0, 1, 1], [], []>} : vector<16x32xf32>, vector<32x32xf32>, vector<16x32xf32> -> vector<16x32xf32>
    %c5_111 = arith.constant 5 : index
    %c0_112 = arith.constant 0 : index
    %c0_113 = arith.constant 0 : index
    %399 = vector.load %arg4[%c5_111, %c0_112, %c0_113] : memref<6x1x32xf32, #tpu.memory_space<vmem>>, vector<1x1x32xf32>
    %400 = vector.shape_cast %399 : vector<1x1x32xf32> to vector<1x32xf32>
    %401 = vector.broadcast %400 : vector<1x32xf32> to vector<16x32xf32>
    %402 = arith.addf %398, %401 : vector<16x32xf32>
    %c3_114 = arith.constant 3 : index
    %c0_115 = arith.constant 0 : index
    %c0_116 = arith.constant 0 : index
    %403 = vector.load %arg3[%c3_114, %c0_115, %c0_116] : memref<6x32x32xf32, #tpu.memory_space<vmem>>, vector<1x32x32xf32>
    %404 = vector.shape_cast %403 : vector<1x32x32xf32> to vector<32x32xf32>
    %c4_117 = arith.constant 4 : index
    %c0_118 = arith.constant 0 : index
    %c0_119 = arith.constant 0 : index
    %405 = vector.load %arg3[%c4_117, %c0_118, %c0_119] : memref<6x32x32xf32, #tpu.memory_space<vmem>>, vector<1x32x32xf32>
    %406 = vector.shape_cast %405 : vector<1x32x32xf32> to vector<32x32xf32>
    %c5_120 = arith.constant 5 : index
    %c0_121 = arith.constant 0 : index
    %c0_122 = arith.constant 0 : index
    %407 = vector.load %arg3[%c5_120, %c0_121, %c0_122] : memref<6x32x32xf32, #tpu.memory_space<vmem>>, vector<1x32x32xf32>
    %408 = vector.shape_cast %407 : vector<1x32x32xf32> to vector<32x32xf32>
    %c3_123 = arith.constant 3 : index
    %c0_124 = arith.constant 0 : index
    %c0_125 = arith.constant 0 : index
    %409 = vector.load %arg5[%c3_123, %c0_124, %c0_125] : memref<6x1x32xf32, #tpu.memory_space<vmem>>, vector<1x1x32xf32>
    %410 = vector.shape_cast %409 : vector<1x1x32xf32> to vector<1x32xf32>
    %c4_126 = arith.constant 4 : index
    %c0_127 = arith.constant 0 : index
    %c0_128 = arith.constant 0 : index
    %411 = vector.load %arg5[%c4_126, %c0_127, %c0_128] : memref<6x1x32xf32, #tpu.memory_space<vmem>>, vector<1x1x32xf32>
    %412 = vector.shape_cast %411 : vector<1x1x32xf32> to vector<1x32xf32>
    %c5_129 = arith.constant 5 : index
    %c0_130 = arith.constant 0 : index
    %c0_131 = arith.constant 0 : index
    %413 = vector.load %arg5[%c5_129, %c0_130, %c0_131] : memref<6x1x32xf32, #tpu.memory_space<vmem>>, vector<1x1x32xf32>
    %414 = vector.shape_cast %413 : vector<1x1x32xf32> to vector<1x32xf32>
    %cst_132 = arith.constant 0.000000e+00 : f32
    %415 = vector.broadcast %cst_132 : f32 to vector<2x32xf32>
    %cst_133 = arith.constant dense<0.000000e+00> : vector<2x32xf32>
    %416 = tpu.matmul %415, %404, %cst_133 {dimension_numbers = #tpu.dot_dimension_numbers<[1], [0], [0], [1], [0, 0, 1, 1], [], []>} : vector<2x32xf32>, vector<32x32xf32>, vector<2x32xf32> -> vector<2x32xf32>
    %417 = vector.broadcast %410 : vector<1x32xf32> to vector<2x32xf32>
    %418 = arith.addf %416, %417 : vector<2x32xf32>
    %cst_134 = arith.constant dense<0.000000e+00> : vector<2x32xf32>
    %419 = tpu.matmul %415, %406, %cst_134 {dimension_numbers = #tpu.dot_dimension_numbers<[1], [0], [0], [1], [0, 0, 1, 1], [], []>} : vector<2x32xf32>, vector<32x32xf32>, vector<2x32xf32> -> vector<2x32xf32>
    %420 = vector.broadcast %412 : vector<1x32xf32> to vector<2x32xf32>
    %421 = arith.addf %419, %420 : vector<2x32xf32>
    %cst_135 = arith.constant dense<0.000000e+00> : vector<2x32xf32>
    %422 = tpu.matmul %415, %408, %cst_135 {dimension_numbers = #tpu.dot_dimension_numbers<[1], [0], [0], [1], [0, 0, 1, 1], [], []>} : vector<2x32xf32>, vector<32x32xf32>, vector<2x32xf32> -> vector<2x32xf32>
    %423 = vector.broadcast %414 : vector<1x32xf32> to vector<2x32xf32>
    %424 = arith.addf %422, %423 : vector<2x32xf32>
    %425 = vector.extract_strided_slice %388 {offsets = [0, 0], sizes = [2, 32], strides = [1, 1]} : vector<16x32xf32> to vector<2x32xf32>
    %426 = arith.addf %425, %418 : vector<2x32xf32>
    %427 = arith.negf %426 : vector<2x32xf32>
    %428 = math.exp %427 : vector<2x32xf32>
    %cst_136 = arith.constant 1.000000e+00 : f32
    %429 = vector.broadcast %cst_136 : f32 to vector<2x32xf32>
    %430 = arith.addf %429, %428 : vector<2x32xf32>
    %431 = arith.divf %429, %430 : vector<2x32xf32>
    %432 = vector.extract_strided_slice %395 {offsets = [0, 0], sizes = [2, 32], strides = [1, 1]} : vector<16x32xf32> to vector<2x32xf32>
    %433 = arith.addf %432, %421 : vector<2x32xf32>
    %434 = arith.negf %433 : vector<2x32xf32>
    %435 = math.exp %434 : vector<2x32xf32>
    %cst_137 = arith.constant 1.000000e+00 : f32
    %436 = vector.broadcast %cst_137 : f32 to vector<2x32xf32>
    %437 = arith.addf %436, %435 : vector<2x32xf32>
    %438 = arith.divf %436, %437 : vector<2x32xf32>
    %439 = vector.extract_strided_slice %402 {offsets = [0, 0], sizes = [2, 32], strides = [1, 1]} : vector<16x32xf32> to vector<2x32xf32>
    %440 = arith.mulf %431, %424 : vector<2x32xf32>
    %441 = arith.addf %439, %440 : vector<2x32xf32>
    %442 = math.tanh %441 : vector<2x32xf32>
    %cst_138 = arith.constant 1.000000e+00 : f32
    %443 = vector.broadcast %cst_138 : f32 to vector<2x32xf32>
    %444 = arith.subf %443, %438 : vector<2x32xf32>
    %445 = arith.mulf %444, %442 : vector<2x32xf32>
    %446 = arith.mulf %438, %415 : vector<2x32xf32>
    %447 = arith.addf %445, %446 : vector<2x32xf32>
    %448 = vector.broadcast %4 : vector<2x1xf32> to vector<2x32xf32>
    %449 = arith.mulf %448, %447 : vector<2x32xf32>
    %cst_139 = arith.constant 1.000000e+00 : f32
    %450 = vector.broadcast %cst_139 : f32 to vector<2x1xf32>
    %451 = arith.subf %450, %4 : vector<2x1xf32>
    %452 = vector.broadcast %451 : vector<2x1xf32> to vector<2x32xf32>
    %453 = arith.mulf %452, %415 : vector<2x32xf32>
    %454 = arith.addf %449, %453 : vector<2x32xf32>
    %cst_140 = arith.constant dense<0.000000e+00> : vector<2x32xf32>
    %455 = tpu.matmul %454, %404, %cst_140 {dimension_numbers = #tpu.dot_dimension_numbers<[1], [0], [0], [1], [0, 0, 1, 1], [], []>} : vector<2x32xf32>, vector<32x32xf32>, vector<2x32xf32> -> vector<2x32xf32>
    %456 = vector.broadcast %410 : vector<1x32xf32> to vector<2x32xf32>
    %457 = arith.addf %455, %456 : vector<2x32xf32>
    %cst_141 = arith.constant dense<0.000000e+00> : vector<2x32xf32>
    %458 = tpu.matmul %454, %406, %cst_141 {dimension_numbers = #tpu.dot_dimension_numbers<[1], [0], [0], [1], [0, 0, 1, 1], [], []>} : vector<2x32xf32>, vector<32x32xf32>, vector<2x32xf32> -> vector<2x32xf32>
    %459 = vector.broadcast %412 : vector<1x32xf32> to vector<2x32xf32>
    %460 = arith.addf %458, %459 : vector<2x32xf32>
    %cst_142 = arith.constant dense<0.000000e+00> : vector<2x32xf32>
    %461 = tpu.matmul %454, %408, %cst_142 {dimension_numbers = #tpu.dot_dimension_numbers<[1], [0], [0], [1], [0, 0, 1, 1], [], []>} : vector<2x32xf32>, vector<32x32xf32>, vector<2x32xf32> -> vector<2x32xf32>
    %462 = vector.broadcast %414 : vector<1x32xf32> to vector<2x32xf32>
    %463 = arith.addf %461, %462 : vector<2x32xf32>
    %464 = vector.extract_strided_slice %388 {offsets = [2, 0], sizes = [2, 32], strides = [1, 1]} : vector<16x32xf32> to vector<2x32xf32>
    %465 = arith.addf %464, %457 : vector<2x32xf32>
    %466 = arith.negf %465 : vector<2x32xf32>
    %467 = math.exp %466 : vector<2x32xf32>
    %cst_143 = arith.constant 1.000000e+00 : f32
    %468 = vector.broadcast %cst_143 : f32 to vector<2x32xf32>
    %469 = arith.addf %468, %467 : vector<2x32xf32>
    %470 = arith.divf %468, %469 : vector<2x32xf32>
    %471 = vector.extract_strided_slice %395 {offsets = [2, 0], sizes = [2, 32], strides = [1, 1]} : vector<16x32xf32> to vector<2x32xf32>
    %472 = arith.addf %471, %460 : vector<2x32xf32>
    %473 = arith.negf %472 : vector<2x32xf32>
    %474 = math.exp %473 : vector<2x32xf32>
    %cst_144 = arith.constant 1.000000e+00 : f32
    %475 = vector.broadcast %cst_144 : f32 to vector<2x32xf32>
    %476 = arith.addf %475, %474 : vector<2x32xf32>
    %477 = arith.divf %475, %476 : vector<2x32xf32>
    %478 = vector.extract_strided_slice %402 {offsets = [2, 0], sizes = [2, 32], strides = [1, 1]} : vector<16x32xf32> to vector<2x32xf32>
    %479 = arith.mulf %470, %463 : vector<2x32xf32>
    %480 = arith.addf %478, %479 : vector<2x32xf32>
    %481 = math.tanh %480 : vector<2x32xf32>
    %cst_145 = arith.constant 1.000000e+00 : f32
    %482 = vector.broadcast %cst_145 : f32 to vector<2x32xf32>
    %483 = arith.subf %482, %477 : vector<2x32xf32>
    %484 = arith.mulf %483, %481 : vector<2x32xf32>
    %485 = arith.mulf %477, %454 : vector<2x32xf32>
    %486 = arith.addf %484, %485 : vector<2x32xf32>
    %487 = vector.broadcast %8 : vector<2x1xf32> to vector<2x32xf32>
    %488 = arith.mulf %487, %486 : vector<2x32xf32>
    %cst_146 = arith.constant 1.000000e+00 : f32
    %489 = vector.broadcast %cst_146 : f32 to vector<2x1xf32>
    %490 = arith.subf %489, %8 : vector<2x1xf32>
    %491 = vector.broadcast %490 : vector<2x1xf32> to vector<2x32xf32>
    %492 = arith.mulf %491, %454 : vector<2x32xf32>
    %493 = arith.addf %488, %492 : vector<2x32xf32>
    %cst_147 = arith.constant dense<0.000000e+00> : vector<2x32xf32>
    %494 = tpu.matmul %493, %404, %cst_147 {dimension_numbers = #tpu.dot_dimension_numbers<[1], [0], [0], [1], [0, 0, 1, 1], [], []>} : vector<2x32xf32>, vector<32x32xf32>, vector<2x32xf32> -> vector<2x32xf32>
    %495 = vector.broadcast %410 : vector<1x32xf32> to vector<2x32xf32>
    %496 = arith.addf %494, %495 : vector<2x32xf32>
    %cst_148 = arith.constant dense<0.000000e+00> : vector<2x32xf32>
    %497 = tpu.matmul %493, %406, %cst_148 {dimension_numbers = #tpu.dot_dimension_numbers<[1], [0], [0], [1], [0, 0, 1, 1], [], []>} : vector<2x32xf32>, vector<32x32xf32>, vector<2x32xf32> -> vector<2x32xf32>
    %498 = vector.broadcast %412 : vector<1x32xf32> to vector<2x32xf32>
    %499 = arith.addf %497, %498 : vector<2x32xf32>
    %cst_149 = arith.constant dense<0.000000e+00> : vector<2x32xf32>
    %500 = tpu.matmul %493, %408, %cst_149 {dimension_numbers = #tpu.dot_dimension_numbers<[1], [0], [0], [1], [0, 0, 1, 1], [], []>} : vector<2x32xf32>, vector<32x32xf32>, vector<2x32xf32> -> vector<2x32xf32>
    %501 = vector.broadcast %414 : vector<1x32xf32> to vector<2x32xf32>
    %502 = arith.addf %500, %501 : vector<2x32xf32>
    %503 = vector.extract_strided_slice %388 {offsets = [4, 0], sizes = [2, 32], strides = [1, 1]} : vector<16x32xf32> to vector<2x32xf32>
    %504 = arith.addf %503, %496 : vector<2x32xf32>
    %505 = arith.negf %504 : vector<2x32xf32>
    %506 = math.exp %505 : vector<2x32xf32>
    %cst_150 = arith.constant 1.000000e+00 : f32
    %507 = vector.broadcast %cst_150 : f32 to vector<2x32xf32>
    %508 = arith.addf %507, %506 : vector<2x32xf32>
    %509 = arith.divf %507, %508 : vector<2x32xf32>
    %510 = vector.extract_strided_slice %395 {offsets = [4, 0], sizes = [2, 32], strides = [1, 1]} : vector<16x32xf32> to vector<2x32xf32>
    %511 = arith.addf %510, %499 : vector<2x32xf32>
    %512 = arith.negf %511 : vector<2x32xf32>
    %513 = math.exp %512 : vector<2x32xf32>
    %cst_151 = arith.constant 1.000000e+00 : f32
    %514 = vector.broadcast %cst_151 : f32 to vector<2x32xf32>
    %515 = arith.addf %514, %513 : vector<2x32xf32>
    %516 = arith.divf %514, %515 : vector<2x32xf32>
    %517 = vector.extract_strided_slice %402 {offsets = [4, 0], sizes = [2, 32], strides = [1, 1]} : vector<16x32xf32> to vector<2x32xf32>
    %518 = arith.mulf %509, %502 : vector<2x32xf32>
    %519 = arith.addf %517, %518 : vector<2x32xf32>
    %520 = math.tanh %519 : vector<2x32xf32>
    %cst_152 = arith.constant 1.000000e+00 : f32
    %521 = vector.broadcast %cst_152 : f32 to vector<2x32xf32>
    %522 = arith.subf %521, %516 : vector<2x32xf32>
    %523 = arith.mulf %522, %520 : vector<2x32xf32>
    %524 = arith.mulf %516, %493 : vector<2x32xf32>
    %525 = arith.addf %523, %524 : vector<2x32xf32>
    %526 = vector.broadcast %12 : vector<2x1xf32> to vector<2x32xf32>
    %527 = arith.mulf %526, %525 : vector<2x32xf32>
    %cst_153 = arith.constant 1.000000e+00 : f32
    %528 = vector.broadcast %cst_153 : f32 to vector<2x1xf32>
    %529 = arith.subf %528, %12 : vector<2x1xf32>
    %530 = vector.broadcast %529 : vector<2x1xf32> to vector<2x32xf32>
    %531 = arith.mulf %530, %493 : vector<2x32xf32>
    %532 = arith.addf %527, %531 : vector<2x32xf32>
    %cst_154 = arith.constant dense<0.000000e+00> : vector<2x32xf32>
    %533 = tpu.matmul %532, %404, %cst_154 {dimension_numbers = #tpu.dot_dimension_numbers<[1], [0], [0], [1], [0, 0, 1, 1], [], []>} : vector<2x32xf32>, vector<32x32xf32>, vector<2x32xf32> -> vector<2x32xf32>
    %534 = vector.broadcast %410 : vector<1x32xf32> to vector<2x32xf32>
    %535 = arith.addf %533, %534 : vector<2x32xf32>
    %cst_155 = arith.constant dense<0.000000e+00> : vector<2x32xf32>
    %536 = tpu.matmul %532, %406, %cst_155 {dimension_numbers = #tpu.dot_dimension_numbers<[1], [0], [0], [1], [0, 0, 1, 1], [], []>} : vector<2x32xf32>, vector<32x32xf32>, vector<2x32xf32> -> vector<2x32xf32>
    %537 = vector.broadcast %412 : vector<1x32xf32> to vector<2x32xf32>
    %538 = arith.addf %536, %537 : vector<2x32xf32>
    %cst_156 = arith.constant dense<0.000000e+00> : vector<2x32xf32>
    %539 = tpu.matmul %532, %408, %cst_156 {dimension_numbers = #tpu.dot_dimension_numbers<[1], [0], [0], [1], [0, 0, 1, 1], [], []>} : vector<2x32xf32>, vector<32x32xf32>, vector<2x32xf32> -> vector<2x32xf32>
    %540 = vector.broadcast %414 : vector<1x32xf32> to vector<2x32xf32>
    %541 = arith.addf %539, %540 : vector<2x32xf32>
    %542 = vector.extract_strided_slice %388 {offsets = [6, 0], sizes = [2, 32], strides = [1, 1]} : vector<16x32xf32> to vector<2x32xf32>
    %543 = arith.addf %542, %535 : vector<2x32xf32>
    %544 = arith.negf %543 : vector<2x32xf32>
    %545 = math.exp %544 : vector<2x32xf32>
    %cst_157 = arith.constant 1.000000e+00 : f32
    %546 = vector.broadcast %cst_157 : f32 to vector<2x32xf32>
    %547 = arith.addf %546, %545 : vector<2x32xf32>
    %548 = arith.divf %546, %547 : vector<2x32xf32>
    %549 = vector.extract_strided_slice %395 {offsets = [6, 0], sizes = [2, 32], strides = [1, 1]} : vector<16x32xf32> to vector<2x32xf32>
    %550 = arith.addf %549, %538 : vector<2x32xf32>
    %551 = arith.negf %550 : vector<2x32xf32>
    %552 = math.exp %551 : vector<2x32xf32>
    %cst_158 = arith.constant 1.000000e+00 : f32
    %553 = vector.broadcast %cst_158 : f32 to vector<2x32xf32>
    %554 = arith.addf %553, %552 : vector<2x32xf32>
    %555 = arith.divf %553, %554 : vector<2x32xf32>
    %556 = vector.extract_strided_slice %402 {offsets = [6, 0], sizes = [2, 32], strides = [1, 1]} : vector<16x32xf32> to vector<2x32xf32>
    %557 = arith.mulf %548, %541 : vector<2x32xf32>
    %558 = arith.addf %556, %557 : vector<2x32xf32>
    %559 = math.tanh %558 : vector<2x32xf32>
    %cst_159 = arith.constant 1.000000e+00 : f32
    %560 = vector.broadcast %cst_159 : f32 to vector<2x32xf32>
    %561 = arith.subf %560, %555 : vector<2x32xf32>
    %562 = arith.mulf %561, %559 : vector<2x32xf32>
    %563 = arith.mulf %555, %532 : vector<2x32xf32>
    %564 = arith.addf %562, %563 : vector<2x32xf32>
    %565 = vector.broadcast %16 : vector<2x1xf32> to vector<2x32xf32>
    %566 = arith.mulf %565, %564 : vector<2x32xf32>
    %cst_160 = arith.constant 1.000000e+00 : f32
    %567 = vector.broadcast %cst_160 : f32 to vector<2x1xf32>
    %568 = arith.subf %567, %16 : vector<2x1xf32>
    %569 = vector.broadcast %568 : vector<2x1xf32> to vector<2x32xf32>
    %570 = arith.mulf %569, %532 : vector<2x32xf32>
    %571 = arith.addf %566, %570 : vector<2x32xf32>
    %cst_161 = arith.constant dense<0.000000e+00> : vector<2x32xf32>
    %572 = tpu.matmul %571, %404, %cst_161 {dimension_numbers = #tpu.dot_dimension_numbers<[1], [0], [0], [1], [0, 0, 1, 1], [], []>} : vector<2x32xf32>, vector<32x32xf32>, vector<2x32xf32> -> vector<2x32xf32>
    %573 = vector.broadcast %410 : vector<1x32xf32> to vector<2x32xf32>
    %574 = arith.addf %572, %573 : vector<2x32xf32>
    %cst_162 = arith.constant dense<0.000000e+00> : vector<2x32xf32>
    %575 = tpu.matmul %571, %406, %cst_162 {dimension_numbers = #tpu.dot_dimension_numbers<[1], [0], [0], [1], [0, 0, 1, 1], [], []>} : vector<2x32xf32>, vector<32x32xf32>, vector<2x32xf32> -> vector<2x32xf32>
    %576 = vector.broadcast %412 : vector<1x32xf32> to vector<2x32xf32>
    %577 = arith.addf %575, %576 : vector<2x32xf32>
    %cst_163 = arith.constant dense<0.000000e+00> : vector<2x32xf32>
    %578 = tpu.matmul %571, %408, %cst_163 {dimension_numbers = #tpu.dot_dimension_numbers<[1], [0], [0], [1], [0, 0, 1, 1], [], []>} : vector<2x32xf32>, vector<32x32xf32>, vector<2x32xf32> -> vector<2x32xf32>
    %579 = vector.broadcast %414 : vector<1x32xf32> to vector<2x32xf32>
    %580 = arith.addf %578, %579 : vector<2x32xf32>
    %581 = vector.extract_strided_slice %388 {offsets = [8, 0], sizes = [2, 32], strides = [1, 1]} : vector<16x32xf32> to vector<2x32xf32>
    %582 = arith.addf %581, %574 : vector<2x32xf32>
    %583 = arith.negf %582 : vector<2x32xf32>
    %584 = math.exp %583 : vector<2x32xf32>
    %cst_164 = arith.constant 1.000000e+00 : f32
    %585 = vector.broadcast %cst_164 : f32 to vector<2x32xf32>
    %586 = arith.addf %585, %584 : vector<2x32xf32>
    %587 = arith.divf %585, %586 : vector<2x32xf32>
    %588 = vector.extract_strided_slice %395 {offsets = [8, 0], sizes = [2, 32], strides = [1, 1]} : vector<16x32xf32> to vector<2x32xf32>
    %589 = arith.addf %588, %577 : vector<2x32xf32>
    %590 = arith.negf %589 : vector<2x32xf32>
    %591 = math.exp %590 : vector<2x32xf32>
    %cst_165 = arith.constant 1.000000e+00 : f32
    %592 = vector.broadcast %cst_165 : f32 to vector<2x32xf32>
    %593 = arith.addf %592, %591 : vector<2x32xf32>
    %594 = arith.divf %592, %593 : vector<2x32xf32>
    %595 = vector.extract_strided_slice %402 {offsets = [8, 0], sizes = [2, 32], strides = [1, 1]} : vector<16x32xf32> to vector<2x32xf32>
    %596 = arith.mulf %587, %580 : vector<2x32xf32>
    %597 = arith.addf %595, %596 : vector<2x32xf32>
    %598 = math.tanh %597 : vector<2x32xf32>
    %cst_166 = arith.constant 1.000000e+00 : f32
    %599 = vector.broadcast %cst_166 : f32 to vector<2x32xf32>
    %600 = arith.subf %599, %594 : vector<2x32xf32>
    %601 = arith.mulf %600, %598 : vector<2x32xf32>
    %602 = arith.mulf %594, %571 : vector<2x32xf32>
    %603 = arith.addf %601, %602 : vector<2x32xf32>
    %604 = vector.broadcast %20 : vector<2x1xf32> to vector<2x32xf32>
    %605 = arith.mulf %604, %603 : vector<2x32xf32>
    %cst_167 = arith.constant 1.000000e+00 : f32
    %606 = vector.broadcast %cst_167 : f32 to vector<2x1xf32>
    %607 = arith.subf %606, %20 : vector<2x1xf32>
    %608 = vector.broadcast %607 : vector<2x1xf32> to vector<2x32xf32>
    %609 = arith.mulf %608, %571 : vector<2x32xf32>
    %610 = arith.addf %605, %609 : vector<2x32xf32>
    %cst_168 = arith.constant dense<0.000000e+00> : vector<2x32xf32>
    %611 = tpu.matmul %610, %404, %cst_168 {dimension_numbers = #tpu.dot_dimension_numbers<[1], [0], [0], [1], [0, 0, 1, 1], [], []>} : vector<2x32xf32>, vector<32x32xf32>, vector<2x32xf32> -> vector<2x32xf32>
    %612 = vector.broadcast %410 : vector<1x32xf32> to vector<2x32xf32>
    %613 = arith.addf %611, %612 : vector<2x32xf32>
    %cst_169 = arith.constant dense<0.000000e+00> : vector<2x32xf32>
    %614 = tpu.matmul %610, %406, %cst_169 {dimension_numbers = #tpu.dot_dimension_numbers<[1], [0], [0], [1], [0, 0, 1, 1], [], []>} : vector<2x32xf32>, vector<32x32xf32>, vector<2x32xf32> -> vector<2x32xf32>
    %615 = vector.broadcast %412 : vector<1x32xf32> to vector<2x32xf32>
    %616 = arith.addf %614, %615 : vector<2x32xf32>
    %cst_170 = arith.constant dense<0.000000e+00> : vector<2x32xf32>
    %617 = tpu.matmul %610, %408, %cst_170 {dimension_numbers = #tpu.dot_dimension_numbers<[1], [0], [0], [1], [0, 0, 1, 1], [], []>} : vector<2x32xf32>, vector<32x32xf32>, vector<2x32xf32> -> vector<2x32xf32>
    %618 = vector.broadcast %414 : vector<1x32xf32> to vector<2x32xf32>
    %619 = arith.addf %617, %618 : vector<2x32xf32>
    %620 = vector.extract_strided_slice %388 {offsets = [10, 0], sizes = [2, 32], strides = [1, 1]} : vector<16x32xf32> to vector<2x32xf32>
    %621 = arith.addf %620, %613 : vector<2x32xf32>
    %622 = arith.negf %621 : vector<2x32xf32>
    %623 = math.exp %622 : vector<2x32xf32>
    %cst_171 = arith.constant 1.000000e+00 : f32
    %624 = vector.broadcast %cst_171 : f32 to vector<2x32xf32>
    %625 = arith.addf %624, %623 : vector<2x32xf32>
    %626 = arith.divf %624, %625 : vector<2x32xf32>
    %627 = vector.extract_strided_slice %395 {offsets = [10, 0], sizes = [2, 32], strides = [1, 1]} : vector<16x32xf32> to vector<2x32xf32>
    %628 = arith.addf %627, %616 : vector<2x32xf32>
    %629 = arith.negf %628 : vector<2x32xf32>
    %630 = math.exp %629 : vector<2x32xf32>
    %cst_172 = arith.constant 1.000000e+00 : f32
    %631 = vector.broadcast %cst_172 : f32 to vector<2x32xf32>
    %632 = arith.addf %631, %630 : vector<2x32xf32>
    %633 = arith.divf %631, %632 : vector<2x32xf32>
    %634 = vector.extract_strided_slice %402 {offsets = [10, 0], sizes = [2, 32], strides = [1, 1]} : vector<16x32xf32> to vector<2x32xf32>
    %635 = arith.mulf %626, %619 : vector<2x32xf32>
    %636 = arith.addf %634, %635 : vector<2x32xf32>
    %637 = math.tanh %636 : vector<2x32xf32>
    %cst_173 = arith.constant 1.000000e+00 : f32
    %638 = vector.broadcast %cst_173 : f32 to vector<2x32xf32>
    %639 = arith.subf %638, %633 : vector<2x32xf32>
    %640 = arith.mulf %639, %637 : vector<2x32xf32>
    %641 = arith.mulf %633, %610 : vector<2x32xf32>
    %642 = arith.addf %640, %641 : vector<2x32xf32>
    %643 = vector.broadcast %24 : vector<2x1xf32> to vector<2x32xf32>
    %644 = arith.mulf %643, %642 : vector<2x32xf32>
    %cst_174 = arith.constant 1.000000e+00 : f32
    %645 = vector.broadcast %cst_174 : f32 to vector<2x1xf32>
    %646 = arith.subf %645, %24 : vector<2x1xf32>
    %647 = vector.broadcast %646 : vector<2x1xf32> to vector<2x32xf32>
    %648 = arith.mulf %647, %610 : vector<2x32xf32>
    %649 = arith.addf %644, %648 : vector<2x32xf32>
    %cst_175 = arith.constant dense<0.000000e+00> : vector<2x32xf32>
    %650 = tpu.matmul %649, %404, %cst_175 {dimension_numbers = #tpu.dot_dimension_numbers<[1], [0], [0], [1], [0, 0, 1, 1], [], []>} : vector<2x32xf32>, vector<32x32xf32>, vector<2x32xf32> -> vector<2x32xf32>
    %651 = vector.broadcast %410 : vector<1x32xf32> to vector<2x32xf32>
    %652 = arith.addf %650, %651 : vector<2x32xf32>
    %cst_176 = arith.constant dense<0.000000e+00> : vector<2x32xf32>
    %653 = tpu.matmul %649, %406, %cst_176 {dimension_numbers = #tpu.dot_dimension_numbers<[1], [0], [0], [1], [0, 0, 1, 1], [], []>} : vector<2x32xf32>, vector<32x32xf32>, vector<2x32xf32> -> vector<2x32xf32>
    %654 = vector.broadcast %412 : vector<1x32xf32> to vector<2x32xf32>
    %655 = arith.addf %653, %654 : vector<2x32xf32>
    %cst_177 = arith.constant dense<0.000000e+00> : vector<2x32xf32>
    %656 = tpu.matmul %649, %408, %cst_177 {dimension_numbers = #tpu.dot_dimension_numbers<[1], [0], [0], [1], [0, 0, 1, 1], [], []>} : vector<2x32xf32>, vector<32x32xf32>, vector<2x32xf32> -> vector<2x32xf32>
    %657 = vector.broadcast %414 : vector<1x32xf32> to vector<2x32xf32>
    %658 = arith.addf %656, %657 : vector<2x32xf32>
    %659 = vector.extract_strided_slice %388 {offsets = [12, 0], sizes = [2, 32], strides = [1, 1]} : vector<16x32xf32> to vector<2x32xf32>
    %660 = arith.addf %659, %652 : vector<2x32xf32>
    %661 = arith.negf %660 : vector<2x32xf32>
    %662 = math.exp %661 : vector<2x32xf32>
    %cst_178 = arith.constant 1.000000e+00 : f32
    %663 = vector.broadcast %cst_178 : f32 to vector<2x32xf32>
    %664 = arith.addf %663, %662 : vector<2x32xf32>
    %665 = arith.divf %663, %664 : vector<2x32xf32>
    %666 = vector.extract_strided_slice %395 {offsets = [12, 0], sizes = [2, 32], strides = [1, 1]} : vector<16x32xf32> to vector<2x32xf32>
    %667 = arith.addf %666, %655 : vector<2x32xf32>
    %668 = arith.negf %667 : vector<2x32xf32>
    %669 = math.exp %668 : vector<2x32xf32>
    %cst_179 = arith.constant 1.000000e+00 : f32
    %670 = vector.broadcast %cst_179 : f32 to vector<2x32xf32>
    %671 = arith.addf %670, %669 : vector<2x32xf32>
    %672 = arith.divf %670, %671 : vector<2x32xf32>
    %673 = vector.extract_strided_slice %402 {offsets = [12, 0], sizes = [2, 32], strides = [1, 1]} : vector<16x32xf32> to vector<2x32xf32>
    %674 = arith.mulf %665, %658 : vector<2x32xf32>
    %675 = arith.addf %673, %674 : vector<2x32xf32>
    %676 = math.tanh %675 : vector<2x32xf32>
    %cst_180 = arith.constant 1.000000e+00 : f32
    %677 = vector.broadcast %cst_180 : f32 to vector<2x32xf32>
    %678 = arith.subf %677, %672 : vector<2x32xf32>
    %679 = arith.mulf %678, %676 : vector<2x32xf32>
    %680 = arith.mulf %672, %649 : vector<2x32xf32>
    %681 = arith.addf %679, %680 : vector<2x32xf32>
    %682 = vector.broadcast %28 : vector<2x1xf32> to vector<2x32xf32>
    %683 = arith.mulf %682, %681 : vector<2x32xf32>
    %cst_181 = arith.constant 1.000000e+00 : f32
    %684 = vector.broadcast %cst_181 : f32 to vector<2x1xf32>
    %685 = arith.subf %684, %28 : vector<2x1xf32>
    %686 = vector.broadcast %685 : vector<2x1xf32> to vector<2x32xf32>
    %687 = arith.mulf %686, %649 : vector<2x32xf32>
    %688 = arith.addf %683, %687 : vector<2x32xf32>
    %cst_182 = arith.constant dense<0.000000e+00> : vector<2x32xf32>
    %689 = tpu.matmul %688, %404, %cst_182 {dimension_numbers = #tpu.dot_dimension_numbers<[1], [0], [0], [1], [0, 0, 1, 1], [], []>} : vector<2x32xf32>, vector<32x32xf32>, vector<2x32xf32> -> vector<2x32xf32>
    %690 = vector.broadcast %410 : vector<1x32xf32> to vector<2x32xf32>
    %691 = arith.addf %689, %690 : vector<2x32xf32>
    %cst_183 = arith.constant dense<0.000000e+00> : vector<2x32xf32>
    %692 = tpu.matmul %688, %406, %cst_183 {dimension_numbers = #tpu.dot_dimension_numbers<[1], [0], [0], [1], [0, 0, 1, 1], [], []>} : vector<2x32xf32>, vector<32x32xf32>, vector<2x32xf32> -> vector<2x32xf32>
    %693 = vector.broadcast %412 : vector<1x32xf32> to vector<2x32xf32>
    %694 = arith.addf %692, %693 : vector<2x32xf32>
    %cst_184 = arith.constant dense<0.000000e+00> : vector<2x32xf32>
    %695 = tpu.matmul %688, %408, %cst_184 {dimension_numbers = #tpu.dot_dimension_numbers<[1], [0], [0], [1], [0, 0, 1, 1], [], []>} : vector<2x32xf32>, vector<32x32xf32>, vector<2x32xf32> -> vector<2x32xf32>
    %696 = vector.broadcast %414 : vector<1x32xf32> to vector<2x32xf32>
    %697 = arith.addf %695, %696 : vector<2x32xf32>
    %698 = vector.extract_strided_slice %388 {offsets = [14, 0], sizes = [2, 32], strides = [1, 1]} : vector<16x32xf32> to vector<2x32xf32>
    %699 = arith.addf %698, %691 : vector<2x32xf32>
    %700 = arith.negf %699 : vector<2x32xf32>
    %701 = math.exp %700 : vector<2x32xf32>
    %cst_185 = arith.constant 1.000000e+00 : f32
    %702 = vector.broadcast %cst_185 : f32 to vector<2x32xf32>
    %703 = arith.addf %702, %701 : vector<2x32xf32>
    %704 = arith.divf %702, %703 : vector<2x32xf32>
    %705 = vector.extract_strided_slice %395 {offsets = [14, 0], sizes = [2, 32], strides = [1, 1]} : vector<16x32xf32> to vector<2x32xf32>
    %706 = arith.addf %705, %694 : vector<2x32xf32>
    %707 = arith.negf %706 : vector<2x32xf32>
    %708 = math.exp %707 : vector<2x32xf32>
    %cst_186 = arith.constant 1.000000e+00 : f32
    %709 = vector.broadcast %cst_186 : f32 to vector<2x32xf32>
    %710 = arith.addf %709, %708 : vector<2x32xf32>
    %711 = arith.divf %709, %710 : vector<2x32xf32>
    %712 = vector.extract_strided_slice %402 {offsets = [14, 0], sizes = [2, 32], strides = [1, 1]} : vector<16x32xf32> to vector<2x32xf32>
    %713 = arith.mulf %704, %697 : vector<2x32xf32>
    %714 = arith.addf %712, %713 : vector<2x32xf32>
    %715 = math.tanh %714 : vector<2x32xf32>
    %cst_187 = arith.constant 1.000000e+00 : f32
    %716 = vector.broadcast %cst_187 : f32 to vector<2x32xf32>
    %717 = arith.subf %716, %711 : vector<2x32xf32>
    %718 = arith.mulf %717, %715 : vector<2x32xf32>
    %719 = arith.mulf %711, %688 : vector<2x32xf32>
    %720 = arith.addf %718, %719 : vector<2x32xf32>
    %721 = vector.broadcast %32 : vector<2x1xf32> to vector<2x32xf32>
    %722 = arith.mulf %721, %720 : vector<2x32xf32>
    %cst_188 = arith.constant 1.000000e+00 : f32
    %723 = vector.broadcast %cst_188 : f32 to vector<2x1xf32>
    %724 = arith.subf %723, %32 : vector<2x1xf32>
    %725 = vector.broadcast %724 : vector<2x1xf32> to vector<2x32xf32>
    %726 = arith.mulf %725, %688 : vector<2x32xf32>
    %727 = arith.addf %722, %726 : vector<2x32xf32>
    %728 = tpu.concatenate %454, %493, %532, %571, %610, %649, %688, %727 in 0 : vector<2x32xf32>, vector<2x32xf32>, vector<2x32xf32>, vector<2x32xf32>, vector<2x32xf32>, vector<2x32xf32>, vector<2x32xf32>, vector<2x32xf32> -> vector<16x32xf32>
    %729 = vector.broadcast %33 : vector<16x1xf32> to vector<16x32xf32>
    %730 = arith.mulf %729, %728 : vector<16x32xf32>
    %cst_189 = arith.constant 1.000000e+00 : f32
    %731 = vector.broadcast %cst_189 : f32 to vector<16x1xf32>
    %732 = arith.subf %731, %33 : vector<16x1xf32>
    %cst_190 = arith.constant -1.000000e+00 : f32
    %733 = vector.broadcast %cst_190 : f32 to vector<16x1xf32>
    %734 = arith.mulf %732, %733 : vector<16x1xf32>
    %735 = vector.broadcast %734 : vector<16x1xf32> to vector<16x32xf32>
    %736 = arith.addf %730, %735 : vector<16x32xf32>
    %c0_191 = arith.constant 0 : index
    %c0_192 = arith.constant 0 : index
    %737 = vector.load %arg6[%c0_191, %c0_192] : memref<1x32xf32, #tpu.memory_space<vmem>>, vector<1x32xf32>
    %738 = vector.broadcast %737 : vector<1x32xf32> to vector<16x32xf32>
    %739 = arith.mulf %736, %738 : vector<16x32xf32>
    %cst_193 = arith.constant dense<0.000000e+00> : vector<16xf32>
    %740 = vector.multi_reduction <add>, %739, %cst_193 [1] : vector<16x32xf32> to vector<16xf32>
    %741 = vector.shape_cast %740 : vector<16xf32> to vector<16x1xf32>
    %c0_194 = arith.constant 0 : index
    %c0_195 = arith.constant 0 : index
    %742 = vector.load %arg7[%c0_194, %c0_195] : memref<1x1xf32, #tpu.memory_space<vmem>>, vector<1x1xf32>
    %743 = vector.broadcast %742 : vector<1x1xf32> to vector<16x1xf32>
    %744 = arith.addf %741, %743 : vector<16x1xf32>
    %c0_196 = arith.constant 0 : index
    %c0_197 = arith.constant 0 : index
    %745 = vector.load %arg8[%c0_196, %c0_197] : memref<16x1xf32, #tpu.memory_space<vmem>>, vector<16x1xf32>
    tpu.vector_store %arg8[%c0_196, %c0_197], %744 {strides = array<i32>} : memref<16x1xf32, #tpu.memory_space<vmem>>, vector<16x1xf32>,
    return
  }
}

</mosaic_0001>

<llo_original>
// kernel: tpu_custom_call.1
$region0: #{tpu_custom_call.1}
  #allocation0 [shape = 'u32[]', space=smem, size = 0x4, offset = 0x4, fixed_abs, tag = 'smem constant byte address 0x4 - core index']
  #allocation1 [shape = 'u32[144,128]{1,0:T(1,128)}', space=vmem, size = 0x12000, scoped, tag = 'internal scratch']
  #allocation2 [shape = 'f32[1,1]{1,0:T(1,128)S(1)}', space=vmem, size = 0x200, scoped, tag = 'scoped memory for tpu_custom_call.1']
  %s0 = inlined_call_operand.hbm [shape: f32[16,32], index: 0, kind: input, shape index: {}]
  %s1 = inlined_call_operand.vmem [shape: s32[2,1], index: 1, kind: input, shape index: {}]
  %s2 = inlined_call_operand.hbm [shape: f32[6,32,32], index: 2, kind: input, shape index: {}]
  %s3 = inlined_call_operand.hbm [shape: f32[6,32,32], index: 3, kind: input, shape index: {}]
  %s4 = inlined_call_operand.vmem [shape: f32[6,1,32], index: 4, kind: input, shape index: {}]
  %s5 = inlined_call_operand.vmem [shape: f32[6,1,32], index: 5, kind: input, shape index: {}]
  %s6 = inlined_call_operand.vmem [shape: f32[1,32], index: 6, kind: input, shape index: {}]
  %s7 = inlined_call_operand.<no memory space> [shape: f32[1,1], index: 7, kind: input, shape index: {}]
  %s8 = inlined_call_operand.vmem [shape: f32[16,1], index: 8, kind: output, shape index: {}]
  %s9 = sld [smem:[#allocation0]]
  $region54: #{tpu_custom_call.1} parent=0
    _
  %s11 = ssub.s32 1, %s9
  %s12 = scalar_select 0, %s11, %s9
  %v13 = vstv %s7
  %14 = vst [vmem:[#allocation2] sm:$0x1] %v13
  $region1: #{tpu_custom_call.1} parent=0
    #allocation3 [shape = 'u8[8192]{0}', space=vmem, size = 0x2000, scoped, tag = 'input window, operand 0, single buffered']
    #allocation4 [shape = 's32[1]{0}', space=sflag, size = 0x4, scoped, tag = 'scoped memory for tpu_custom_call.1']
    #allocation5 [shape = 'u8[98304]{0}', space=vmem, size = 0x18000, scoped, tag = 'input window, operand 2, single buffered']
    #allocation6 [shape = 's32[1]{0}', space=sflag, size = 0x4, scoped, tag = 'scoped memory for tpu_custom_call.1']
    #allocation7 [shape = 'u8[98304]{0}', space=vmem, size = 0x18000, scoped, tag = 'input window, operand 3, single buffered']
    %15 = vsyncpa [#allocation4], 0
    %16 = vsyncpa [#allocation6], 0
    // Predicated region
    $region2: #{tpu_custom_call.1} parent=1 // pred_check
      _
    $region3: #{tpu_custom_call.1} parent=1 // pred_check_branch
      %18 = sbr.rel (0) target = $region5
    $region4: #{tpu_custom_call.1} parent=1 // pred_region
      %s20 = ssub.s32 256, 256
      %21 = vsyncadd [#allocation4], %s20
      %s22 = sshll.u32 [#allocation3], 4
      %s23 = int_to_ptr.vmem [resolvable:$true] %s22
      %28 = dma.hbm_to_vmem [thread:$0]  %s0, 256, %s23, [#allocation4], 128, 128, 8
    $region5: #{tpu_custom_call.1} parent=1 // pred_fallthru
      _
    // Predicated region
    $region6: #{tpu_custom_call.1} parent=1 // pred_check
      _
    $region7: #{tpu_custom_call.1} parent=1 // pred_check_branch
      %30 = sbr.rel (0) target = $region9
    $region8: #{tpu_custom_call.1} parent=1 // pred_region
      _
    $region9: #{tpu_custom_call.1} parent=1 // pred_fallthru
      _
    // Predicated region
    $region10: #{tpu_custom_call.1} parent=1 // pred_check
      _
    $region11: #{tpu_custom_call.1} parent=1 // pred_check_branch
      %32 = sbr.rel (0) target = $region13
    $region12: #{tpu_custom_call.1} parent=1 // pred_region
      %s34 = ssub.s32 3072, 3072
      %35 = vsyncadd [#allocation6], %s34
      %s36 = sshll.u32 [#allocation5], 4
      %s37 = int_to_ptr.vmem [resolvable:$true] %s36
      %42 = dma.hbm_to_vmem [thread:$0]  %s2, 3072, %s37, [#allocation6], 128, 128, 8
    $region13: #{tpu_custom_call.1} parent=1 // pred_fallthru
      _
    // Predicated region
    $region14: #{tpu_custom_call.1} parent=1 // pred_check
      _
    $region15: #{tpu_custom_call.1} parent=1 // pred_check_branch
      %44 = sbr.rel (0) target = $region17
    $region16: #{tpu_custom_call.1} parent=1 // pred_region
      %s46 = ssub.s32 3072, 3072
      %47 = vsyncadd [#allocation6], %s46
      %s48 = sshll.u32 [#allocation7], 4
      %s49 = int_to_ptr.vmem [resolvable:$true] %s48
      %54 = dma.hbm_to_vmem [thread:$0]  %s3, 3072, %s49, [#allocation6], 128, 128, 8
    $region17: #{tpu_custom_call.1} parent=1 // pred_fallthru
      _
    // Predicated region
    $region18: #{tpu_custom_call.1} parent=1 // pred_check
      _
    $region19: #{tpu_custom_call.1} parent=1 // pred_check_branch
      %56 = sbr.rel (0) target = $region21
    $region20: #{tpu_custom_call.1} parent=1 // pred_region
      _
    $region21: #{tpu_custom_call.1} parent=1 // pred_fallthru
      _
    // Predicated region
    $region22: #{tpu_custom_call.1} parent=1 // pred_check
      _
    $region23: #{tpu_custom_call.1} parent=1 // pred_check_branch
      %58 = sbr.rel (0) target = $region25
    $region24: #{tpu_custom_call.1} parent=1 // pred_region
      _
    $region25: #{tpu_custom_call.1} parent=1 // pred_fallthru
      _
    // Predicated region
    $region26: #{tpu_custom_call.1} parent=1 // pred_check
      _
    $region27: #{tpu_custom_call.1} parent=1 // pred_check_branch
      %60 = sbr.rel (0) target = $region29
    $region28: #{tpu_custom_call.1} parent=1 // pred_region
      _
    $region29: #{tpu_custom_call.1} parent=1 // pred_fallthru
      _
    // Predicated region
    $region30: #{tpu_custom_call.1} parent=1 // pred_check
      _
    $region31: #{tpu_custom_call.1} parent=1 // pred_check_branch
      %62 = sbr.rel (0) target = $region33
    $region32: #{tpu_custom_call.1} parent=1 // pred_region
      _
    $region33: #{tpu_custom_call.1} parent=1 // pred_fallthru
      _
    // Predicated region
    $region34: #{tpu_custom_call.1} parent=1 // pred_check
      _
    $region35: #{tpu_custom_call.1} parent=1 // pred_check_branch
      %64 = sbr.rel (0) target = $region37
    $region36: #{tpu_custom_call.1} parent=1 // pred_region
      %65 = dma.done [#allocation4], 256
    $region37: #{tpu_custom_call.1} parent=1 // pred_fallthru
      _
    // Predicated region
    $region38: #{tpu_custom_call.1} parent=1 // pred_check
      _
    $region39: #{tpu_custom_call.1} parent=1 // pred_check_branch
      %67 = sbr.rel (0) target = $region41
    $region40: #{tpu_custom_call.1} parent=1 // pred_region
      %68 = dma.done [#allocation6], 3072
    $region41: #{tpu_custom_call.1} parent=1 // pred_fallthru
      _
    // Predicated region
    $region42: #{tpu_custom_call.1} parent=1 // pred_check
      _
    $region43: #{tpu_custom_call.1} parent=1 // pred_check_branch
      %70 = sbr.rel (0) target = $region45
    $region44: #{tpu_custom_call.1} parent=1 // pred_region
      %71 = dma.done [#allocation6], 3072
    $region45: #{tpu_custom_call.1} parent=1 // pred_fallthru
      _
    %v72 = vld [vmem:[%s1] sm:$0x3]
    %vm73 = vcmp.gt.s32.totalorder %v72, 0
    %v74 = vsel %vm73, 1, 0
    %v75 = vcvt.s32.f32 %v74
    %vm76 = vcmp.gt.s32.totalorder %v72, 1
    %v77 = vsel %vm76, 1, 0
    %v78 = vcvt.s32.f32 %v77
    %vm79 = vcmp.gt.s32.totalorder %v72, 2
    %v80 = vsel %vm79, 1, 0
    %v81 = vcvt.s32.f32 %v80
    %vm82 = vcmp.gt.s32.totalorder %v72, 3
    %v83 = vsel %vm82, 1, 0
    %v84 = vcvt.s32.f32 %v83
    %vm85 = vcmp.gt.s32.totalorder %v72, 4
    %v86 = vsel %vm85, 1, 0
    %v87 = vcvt.s32.f32 %v86
    %vm88 = vcmp.gt.s32.totalorder %v72, 5
    %v89 = vsel %vm88, 1, 0
    %v90 = vcvt.s32.f32 %v89
    %vm91 = vcmp.gt.s32.totalorder %v72, 6
    %v92 = vsel %vm91, 1, 0
    %v93 = vcvt.s32.f32 %v92
    %vm94 = vcmp.gt.s32.totalorder %v72, 7
    %v95 = vsel %vm94, 1, 0
    %v96 = vcvt.s32.f32 %v95
    %v98 = vrot.slane %v78, 6
    %v101 = vrot.slane %v81, 4
    %v104 = vrot.slane %v84, 2
    %v107 = vrot.slane %v90, 6
    %v110 = vrot.slane %v93, 4
    %v113 = vrot.slane %v96, 2
    %vm115 = vcmask 1041408
    %v116 = vsel %vm115, %v75, %v98
    %vm117 = vcmask 1043456
    %v118 = vsel %vm117, %v116, %v101
    %vm119 = vcmask 1045504
    %v120 = vsel %vm119, %v118, %v104
    %v121 = vsel %vm115, %v87, %v107
    %v122 = vsel %vm117, %v121, %v110
    %v123 = vsel %vm119, %v122, %v113
    %v124 = vld [vmem:[#allocation3] sm:$0xff]
    %v125 = vld [vmem:[#allocation3 + $0x8] sm:$0xff]
    %v126 = vld [vmem:[#allocation5] sm:$0xff]
    %v127 = vld [vmem:[#allocation5 + $0x8] sm:$0xff]
    %v128 = vld [vmem:[#allocation5 + $0x10] sm:$0xff]
    %v129 = vld [vmem:[#allocation5 + $0x18] sm:$0xff]
    %v130 = vld [vmem:[%s4] sm:$0x1]
    %v132 = vlaneseq
    %v133 = vshrl.u32 %v132, 7
    %v134 = vsub.s32 0, %v133
    %v135 = vrot.slane %v130, %v134
    %vm137 = vcmask 261120
    %v139 = vsel %vm137, %v124, 0
    %v142 = vsel %vm137, %v125, 0
    %144 = vmatprep.subr.mxu0 0.0
    %145 = vmatpush1.msra.mxu0 %v126
    %146 = vmatprep.subr.mxu0 0.0
    %147 = vmatpush1.msra.mxu0 %v127
    %148 = vmatprep.subr.mxu0 0.0
    %149 = vmatpush1.msra.mxu0 %v128
    %150 = vmatprep.subr.mxu0 0.0
    %151 = vmatpush1.msra.mxu0 %v129
    %152 = vmatprep.subr.mxu0 0.0
    %153 = vmatpush1.msra.mxu0 0.0
    %154 = vmatprep.subr.mxu0 0.0
    %155 = vmatpush1.msra.mxu0 0.0
    %156 = vmatprep.subr.mxu0 0.0
    %157 = vmatpush1.msra.mxu0 0.0
    %158 = vmatprep.subr.mxu0 0.0
    %159 = vmatpush1.msra.mxu0 0.0
    %160 = vmatprep.subr.mxu0 0.0
    %161 = vmatpush1.msra.mxu0 0.0
    %162 = vmatprep.subr.mxu0 0.0
    %163 = vmatpush1.msra.mxu0 0.0
    %164 = vmatprep.subr.mxu0 0.0
    %165 = vmatpush1.msra.mxu0 0.0
    %166 = vmatprep.subr.mxu0 0.0
    %167 = vmatpush1.msra.mxu0 0.0
    %168 = vmatprep.subr.mxu0 0.0
    %169 = vmatpush1.msra.mxu0 0.0
    %170 = vmatprep.subr.mxu0 0.0
    %171 = vmatpush1.msra.mxu0 0.0
    %172 = vmatprep.subr.mxu0 0.0
    %173 = vmatpush1.msra.mxu0 0.0
    %174 = vmatprep.subr.mxu0 0.0
    %175 = vmatpush1.msra.mxu0 0.0
    %176 = vmatprep.subr.mxu0 0.0
    %177 = vmatpush1.msra.mxu0 0.0
    %178 = vmatprep.subr.mxu0 0.0
    %179 = vmatpush1.msra.mxu0 0.0
    %180 = vmatprep.subr.mxu0 0.0
    %181 = vmatpush1.msra.mxu0 0.0
    %182 = vmatprep.subr.mxu0 0.0
    %183 = vmatpush1.msra.mxu0 0.0
    %184 = vmatprep.subr.mxu0 0.0
    %185 = vmatpush1.msra.mxu0 0.0
    %186 = vmatprep.subr.mxu0 0.0
    %187 = vmatpush1.msra.mxu0 0.0
    %188 = vmatprep.subr.mxu0 0.0
    %189 = vmatpush1.msra.mxu0 0.0
    %190 = vmatprep.subr.mxu0 0.0
    %191 = vmatpush1.msra.mxu0 0.0
    %192 = vmatprep.subr.mxu0 0.0
    %193 = vmatpush1.msra.mxu0 0.0
    %194 = vmatprep.subr.mxu0 0.0
    %195 = vmatpush1.msra.mxu0 0.0
    %196 = vmatprep.subr.mxu0 0.0
    %197 = vmatpush1.msra.mxu0 0.0
    %198 = vmatprep.subr.mxu0 0.0
    %199 = vmatpush1.msra.mxu0 0.0
    %200 = vmatprep.subr.mxu0 0.0
    %201 = vmatpush1.msra.mxu0 0.0
    %202 = vmatprep.subr.mxu0 0.0
    %203 = vmatpush1.msra.mxu0 0.0
    %204 = vmatprep.subr.mxu0 0.0
    %205 = vmatpush1.msra.mxu0 0.0
    %206 = vmatprep.subr.mxu0 0.0
    %207 = vmatpush1.msra.mxu0 0.0
    %208 = vmatprep.mubr.f32.mxu0 0.0
    %209 = vmatmul.mubr.f32.gmra.mrb[0].mxu0 %v139
    %v210 = vpop.f32.mrb[0].mxu0
    %v211 = vadd.f32 %v135, %v210
    %v212 = vpop.f32.mrb[0].mxu0
    %213 = vmatprep.mubr.f32.mxu0 0.0
    %214 = vmatmul.mubr.f32.gmra.mrb[0].mxu0 %v142
    %v215 = vpop.f32.mrb[0].mxu0
    %v216 = vadd.f32 %v135, %v215
    %v217 = vpop.f32.mrb[0].mxu0
    %218 = vdwg.mxu0
    %s219 = scalar_lea.vmem [#allocation5], 32
    %v220 = vld [vmem:[%s219] sm:$0xff]
    %v221 = vld [vmem:[%s219 + $0x8] sm:$0xff]
    %v222 = vld [vmem:[%s219 + $0x10] sm:$0xff]
    %v223 = vld [vmem:[%s219 + $0x18] sm:$0xff]
    %s224 = scalar_lea.vmem %s4, 1
    %v225 = vld [vmem:[%s224] sm:$0x1]
    %v227 = vlaneseq
    %v228 = vshrl.u32 %v227, 7
    %v229 = vsub.s32 0, %v228
    %v230 = vrot.slane %v225, %v229
    %232 = vmatprep.subr.mxu0 0.0
    %233 = vmatpush1.msra.mxu0 %v220
    %234 = vmatprep.subr.mxu0 0.0
    %235 = vmatpush1.msra.mxu0 %v221
    %236 = vmatprep.subr.mxu0 0.0
    %237 = vmatpush1.msra.mxu0 %v222
    %238 = vmatprep.subr.mxu0 0.0
    %239 = vmatpush1.msra.mxu0 %v223
    %240 = vmatprep.subr.mxu0 0.0
    %241 = vmatpush1.msra.mxu0 0.0
    %242 = vmatprep.subr.mxu0 0.0
    %243 = vmatpush1.msra.mxu0 0.0
    %244 = vmatprep.subr.mxu0 0.0
    %245 = vmatpush1.msra.mxu0 0.0
    %246 = vmatprep.subr.mxu0 0.0
    %247 = vmatpush1.msra.mxu0 0.0
    %248 = vmatprep.subr.mxu0 0.0
    %249 = vmatpush1.msra.mxu0 0.0
    %250 = vmatprep.subr.mxu0 0.0
    %251 = vmatpush1.msra.mxu0 0.0
    %252 = vmatprep.subr.mxu0 0.0
    %253 = vmatpush1.msra.mxu0 0.0
    %254 = vmatprep.subr.mxu0 0.0
    %255 = vmatpush1.msra.mxu0 0.0
    %256 = vmatprep.subr.mxu0 0.0
    %257 = vmatpush1.msra.mxu0 0.0
    %258 = vmatprep.subr.mxu0 0.0
    %259 = vmatpush1.msra.mxu0 0.0
    %260 = vmatprep.subr.mxu0 0.0
    %261 = vmatpush1.msra.mxu0 0.0
    %262 = vmatprep.subr.mxu0 0.0
    %263 = vmatpush1.msra.mxu0 0.0
    %264 = vmatprep.subr.mxu0 0.0
    %265 = vmatpush1.msra.mxu0 0.0
    %266 = vmatprep.subr.mxu0 0.0
    %267 = vmatpush1.msra.mxu0 0.0
    %268 = vmatprep.subr.mxu0 0.0
    %269 = vmatpush1.msra.mxu0 0.0
    %270 = vmatprep.subr.mxu0 0.0
    %271 = vmatpush1.msra.mxu0 0.0
    %272 = vmatprep.subr.mxu0 0.0
    %273 = vmatpush1.msra.mxu0 0.0
    %274 = vmatprep.subr.mxu0 0.0
    %275 = vmatpush1.msra.mxu0 0.0
    %276 = vmatprep.subr.mxu0 0.0
    %277 = vmatpush1.msra.mxu0 0.0
    %278 = vmatprep.subr.mxu0 0.0
    %279 = vmatpush1.msra.mxu0 0.0
    %280 = vmatprep.subr.mxu0 0.0
    %281 = vmatpush1.msra.mxu0 0.0
    %282 = vmatprep.subr.mxu0 0.0
    %283 = vmatpush1.msra.mxu0 0.0
    %284 = vmatprep.subr.mxu0 0.0
    %285 = vmatpush1.msra.mxu0 0.0
    %286 = vmatprep.subr.mxu0 0.0
    %287 = vmatpush1.msra.mxu0 0.0
    %288 = vmatprep.subr.mxu0 0.0
    %289 = vmatpush1.msra.mxu0 0.0
    %290 = vmatprep.subr.mxu0 0.0
    %291 = vmatpush1.msra.mxu0 0.0
    %292 = vmatprep.subr.mxu0 0.0
    %293 = vmatpush1.msra.mxu0 0.0
    %294 = vmatprep.subr.mxu0 0.0
    %295 = vmatpush1.msra.mxu0 0.0
    %296 = vmatprep.mubr.f32.mxu0 0.0
    %297 = vmatmul.mubr.f32.gmra.mrb[0].mxu0 %v139
    %v298 = vpop.f32.mrb[0].mxu0
    %v299 = vadd.f32 %v230, %v298
    %v300 = vpop.f32.mrb[0].mxu0
    %301 = vmatprep.mubr.f32.mxu0 0.0
    %302 = vmatmul.mubr.f32.gmra.mrb[0].mxu0 %v142
    %v303 = vpop.f32.mrb[0].mxu0
    %v304 = vadd.f32 %v230, %v303
    %v305 = vpop.f32.mrb[0].mxu0
    %306 = vdwg.mxu0
    %s307 = scalar_lea.vmem [#allocation5], 64
    %v308 = vld [vmem:[%s307] sm:$0xff]
    %v309 = vld [vmem:[%s307 + $0x8] sm:$0xff]
    %v310 = vld [vmem:[%s307 + $0x10] sm:$0xff]
    %v311 = vld [vmem:[%s307 + $0x18] sm:$0xff]
    %s312 = scalar_lea.vmem %s4, 2
    %v313 = vld [vmem:[%s312] sm:$0x1]
    %v315 = vlaneseq
    %v316 = vshrl.u32 %v315, 7
    %v317 = vsub.s32 0, %v316
    %v318 = vrot.slane %v313, %v317
    %320 = vmatprep.subr.mxu0 0.0
    %321 = vmatpush1.msra.mxu0 %v308
    %322 = vmatprep.subr.mxu0 0.0
    %323 = vmatpush1.msra.mxu0 %v309
    %324 = vmatprep.subr.mxu0 0.0
    %325 = vmatpush1.msra.mxu0 %v310
    %326 = vmatprep.subr.mxu0 0.0
    %327 = vmatpush1.msra.mxu0 %v311
    %328 = vmatprep.subr.mxu0 0.0
    %329 = vmatpush1.msra.mxu0 0.0
    %330 = vmatprep.subr.mxu0 0.0
    %331 = vmatpush1.msra.mxu0 0.0
    %332 = vmatprep.subr.mxu0 0.0
    %333 = vmatpush1.msra.mxu0 0.0
    %334 = vmatprep.subr.mxu0 0.0
    %335 = vmatpush1.msra.mxu0 0.0
    %336 = vmatprep.subr.mxu0 0.0
    %337 = vmatpush1.msra.mxu0 0.0
    %338 = vmatprep.subr.mxu0 0.0
    %339 = vmatpush1.msra.mxu0 0.0
    %340 = vmatprep.subr.mxu0 0.0
    %341 = vmatpush1.msra.mxu0 0.0
    %342 = vmatprep.subr.mxu0 0.0
    %343 = vmatpush1.msra.mxu0 0.0
    %344 = vmatprep.subr.mxu0 0.0
    %345 = vmatpush1.msra.mxu0 0.0
    %346 = vmatprep.subr.mxu0 0.0
    %347 = vmatpush1.msra.mxu0 0.0
    %348 = vmatprep.subr.mxu0 0.0
    %349 = vmatpush1.msra.mxu0 0.0
    %350 = vmatprep.subr.mxu0 0.0
    %351 = vmatpush1.msra.mxu0 0.0
    %352 = vmatprep.subr.mxu0 0.0
    %353 = vmatpush1.msra.mxu0 0.0
    %354 = vmatprep.subr.mxu0 0.0
    %355 = vmatpush1.msra.mxu0 0.0
    %356 = vmatprep.subr.mxu0 0.0
    %357 = vmatpush1.msra.mxu0 0.0
    %358 = vmatprep.subr.mxu0 0.0
    %359 = vmatpush1.msra.mxu0 0.0
    %360 = vmatprep.subr.mxu0 0.0
    %361 = vmatpush1.msra.mxu0 0.0
    %362 = vmatprep.subr.mxu0 0.0
    %363 = vmatpush1.msra.mxu0 0.0
    %364 = vmatprep.subr.mxu0 0.0
    %365 = vmatpush1.msra.mxu0 0.0
    %366 = vmatprep.subr.mxu0 0.0
    %367 = vmatpush1.msra.mxu0 0.0
    %368 = vmatprep.subr.mxu0 0.0
    %369 = vmatpush1.msra.mxu0 0.0
    %370 = vmatprep.subr.mxu0 0.0
    %371 = vmatpush1.msra.mxu0 0.0
    %372 = vmatprep.subr.mxu0 0.0
    %373 = vmatpush1.msra.mxu0 0.0
    %374 = vmatprep.subr.mxu0 0.0
    %375 = vmatpush1.msra.mxu0 0.0
    %376 = vmatprep.subr.mxu0 0.0
    %377 = vmatpush1.msra.mxu0 0.0
    %378 = vmatprep.subr.mxu0 0.0
    %379 = vmatpush1.msra.mxu0 0.0
    %380 = vmatprep.subr.mxu0 0.0
    %381 = vmatpush1.msra.mxu0 0.0
    %382 = vmatprep.subr.mxu0 0.0
    %383 = vmatpush1.msra.mxu0 0.0
    %384 = vmatprep.mubr.f32.mxu0 0.0
    %385 = vmatmul.mubr.f32.gmra.mrb[0].mxu0 %v139
    %v386 = vpop.f32.mrb[0].mxu0
    %v387 = vadd.f32 %v318, %v386
    %v388 = vpop.f32.mrb[0].mxu0
    %389 = vmatprep.mubr.f32.mxu0 0.0
    %390 = vmatmul.mubr.f32.gmra.mrb[0].mxu0 %v142
    %v391 = vpop.f32.mrb[0].mxu0
    %v392 = vadd.f32 %v318, %v391
    %v393 = vpop.f32.mrb[0].mxu0
    %394 = vdwg.mxu0
    %v395 = vld [vmem:[#allocation7] sm:$0xff]
    %v396 = vld [vmem:[#allocation7 + $0x8] sm:$0xff]
    %v397 = vld [vmem:[#allocation7 + $0x10] sm:$0xff]
    %v398 = vld [vmem:[#allocation7 + $0x18] sm:$0xff]
    %s399 = scalar_lea.vmem [#allocation7], 32
    %v400 = vld [vmem:[%s399] sm:$0xff]
    %v401 = vld [vmem:[%s399 + $0x8] sm:$0xff]
    %v402 = vld [vmem:[%s399 + $0x10] sm:$0xff]
    %v403 = vld [vmem:[%s399 + $0x18] sm:$0xff]
    %s404 = scalar_lea.vmem [#allocation7], 64
    %v405 = vld [vmem:[%s404] sm:$0xff]
    %v406 = vld [vmem:[%s404 + $0x8] sm:$0xff]
    %v407 = vld [vmem:[%s404 + $0x10] sm:$0xff]
    %v408 = vld [vmem:[%s404 + $0x18] sm:$0xff]
    %v409 = vld [vmem:[%s5] sm:$0x1]
    %s410 = scalar_lea.vmem %s5, 1
    %v411 = vld [vmem:[%s410] sm:$0x1]
    %s412 = scalar_lea.vmem %s5, 2
    %v413 = vld [vmem:[%s412] sm:$0x1]
    %v415 = vlaneseq
    %v416 = vshrl.u32 %v415, 7
    %v417 = vsub.s32 0, %v416
    %v418 = vrot.slane %v409, %v417
    %v421 = vsel %vm137, 0.0, 0
    %423 = vmatprep.subr.mxu0 0.0
    %424 = vmatpush1.msra.mxu0 %v395
    %425 = vmatprep.subr.mxu0 0.0
    %426 = vmatpush1.msra.mxu0 %v396
    %427 = vmatprep.subr.mxu0 0.0
    %428 = vmatpush1.msra.mxu0 %v397
    %429 = vmatprep.subr.mxu0 0.0
    %430 = vmatpush1.msra.mxu0 %v398
    %431 = vmatprep.subr.mxu0 0.0
    %432 = vmatpush1.msra.mxu0 0.0
    %433 = vmatprep.subr.mxu0 0.0
    %434 = vmatpush1.msra.mxu0 0.0
    %435 = vmatprep.subr.mxu0 0.0
    %436 = vmatpush1.msra.mxu0 0.0
    %437 = vmatprep.subr.mxu0 0.0
    %438 = vmatpush1.msra.mxu0 0.0
    %439 = vmatprep.subr.mxu0 0.0
    %440 = vmatpush1.msra.mxu0 0.0
    %441 = vmatprep.subr.mxu0 0.0
    %442 = vmatpush1.msra.mxu0 0.0
    %443 = vmatprep.subr.mxu0 0.0
    %444 = vmatpush1.msra.mxu0 0.0
    %445 = vmatprep.subr.mxu0 0.0
    %446 = vmatpush1.msra.mxu0 0.0
    %447 = vmatprep.subr.mxu0 0.0
    %448 = vmatpush1.msra.mxu0 0.0
    %449 = vmatprep.subr.mxu0 0.0
    %450 = vmatpush1.msra.mxu0 0.0
    %451 = vmatprep.subr.mxu0 0.0
    %452 = vmatpush1.msra.mxu0 0.0
    %453 = vmatprep.subr.mxu0 0.0
    %454 = vmatpush1.msra.mxu0 0.0
    %455 = vmatprep.subr.mxu0 0.0
    %456 = vmatpush1.msra.mxu0 0.0
    %457 = vmatprep.subr.mxu0 0.0
    %458 = vmatpush1.msra.mxu0 0.0
    %459 = vmatprep.subr.mxu0 0.0
    %460 = vmatpush1.msra.mxu0 0.0
    %461 = vmatprep.subr.mxu0 0.0
    %462 = vmatpush1.msra.mxu0 0.0
    %463 = vmatprep.subr.mxu0 0.0
    %464 = vmatpush1.msra.mxu0 0.0
    %465 = vmatprep.subr.mxu0 0.0
    %466 = vmatpush1.msra.mxu0 0.0
    %467 = vmatprep.subr.mxu0 0.0
    %468 = vmatpush1.msra.mxu0 0.0
    %469 = vmatprep.subr.mxu0 0.0
    %470 = vmatpush1.msra.mxu0 0.0
    %471 = vmatprep.subr.mxu0 0.0
    %472 = vmatpush1.msra.mxu0 0.0
    %473 = vmatprep.subr.mxu0 0.0
    %474 = vmatpush1.msra.mxu0 0.0
    %475 = vmatprep.subr.mxu0 0.0
    %476 = vmatpush1.msra.mxu0 0.0
    %477 = vmatprep.subr.mxu0 0.0
    %478 = vmatpush1.msra.mxu0 0.0
    %479 = vmatprep.subr.mxu0 0.0
    %480 = vmatpush1.msra.mxu0 0.0
    %481 = vmatprep.subr.mxu0 0.0
    %482 = vmatpush1.msra.mxu0 0.0
    %483 = vmatprep.subr.mxu0 0.0
    %484 = vmatpush1.msra.mxu0 0.0
    %485 = vmatprep.subr.mxu0 0.0
    %486 = vmatpush1.msra.mxu0 0.0
    %487 = vmatprep.mubr.f32.mxu0 0.0
    %488 = vmatmul.mubr.f32.gmra.mrb[0].mxu0 %v421
    %v489 = vpop.f32.mrb[0].mxu0
    %v490 = vadd.f32 %v418, %v489
    %v491 = vpop.f32.mrb[0].mxu0
    %492 = vdwg.mxu0
    %v494 = vlaneseq
    %v495 = vshrl.u32 %v494, 7
    %v496 = vsub.s32 0, %v495
    %v497 = vrot.slane %v411, %v496
    %499 = vmatprep.subr.mxu0 0.0
    %500 = vmatpush1.msra.mxu0 %v400
    %501 = vmatprep.subr.mxu0 0.0
    %502 = vmatpush1.msra.mxu0 %v401
    %503 = vmatprep.subr.mxu0 0.0
    %504 = vmatpush1.msra.mxu0 %v402
    %505 = vmatprep.subr.mxu0 0.0
    %506 = vmatpush1.msra.mxu0 %v403
    %507 = vmatprep.subr.mxu0 0.0
    %508 = vmatpush1.msra.mxu0 0.0
    %509 = vmatprep.subr.mxu0 0.0
    %510 = vmatpush1.msra.mxu0 0.0
    %511 = vmatprep.subr.mxu0 0.0
    %512 = vmatpush1.msra.mxu0 0.0
    %513 = vmatprep.subr.mxu0 0.0
    %514 = vmatpush1.msra.mxu0 0.0
    %515 = vmatprep.subr.mxu0 0.0
    %516 = vmatpush1.msra.mxu0 0.0
    %517 = vmatprep.subr.mxu0 0.0
    %518 = vmatpush1.msra.mxu0 0.0
    %519 = vmatprep.subr.mxu0 0.0
    %520 = vmatpush1.msra.mxu0 0.0
    %521 = vmatprep.subr.mxu0 0.0
    %522 = vmatpush1.msra.mxu0 0.0
    %523 = vmatprep.subr.mxu0 0.0
    %524 = vmatpush1.msra.mxu0 0.0
    %525 = vmatprep.subr.mxu0 0.0
    %526 = vmatpush1.msra.mxu0 0.0
    %527 = vmatprep.subr.mxu0 0.0
    %528 = vmatpush1.msra.mxu0 0.0
    %529 = vmatprep.subr.mxu0 0.0
    %530 = vmatpush1.msra.mxu0 0.0
    %531 = vmatprep.subr.mxu0 0.0
    %532 = vmatpush1.msra.mxu0 0.0
    %533 = vmatprep.subr.mxu0 0.0
    %534 = vmatpush1.msra.mxu0 0.0
    %535 = vmatprep.subr.mxu0 0.0
    %536 = vmatpush1.msra.mxu0 0.0
    %537 = vmatprep.subr.mxu0 0.0
    %538 = vmatpush1.msra.mxu0 0.0
    %539 = vmatprep.subr.mxu0 0.0
    %540 = vmatpush1.msra.mxu0 0.0
    %541 = vmatprep.subr.mxu0 0.0
    %542 = vmatpush1.msra.mxu0 0.0
    %543 = vmatprep.subr.mxu0 0.0
    %544 = vmatpush1.msra.mxu0 0.0
    %545 = vmatprep.subr.mxu0 0.0
    %546 = vmatpush1.msra.mxu0 0.0
    %547 = vmatprep.subr.mxu0 0.0
    %548 = vmatpush1.msra.mxu0 0.0
    %549 = vmatprep.subr.mxu0 0.0
    %550 = vmatpush1.msra.mxu0 0.0
    %551 = vmatprep.subr.mxu0 0.0
    %552 = vmatpush1.msra.mxu0 0.0
    %553 = vmatprep.subr.mxu0 0.0
    %554 = vmatpush1.msra.mxu0 0.0
    %555 = vmatprep.subr.mxu0 0.0
    %556 = vmatpush1.msra.mxu0 0.0
    %557 = vmatprep.subr.mxu0 0.0
    %558 = vmatpush1.msra.mxu0 0.0
    %559 = vmatprep.subr.mxu0 0.0
    %560 = vmatpush1.msra.mxu0 0.0
    %561 = vmatprep.subr.mxu0 0.0
    %562 = vmatpush1.msra.mxu0 0.0
    %563 = vmatprep.mubr.f32.mxu0 0.0
    %564 = vmatmul.mubr.f32.gmra.mrb[0].mxu0 %v421
    %v565 = vpop.f32.mrb[0].mxu0
    %v566 = vadd.f32 %v497, %v565
    %v567 = vpop.f32.mrb[0].mxu0
    %568 = vdwg.mxu0
    %v570 = vlaneseq
    %v571 = vshrl.u32 %v570, 7
    %v572 = vsub.s32 0, %v571
    %v573 = vrot.slane %v413, %v572
    %575 = vmatprep.subr.mxu0 0.0
    %576 = vmatpush1.msra.mxu0 %v405
    %577 = vmatprep.subr.mxu0 0.0
    %578 = vmatpush1.msra.mxu0 %v406
    %579 = vmatprep.subr.mxu0 0.0
    %580 = vmatpush1.msra.mxu0 %v407
    %581 = vmatprep.subr.mxu0 0.0
    %582 = vmatpush1.msra.mxu0 %v408
    %583 = vmatprep.subr.mxu0 0.0
    %584 = vmatpush1.msra.mxu0 0.0
    %585 = vmatprep.subr.mxu0 0.0
    %586 = vmatpush1.msra.mxu0 0.0
    %587 = vmatprep.subr.mxu0 0.0
    %588 = vmatpush1.msra.mxu0 0.0
    %589 = vmatprep.subr.mxu0 0.0
    %590 = vmatpush1.msra.mxu0 0.0
    %591 = vmatprep.subr.mxu0 0.0
    %592 = vmatpush1.msra.mxu0 0.0
    %593 = vmatprep.subr.mxu0 0.0
    %594 = vmatpush1.msra.mxu0 0.0
    %595 = vmatprep.subr.mxu0 0.0
    %596 = vmatpush1.msra.mxu0 0.0
    %597 = vmatprep.subr.mxu0 0.0
    %598 = vmatpush1.msra.mxu0 0.0
    %599 = vmatprep.subr.mxu0 0.0
    %600 = vmatpush1.msra.mxu0 0.0
    %601 = vmatprep.subr.mxu0 0.0
    %602 = vmatpush1.msra.mxu0 0.0
    %603 = vmatprep.subr.mxu0 0.0
    %604 = vmatpush1.msra.mxu0 0.0
    %605 = vmatprep.subr.mxu0 0.0
    %606 = vmatpush1.msra.mxu0 0.0
    %607 = vmatprep.subr.mxu0 0.0
    %608 = vmatpush1.msra.mxu0 0.0
    %609 = vmatprep.subr.mxu0 0.0
    %610 = vmatpush1.msra.mxu0 0.0
    %611 = vmatprep.subr.mxu0 0.0
    %612 = vmatpush1.msra.mxu0 0.0
    %613 = vmatprep.subr.mxu0 0.0
    %614 = vmatpush1.msra.mxu0 0.0
    %615 = vmatprep.subr.mxu0 0.0
    %616 = vmatpush1.msra.mxu0 0.0
    %617 = vmatprep.subr.mxu0 0.0
    %618 = vmatpush1.msra.mxu0 0.0
    %619 = vmatprep.subr.mxu0 0.0
    %620 = vmatpush1.msra.mxu0 0.0
    %621 = vmatprep.subr.mxu0 0.0
    %622 = vmatpush1.msra.mxu0 0.0
    %623 = vmatprep.subr.mxu0 0.0
    %624 = vmatpush1.msra.mxu0 0.0
    %625 = vmatprep.subr.mxu0 0.0
    %626 = vmatpush1.msra.mxu0 0.0
    %627 = vmatprep.subr.mxu0 0.0
    %628 = vmatpush1.msra.mxu0 0.0
    %629 = vmatprep.subr.mxu0 0.0
    %630 = vmatpush1.msra.mxu0 0.0
    %631 = vmatprep.subr.mxu0 0.0
    %632 = vmatpush1.msra.mxu0 0.0
    %633 = vmatprep.subr.mxu0 0.0
    %634 = vmatpush1.msra.mxu0 0.0
    %635 = vmatprep.subr.mxu0 0.0
    %636 = vmatpush1.msra.mxu0 0.0
    %637 = vmatprep.subr.mxu0 0.0
    %638 = vmatpush1.msra.mxu0 0.0
    %639 = vmatprep.mubr.f32.mxu0 0.0
    %640 = vmatmul.mubr.f32.gmra.mrb[0].mxu0 %v421
    %v641 = vpop.f32.mrb[0].mxu0
    %v642 = vadd.f32 %v573, %v641
    %v643 = vpop.f32.mrb[0].mxu0
    %644 = vdwg.mxu0
    %v645 = vadd.f32 %v211, %v490
    %v646 = vxor.u32 %v645, 2147483648
    %v647 = vmul.f32 %v646, 1.442695
    %v648 = vpow.pop %v647
    %v649 = vadd.f32 %v648, 1.0
    %v650 = vrcp.pop %v649
    %v651 = vmul.f32 1.0, %v650
    %v652 = vadd.f32 %v299, %v566
    %v653 = vxor.u32 %v652, 2147483648
    %v654 = vmul.f32 %v653, 1.442695
    %v655 = vpow.pop %v654
    %v656 = vadd.f32 %v655, 1.0
    %v657 = vrcp.pop %v656
    %v658 = vmul.f32 1.0, %v657
    %v659 = vmul.f32 %v651, %v642
    %v660 = vadd.f32 %v387, %v659
    %v661 = vtanh.pop %v660
    %v662 = vsub.f32 1.0, %v658
    %v663 = vmul.f32 %v662, %v661
    %v664 = vmul.f32 %v658, 0.0
    %v665 = vadd.f32 %v663, %v664
    %667 = vset.pattern.permute.xlu0 0
    %668 = vperm.xlu0 %667, %v75
    %v669 = vpop.permute.xlu0 %668
    %v671 = vmul.f32 %v669, %v665
    %v672 = vsub.f32 1.0, %v75
    %674 = vset.pattern.permute.xlu0 0
    %675 = vperm.xlu0 %674, %v672
    %v676 = vpop.permute.xlu0 %675
    %v678 = vmul.f32 %v676, 0.0
    %v679 = vadd.f32 %v671, %v678
    %v681 = vsel %vm137, %v679, 0
    %683 = vmatprep.subr.mxu0 0.0
    %684 = vmatpush1.msra.mxu0 %v395
    %685 = vmatprep.subr.mxu0 0.0
    %686 = vmatpush1.msra.mxu0 %v396
    %687 = vmatprep.subr.mxu0 0.0
    %688 = vmatpush1.msra.mxu0 %v397
    %689 = vmatprep.subr.mxu0 0.0
    %690 = vmatpush1.msra.mxu0 %v398
    %691 = vmatprep.subr.mxu0 0.0
    %692 = vmatpush1.msra.mxu0 0.0
    %693 = vmatprep.subr.mxu0 0.0
    %694 = vmatpush1.msra.mxu0 0.0
    %695 = vmatprep.subr.mxu0 0.0
    %696 = vmatpush1.msra.mxu0 0.0
    %697 = vmatprep.subr.mxu0 0.0
    %698 = vmatpush1.msra.mxu0 0.0
    %699 = vmatprep.subr.mxu0 0.0
    %700 = vmatpush1.msra.mxu0 0.0
    %701 = vmatprep.subr.mxu0 0.0
    %702 = vmatpush1.msra.mxu0 0.0
    %703 = vmatprep.subr.mxu0 0.0
    %704 = vmatpush1.msra.mxu0 0.0
    %705 = vmatprep.subr.mxu0 0.0
    %706 = vmatpush1.msra.mxu0 0.0
    %707 = vmatprep.subr.mxu0 0.0
    %708 = vmatpush1.msra.mxu0 0.0
    %709 = vmatprep.subr.mxu0 0.0
    %710 = vmatpush1.msra.mxu0 0.0
    %711 = vmatprep.subr.mxu0 0.0
    %712 = vmatpush1.msra.mxu0 0.0
    %713 = vmatprep.subr.mxu0 0.0
    %714 = vmatpush1.msra.mxu0 0.0
    %715 = vmatprep.subr.mxu0 0.0
    %716 = vmatpush1.msra.mxu0 0.0
    %717 = vmatprep.subr.mxu0 0.0
    %718 = vmatpush1.msra.mxu0 0.0
    %719 = vmatprep.subr.mxu0 0.0
    %720 = vmatpush1.msra.mxu0 0.0
    %721 = vmatprep.subr.mxu0 0.0
    %722 = vmatpush1.msra.mxu0 0.0
    %723 = vmatprep.subr.mxu0 0.0
    %724 = vmatpush1.msra.mxu0 0.0
    %725 = vmatprep.subr.mxu0 0.0
    %726 = vmatpush1.msra.mxu0 0.0
    %727 = vmatprep.subr.mxu0 0.0
    %728 = vmatpush1.msra.mxu0 0.0
    %729 = vmatprep.subr.mxu0 0.0
    %730 = vmatpush1.msra.mxu0 0.0
    %731 = vmatprep.subr.mxu0 0.0
    %732 = vmatpush1.msra.mxu0 0.0
    %733 = vmatprep.subr.mxu0 0.0
    %734 = vmatpush1.msra.mxu0 0.0
    %735 = vmatprep.subr.mxu0 0.0
    %736 = vmatpush1.msra.mxu0 0.0
    %737 = vmatprep.subr.mxu0 0.0
    %738 = vmatpush1.msra.mxu0 0.0
    %739 = vmatprep.subr.mxu0 0.0
    %740 = vmatpush1.msra.mxu0 0.0
    %741 = vmatprep.subr.mxu0 0.0
    %742 = vmatpush1.msra.mxu0 0.0
    %743 = vmatprep.subr.mxu0 0.0
    %744 = vmatpush1.msra.mxu0 0.0
    %745 = vmatprep.subr.mxu0 0.0
    %746 = vmatpush1.msra.mxu0 0.0
    %747 = vmatprep.mubr.f32.mxu0 0.0
    %748 = vmatmul.mubr.f32.gmra.mrb[0].mxu0 %v681
    %v749 = vpop.f32.mrb[0].mxu0
    %v750 = vadd.f32 %v418, %v749
    %v751 = vpop.f32.mrb[0].mxu0
    %752 = vdwg.mxu0
    %753 = vmatprep.subr.mxu0 0.0
    %754 = vmatpush1.msra.mxu0 %v400
    %755 = vmatprep.subr.mxu0 0.0
    %756 = vmatpush1.msra.mxu0 %v401
    %757 = vmatprep.subr.mxu0 0.0
    %758 = vmatpush1.msra.mxu0 %v402
    %759 = vmatprep.subr.mxu0 0.0
    %760 = vmatpush1.msra.mxu0 %v403
    %761 = vmatprep.subr.mxu0 0.0
    %762 = vmatpush1.msra.mxu0 0.0
    %763 = vmatprep.subr.mxu0 0.0
    %764 = vmatpush1.msra.mxu0 0.0
    %765 = vmatprep.subr.mxu0 0.0
    %766 = vmatpush1.msra.mxu0 0.0
    %767 = vmatprep.subr.mxu0 0.0
    %768 = vmatpush1.msra.mxu0 0.0
    %769 = vmatprep.subr.mxu0 0.0
    %770 = vmatpush1.msra.mxu0 0.0
    %771 = vmatprep.subr.mxu0 0.0
    %772 = vmatpush1.msra.mxu0 0.0
    %773 = vmatprep.subr.mxu0 0.0
    %774 = vmatpush1.msra.mxu0 0.0
    %775 = vmatprep.subr.mxu0 0.0
    %776 = vmatpush1.msra.mxu0 0.0
    %777 = vmatprep.subr.mxu0 0.0
    %778 = vmatpush1.msra.mxu0 0.0
    %779 = vmatprep.subr.mxu0 0.0
    %780 = vmatpush1.msra.mxu0 0.0
    %781 = vmatprep.subr.mxu0 0.0
    %782 = vmatpush1.msra.mxu0 0.0
    %783 = vmatprep.subr.mxu0 0.0
    %784 = vmatpush1.msra.mxu0 0.0
    %785 = vmatprep.subr.mxu0 0.0
    %786 = vmatpush1.msra.mxu0 0.0
    %787 = vmatprep.subr.mxu0 0.0
    %788 = vmatpush1.msra.mxu0 0.0
    %789 = vmatprep.subr.mxu0 0.0
    %790 = vmatpush1.msra.mxu0 0.0
    %791 = vmatprep.subr.mxu0 0.0
    %792 = vmatpush1.msra.mxu0 0.0
    %793 = vmatprep.subr.mxu0 0.0
    %794 = vmatpush1.msra.mxu0 0.0
    %795 = vmatprep.subr.mxu0 0.0
    %796 = vmatpush1.msra.mxu0 0.0
    %797 = vmatprep.subr.mxu0 0.0
    %798 = vmatpush1.msra.mxu0 0.0
    %799 = vmatprep.subr.mxu0 0.0
    %800 = vmatpush1.msra.mxu0 0.0
    %801 = vmatprep.subr.mxu0 0.0
    %802 = vmatpush1.msra.mxu0 0.0
    %803 = vmatprep.subr.mxu0 0.0
    %804 = vmatpush1.msra.mxu0 0.0
    %805 = vmatprep.subr.mxu0 0.0
    %806 = vmatpush1.msra.mxu0 0.0
    %807 = vmatprep.subr.mxu0 0.0
    %808 = vmatpush1.msra.mxu0 0.0
    %809 = vmatprep.subr.mxu0 0.0
    %810 = vmatpush1.msra.mxu0 0.0
    %811 = vmatprep.subr.mxu0 0.0
    %812 = vmatpush1.msra.mxu0 0.0
    %813 = vmatprep.subr.mxu0 0.0
    %814 = vmatpush1.msra.mxu0 0.0
    %815 = vmatprep.subr.mxu0 0.0
    %816 = vmatpush1.msra.mxu0 0.0
    %817 = vmatprep.mubr.f32.mxu0 0.0
    %818 = vmatmul.mubr.f32.gmra.mrb[0].mxu0 %v681
    %v819 = vpop.f32.mrb[0].mxu0
    %v820 = vadd.f32 %v497, %v819
    %v821 = vpop.f32.mrb[0].mxu0
    %822 = vdwg.mxu0
    %823 = vmatprep.subr.mxu0 0.0
    %824 = vmatpush1.msra.mxu0 %v405
    %825 = vmatprep.subr.mxu0 0.0
    %826 = vmatpush1.msra.mxu0 %v406
    %827 = vmatprep.subr.mxu0 0.0
    %828 = vmatpush1.msra.mxu0 %v407
    %829 = vmatprep.subr.mxu0 0.0
    %830 = vmatpush1.msra.mxu0 %v408
    %831 = vmatprep.subr.mxu0 0.0
    %832 = vmatpush1.msra.mxu0 0.0
    %833 = vmatprep.subr.mxu0 0.0
    %834 = vmatpush1.msra.mxu0 0.0
    %835 = vmatprep.subr.mxu0 0.0
    %836 = vmatpush1.msra.mxu0 0.0
    %837 = vmatprep.subr.mxu0 0.0
    %838 = vmatpush1.msra.mxu0 0.0
    %839 = vmatprep.subr.mxu0 0.0
    %840 = vmatpush1.msra.mxu0 0.0
    %841 = vmatprep.subr.mxu0 0.0
    %842 = vmatpush1.msra.mxu0 0.0
    %843 = vmatprep.subr.mxu0 0.0
    %844 = vmatpush1.msra.mxu0 0.0
    %845 = vmatprep.subr.mxu0 0.0
    %846 = vmatpush1.msra.mxu0 0.0
    %847 = vmatprep.subr.mxu0 0.0
    %848 = vmatpush1.msra.mxu0 0.0
    %849 = vmatprep.subr.mxu0 0.0
    %850 = vmatpush1.msra.mxu0 0.0
    %851 = vmatprep.subr.mxu0 0.0
    %852 = vmatpush1.msra.mxu0 0.0
    %853 = vmatprep.subr.mxu0 0.0
    %854 = vmatpush1.msra.mxu0 0.0
    %855 = vmatprep.subr.mxu0 0.0
    %856 = vmatpush1.msra.mxu0 0.0
    %857 = vmatprep.subr.mxu0 0.0
    %858 = vmatpush1.msra.mxu0 0.0
    %859 = vmatprep.subr.mxu0 0.0
    %860 = vmatpush1.msra.mxu0 0.0
    %861 = vmatprep.subr.mxu0 0.0
    %862 = vmatpush1.msra.mxu0 0.0
    %863 = vmatprep.subr.mxu0 0.0
    %864 = vmatpush1.msra.mxu0 0.0
    %865 = vmatprep.subr.mxu0 0.0
    %866 = vmatpush1.msra.mxu0 0.0
    %867 = vmatprep.subr.mxu0 0.0
    %868 = vmatpush1.msra.mxu0 0.0
    %869 = vmatprep.subr.mxu0 0.0
    %870 = vmatpush1.msra.mxu0 0.0
    %871 = vmatprep.subr.mxu0 0.0
    %872 = vmatpush1.msra.mxu0 0.0
    %873 = vmatprep.subr.mxu0 0.0
    %874 = vmatpush1.msra.mxu0 0.0
    %875 = vmatprep.subr.mxu0 0.0
    %876 = vmatpush1.msra.mxu0 0.0
    %877 = vmatprep.subr.mxu0 0.0
    %878 = vmatpush1.msra.mxu0 0.0
    %879 = vmatprep.subr.mxu0 0.0
    %880 = vmatpush1.msra.mxu0 0.0
    %881 = vmatprep.subr.mxu0 0.0
    %882 = vmatpush1.msra.mxu0 0.0
    %883 = vmatprep.subr.mxu0 0.0
    %884 = vmatpush1.msra.mxu0 0.0
    %885 = vmatprep.subr.mxu0 0.0
    %886 = vmatpush1.msra.mxu0 0.0
    %887 = vmatprep.mubr.f32.mxu0 0.0
    %888 = vmatmul.mubr.f32.gmra.mrb[0].mxu0 %v681
    %v889 = vpop.f32.mrb[0].mxu0
    %v890 = vadd.f32 %v573, %v889
    %v891 = vpop.f32.mrb[0].mxu0
    %892 = vdwg.mxu0
    %v894 = vrot.slane %v750, 6
    %v896 = vadd.f32 %v211, %v894
    %v897 = vxor.u32 %v896, 2147483648
    %v898 = vmul.f32 %v897, 1.442695
    %v899 = vpow.pop %v898
    %v900 = vadd.f32 %v899, 1.0
    %v901 = vrcp.pop %v900
    %v902 = vmul.f32 1.0, %v901
    %v904 = vrot.slane %v820, 6
    %v906 = vadd.f32 %v299, %v904
    %v907 = vxor.u32 %v906, 2147483648
    %v908 = vmul.f32 %v907, 1.442695
    %v909 = vpow.pop %v908
    %v910 = vadd.f32 %v909, 1.0
    %v911 = vrcp.pop %v910
    %v912 = vmul.f32 1.0, %v911
    %v914 = vrot.slane %v890, 6
    %v916 = vmul.f32 %v902, %v914
    %v917 = vadd.f32 %v387, %v916
    %v918 = vtanh.pop %v917
    %v919 = vsub.f32 1.0, %v912
    %v920 = vmul.f32 %v919, %v918
    %v921 = vrot.slane %v679, 6
    %v923 = vmul.f32 %v912, %v921
    %v924 = vadd.f32 %v920, %v923
    %925 = vset.pattern.permute.xlu0 0
    %926 = vperm.xlu0 %925, %v78
    %v927 = vpop.permute.xlu0 %926
    %v930 = vrot.slane %v924, 2
    %v932 = vmul.f32 %v927, %v930
    %v933 = vsub.f32 1.0, %v78
    %935 = vset.pattern.permute.xlu0 0
    %936 = vperm.xlu0 %935, %v933
    %v937 = vpop.permute.xlu0 %936
    %v939 = vmul.f32 %v937, %v679
    %v940 = vadd.f32 %v932, %v939
    %v942 = vsel %vm137, %v940, 0
    %944 = vmatprep.subr.mxu0 0.0
    %945 = vmatpush1.msra.mxu0 %v395
    %946 = vmatprep.subr.mxu0 0.0
    %947 = vmatpush1.msra.mxu0 %v396
    %948 = vmatprep.subr.mxu0 0.0
    %949 = vmatpush1.msra.mxu0 %v397
    %950 = vmatprep.subr.mxu0 0.0
    %951 = vmatpush1.msra.mxu0 %v398
    %952 = vmatprep.subr.mxu0 0.0
    %953 = vmatpush1.msra.mxu0 0.0
    %954 = vmatprep.subr.mxu0 0.0
    %955 = vmatpush1.msra.mxu0 0.0
    %956 = vmatprep.subr.mxu0 0.0
    %957 = vmatpush1.msra.mxu0 0.0
    %958 = vmatprep.subr.mxu0 0.0
    %959 = vmatpush1.msra.mxu0 0.0
    %960 = vmatprep.subr.mxu0 0.0
    %961 = vmatpush1.msra.mxu0 0.0
    %962 = vmatprep.subr.mxu0 0.0
    %963 = vmatpush1.msra.mxu0 0.0
    %964 = vmatprep.subr.mxu0 0.0
    %965 = vmatpush1.msra.mxu0 0.0
    %966 = vmatprep.subr.mxu0 0.0
    %967 = vmatpush1.msra.mxu0 0.0
    %968 = vmatprep.subr.mxu0 0.0
    %969 = vmatpush1.msra.mxu0 0.0
    %970 = vmatprep.subr.mxu0 0.0
    %971 = vmatpush1.msra.mxu0 0.0
    %972 = vmatprep.subr.mxu0 0.0
    %973 = vmatpush1.msra.mxu0 0.0
    %974 = vmatprep.subr.mxu0 0.0
    %975 = vmatpush1.msra.mxu0 0.0
    %976 = vmatprep.subr.mxu0 0.0
    %977 = vmatpush1.msra.mxu0 0.0
    %978 = vmatprep.subr.mxu0 0.0
    %979 = vmatpush1.msra.mxu0 0.0
    %980 = vmatprep.subr.mxu0 0.0
    %981 = vmatpush1.msra.mxu0 0.0
    %982 = vmatprep.subr.mxu0 0.0
    %983 = vmatpush1.msra.mxu0 0.0
    %984 = vmatprep.subr.mxu0 0.0
    %985 = vmatpush1.msra.mxu0 0.0
    %986 = vmatprep.subr.mxu0 0.0
    %987 = vmatpush1.msra.mxu0 0.0
    %988 = vmatprep.subr.mxu0 0.0
    %989 = vmatpush1.msra.mxu0 0.0
    %990 = vmatprep.subr.mxu0 0.0
    %991 = vmatpush1.msra.mxu0 0.0
    %992 = vmatprep.subr.mxu0 0.0
    %993 = vmatpush1.msra.mxu0 0.0
    %994 = vmatprep.subr.mxu0 0.0
    %995 = vmatpush1.msra.mxu0 0.0
    %996 = vmatprep.subr.mxu0 0.0
    %997 = vmatpush1.msra.mxu0 0.0
    %998 = vmatprep.subr.mxu0 0.0
    %999 = vmatpush1.msra.mxu0 0.0
    %1000 = vmatprep.subr.mxu0 0.0
    %1001 = vmatpush1.msra.mxu0 0.0
    %1002 = vmatprep.subr.mxu0 0.0
    %1003 = vmatpush1.msra.mxu0 0.0
    %1004 = vmatprep.subr.mxu0 0.0
    %1005 = vmatpush1.msra.mxu0 0.0
    %1006 = vmatprep.subr.mxu0 0.0
    %1007 = vmatpush1.msra.mxu0 0.0
    %1008 = vmatprep.mubr.f32.mxu0 0.0
    %1009 = vmatmul.mubr.f32.gmra.mrb[0].mxu0 %v942
    %v1010 = vpop.f32.mrb[0].mxu0
    %v1011 = vadd.f32 %v418, %v1010
    %v1012 = vpop.f32.mrb[0].mxu0
    %1013 = vdwg.mxu0
    %1014 = vmatprep.subr.mxu0 0.0
    %1015 = vmatpush1.msra.mxu0 %v400
    %1016 = vmatprep.subr.mxu0 0.0
    %1017 = vmatpush1.msra.mxu0 %v401
    %1018 = vmatprep.subr.mxu0 0.0
    %1019 = vmatpush1.msra.mxu0 %v402
    %1020 = vmatprep.subr.mxu0 0.0
    %1021 = vmatpush1.msra.mxu0 %v403
    %1022 = vmatprep.subr.mxu0 0.0
    %1023 = vmatpush1.msra.mxu0 0.0
    %1024 = vmatprep.subr.mxu0 0.0
    %1025 = vmatpush1.msra.mxu0 0.0
    %1026 = vmatprep.subr.mxu0 0.0
    %1027 = vmatpush1.msra.mxu0 0.0
    %1028 = vmatprep.subr.mxu0 0.0
    %1029 = vmatpush1.msra.mxu0 0.0
    %1030 = vmatprep.subr.mxu0 0.0
    %1031 = vmatpush1.msra.mxu0 0.0
    %1032 = vmatprep.subr.mxu0 0.0
    %1033 = vmatpush1.msra.mxu0 0.0
    %1034 = vmatprep.subr.mxu0 0.0
    %1035 = vmatpush1.msra.mxu0 0.0
    %1036 = vmatprep.subr.mxu0 0.0
    %1037 = vmatpush1.msra.mxu0 0.0
    %1038 = vmatprep.subr.mxu0 0.0
    %1039 = vmatpush1.msra.mxu0 0.0
    %1040 = vmatprep.subr.mxu0 0.0
    %1041 = vmatpush1.msra.mxu0 0.0
    %1042 = vmatprep.subr.mxu0 0.0
    %1043 = vmatpush1.msra.mxu0 0.0
    %1044 = vmatprep.subr.mxu0 0.0
    %1045 = vmatpush1.msra.mxu0 0.0
    %1046 = vmatprep.subr.mxu0 0.0
    %1047 = vmatpush1.msra.mxu0 0.0
    %1048 = vmatprep.subr.mxu0 0.0
    %1049 = vmatpush1.msra.mxu0 0.0
    %1050 = vmatprep.subr.mxu0 0.0
    %1051 = vmatpush1.msra.mxu0 0.0
    %1052 = vmatprep.subr.mxu0 0.0
    %1053 = vmatpush1.msra.mxu0 0.0
    %1054 = vmatprep.subr.mxu0 0.0
    %1055 = vmatpush1.msra.mxu0 0.0
    %1056 = vmatprep.subr.mxu0 0.0
    %1057 = vmatpush1.msra.mxu0 0.0
    %1058 = vmatprep.subr.mxu0 0.0
    %1059 = vmatpush1.msra.mxu0 0.0
    %1060 = vmatprep.subr.mxu0 0.0
    %1061 = vmatpush1.msra.mxu0 0.0
    %1062 = vmatprep.subr.mxu0 0.0
    %1063 = vmatpush1.msra.mxu0 0.0
    %1064 = vmatprep.subr.mxu0 0.0
    %1065 = vmatpush1.msra.mxu0 0.0
    %1066 = vmatprep.subr.mxu0 0.0
    %1067 = vmatpush1.msra.mxu0 0.0
    %1068 = vmatprep.subr.mxu0 0.0
    %1069 = vmatpush1.msra.mxu0 0.0
    %1070 = vmatprep.subr.mxu0 0.0
    %1071 = vmatpush1.msra.mxu0 0.0
    %1072 = vmatprep.subr.mxu0 0.0
    %1073 = vmatpush1.msra.mxu0 0.0
    %1074 = vmatprep.subr.mxu0 0.0
    %1075 = vmatpush1.msra.mxu0 0.0
    %1076 = vmatprep.subr.mxu0 0.0
    %1077 = vmatpush1.msra.mxu0 0.0
    %1078 = vmatprep.mubr.f32.mxu0 0.0
    %1079 = vmatmul.mubr.f32.gmra.mrb[0].mxu0 %v942
    %v1080 = vpop.f32.mrb[0].mxu0
    %v1081 = vadd.f32 %v497, %v1080
    %v1082 = vpop.f32.mrb[0].mxu0
    %1083 = vdwg.mxu0
    %1084 = vmatprep.subr.mxu0 0.0
    %1085 = vmatpush1.msra.mxu0 %v405
    %1086 = vmatprep.subr.mxu0 0.0
    %1087 = vmatpush1.msra.mxu0 %v406
    %1088 = vmatprep.subr.mxu0 0.0
    %1089 = vmatpush1.msra.mxu0 %v407
    %1090 = vmatprep.subr.mxu0 0.0
    %1091 = vmatpush1.msra.mxu0 %v408
    %1092 = vmatprep.subr.mxu0 0.0
    %1093 = vmatpush1.msra.mxu0 0.0
    %1094 = vmatprep.subr.mxu0 0.0
    %1095 = vmatpush1.msra.mxu0 0.0
    %1096 = vmatprep.subr.mxu0 0.0
    %1097 = vmatpush1.msra.mxu0 0.0
    %1098 = vmatprep.subr.mxu0 0.0
    %1099 = vmatpush1.msra.mxu0 0.0
    %1100 = vmatprep.subr.mxu0 0.0
    %1101 = vmatpush1.msra.mxu0 0.0
    %1102 = vmatprep.subr.mxu0 0.0
    %1103 = vmatpush1.msra.mxu0 0.0
    %1104 = vmatprep.subr.mxu0 0.0
    %1105 = vmatpush1.msra.mxu0 0.0
    %1106 = vmatprep.subr.mxu0 0.0
    %1107 = vmatpush1.msra.mxu0 0.0
    %1108 = vmatprep.subr.mxu0 0.0
    %1109 = vmatpush1.msra.mxu0 0.0
    %1110 = vmatprep.subr.mxu0 0.0
    %1111 = vmatpush1.msra.mxu0 0.0
    %1112 = vmatprep.subr.mxu0 0.0
    %1113 = vmatpush1.msra.mxu0 0.0
    %1114 = vmatprep.subr.mxu0 0.0
    %1115 = vmatpush1.msra.mxu0 0.0
    %1116 = vmatprep.subr.mxu0 0.0
    %1117 = vmatpush1.msra.mxu0 0.0
    %1118 = vmatprep.subr.mxu0 0.0
    %1119 = vmatpush1.msra.mxu0 0.0
    %1120 = vmatprep.subr.mxu0 0.0
    %1121 = vmatpush1.msra.mxu0 0.0
    %1122 = vmatprep.subr.mxu0 0.0
    %1123 = vmatpush1.msra.mxu0 0.0
    %1124 = vmatprep.subr.mxu0 0.0
    %1125 = vmatpush1.msra.mxu0 0.0
    %1126 = vmatprep.subr.mxu0 0.0
    %1127 = vmatpush1.msra.mxu0 0.0
    %1128 = vmatprep.subr.mxu0 0.0
    %1129 = vmatpush1.msra.mxu0 0.0
    %1130 = vmatprep.subr.mxu0 0.0
    %1131 = vmatpush1.msra.mxu0 0.0
    %1132 = vmatprep.subr.mxu0 0.0
    %1133 = vmatpush1.msra.mxu0 0.0
    %1134 = vmatprep.subr.mxu0 0.0
    %1135 = vmatpush1.msra.mxu0 0.0
    %1136 = vmatprep.subr.mxu0 0.0
    %1137 = vmatpush1.msra.mxu0 0.0
    %1138 = vmatprep.subr.mxu0 0.0
    %1139 = vmatpush1.msra.mxu0 0.0
    %1140 = vmatprep.subr.mxu0 0.0
    %1141 = vmatpush1.msra.mxu0 0.0
    %1142 = vmatprep.subr.mxu0 0.0
    %1143 = vmatpush1.msra.mxu0 0.0
    %1144 = vmatprep.subr.mxu0 0.0
    %1145 = vmatpush1.msra.mxu0 0.0
    %1146 = vmatprep.subr.mxu0 0.0
    %1147 = vmatpush1.msra.mxu0 0.0
    %1148 = vmatprep.mubr.f32.mxu0 0.0
    %1149 = vmatmul.mubr.f32.gmra.mrb[0].mxu0 %v942
    %v1150 = vpop.f32.mrb[0].mxu0
    %v1151 = vadd.f32 %v573, %v1150
    %v1152 = vpop.f32.mrb[0].mxu0
    %1153 = vdwg.mxu0
    %v1155 = vrot.slane %v1011, 4
    %v1157 = vadd.f32 %v211, %v1155
    %v1158 = vxor.u32 %v1157, 2147483648
    %v1159 = vmul.f32 %v1158, 1.442695
    %v1160 = vpow.pop %v1159
    %v1161 = vadd.f32 %v1160, 1.0
    %v1162 = vrcp.pop %v1161
    %v1163 = vmul.f32 1.0, %v1162
    %v1165 = vrot.slane %v1081, 4
    %v1167 = vadd.f32 %v299, %v1165
    %v1168 = vxor.u32 %v1167, 2147483648
    %v1169 = vmul.f32 %v1168, 1.442695
    %v1170 = vpow.pop %v1169
    %v1171 = vadd.f32 %v1170, 1.0
    %v1172 = vrcp.pop %v1171
    %v1173 = vmul.f32 1.0, %v1172
    %v1175 = vrot.slane %v1151, 4
    %v1177 = vmul.f32 %v1163, %v1175
    %v1178 = vadd.f32 %v387, %v1177
    %v1179 = vtanh.pop %v1178
    %v1180 = vsub.f32 1.0, %v1173
    %v1181 = vmul.f32 %v1180, %v1179
    %v1182 = vrot.slane %v940, 4
    %v1184 = vmul.f32 %v1173, %v1182
    %v1185 = vadd.f32 %v1181, %v1184
    %1186 = vset.pattern.permute.xlu0 0
    %1187 = vperm.xlu0 %1186, %v81
    %v1188 = vpop.permute.xlu0 %1187
    %v1191 = vrot.slane %v1185, 4
    %v1193 = vmul.f32 %v1188, %v1191
    %v1194 = vsub.f32 1.0, %v81
    %1196 = vset.pattern.permute.xlu0 0
    %1197 = vperm.xlu0 %1196, %v1194
    %v1198 = vpop.permute.xlu0 %1197
    %v1200 = vmul.f32 %v1198, %v940
    %v1201 = vadd.f32 %v1193, %v1200
    %v1203 = vsel %vm137, %v1201, 0
    %1205 = vmatprep.subr.mxu0 0.0
    %1206 = vmatpush1.msra.mxu0 %v395
    %1207 = vmatprep.subr.mxu0 0.0
    %1208 = vmatpush1.msra.mxu0 %v396
    %1209 = vmatprep.subr.mxu0 0.0
    %1210 = vmatpush1.msra.mxu0 %v397
    %1211 = vmatprep.subr.mxu0 0.0
    %1212 = vmatpush1.msra.mxu0 %v398
    %1213 = vmatprep.subr.mxu0 0.0
    %1214 = vmatpush1.msra.mxu0 0.0
    %1215 = vmatprep.subr.mxu0 0.0
    %1216 = vmatpush1.msra.mxu0 0.0
    %1217 = vmatprep.subr.mxu0 0.0
    %1218 = vmatpush1.msra.mxu0 0.0
    %1219 = vmatprep.subr.mxu0 0.0
    %1220 = vmatpush1.msra.mxu0 0.0
    %1221 = vmatprep.subr.mxu0 0.0
    %1222 = vmatpush1.msra.mxu0 0.0
    %1223 = vmatprep.subr.mxu0 0.0
    %1224 = vmatpush1.msra.mxu0 0.0
    %1225 = vmatprep.subr.mxu0 0.0
    %1226 = vmatpush1.msra.mxu0 0.0
    %1227 = vmatprep.subr.mxu0 0.0
    %1228 = vmatpush1.msra.mxu0 0.0
    %1229 = vmatprep.subr.mxu0 0.0
    %1230 = vmatpush1.msra.mxu0 0.0
    %1231 = vmatprep.subr.mxu0 0.0
    %1232 = vmatpush1.msra.mxu0 0.0
    %1233 = vmatprep.subr.mxu0 0.0
    %1234 = vmatpush1.msra.mxu0 0.0
    %1235 = vmatprep.subr.mxu0 0.0
    %1236 = vmatpush1.msra.mxu0 0.0
    %1237 = vmatprep.subr.mxu0 0.0
    %1238 = vmatpush1.msra.mxu0 0.0
    %1239 = vmatprep.subr.mxu0 0.0
    %1240 = vmatpush1.msra.mxu0 0.0
    %1241 = vmatprep.subr.mxu0 0.0
    %1242 = vmatpush1.msra.mxu0 0.0
    %1243 = vmatprep.subr.mxu0 0.0
    %1244 = vmatpush1.msra.mxu0 0.0
    %1245 = vmatprep.subr.mxu0 0.0
    %1246 = vmatpush1.msra.mxu0 0.0
    %1247 = vmatprep.subr.mxu0 0.0
    %1248 = vmatpush1.msra.mxu0 0.0
    %1249 = vmatprep.subr.mxu0 0.0
    %1250 = vmatpush1.msra.mxu0 0.0
    %1251 = vmatprep.subr.mxu0 0.0
    %1252 = vmatpush1.msra.mxu0 0.0
    %1253 = vmatprep.subr.mxu0 0.0
    %1254 = vmatpush1.msra.mxu0 0.0
    %1255 = vmatprep.subr.mxu0 0.0
    %1256 = vmatpush1.msra.mxu0 0.0
    %1257 = vmatprep.subr.mxu0 0.0
    %1258 = vmatpush1.msra.mxu0 0.0
    %1259 = vmatprep.subr.mxu0 0.0
    %1260 = vmatpush1.msra.mxu0 0.0
    %1261 = vmatprep.subr.mxu0 0.0
    %1262 = vmatpush1.msra.mxu0 0.0
    %1263 = vmatprep.subr.mxu0 0.0
    %1264 = vmatpush1.msra.mxu0 0.0
    %1265 = vmatprep.subr.mxu0 0.0
    %1266 = vmatpush1.msra.mxu0 0.0
    %1267 = vmatprep.subr.mxu0 0.0
    %1268 = vmatpush1.msra.mxu0 0.0
    %1269 = vmatprep.mubr.f32.mxu0 0.0
    %1270 = vmatmul.mubr.f32.gmra.mrb[0].mxu0 %v1203
    %v1271 = vpop.f32.mrb[0].mxu0
    %v1272 = vadd.f32 %v418, %v1271
    %v1273 = vpop.f32.mrb[0].mxu0
    %1274 = vdwg.mxu0
    %1275 = vmatprep.subr.mxu0 0.0
    %1276 = vmatpush1.msra.mxu0 %v400
    %1277 = vmatprep.subr.mxu0 0.0
    %1278 = vmatpush1.msra.mxu0 %v401
    %1279 = vmatprep.subr.mxu0 0.0
    %1280 = vmatpush1.msra.mxu0 %v402
    %1281 = vmatprep.subr.mxu0 0.0
    %1282 = vmatpush1.msra.mxu0 %v403
    %1283 = vmatprep.subr.mxu0 0.0
    %1284 = vmatpush1.msra.mxu0 0.0
    %1285 = vmatprep.subr.mxu0 0.0
    %1286 = vmatpush1.msra.mxu0 0.0
    %1287 = vmatprep.subr.mxu0 0.0
    %1288 = vmatpush1.msra.mxu0 0.0
    %1289 = vmatprep.subr.mxu0 0.0
    %1290 = vmatpush1.msra.mxu0 0.0
    %1291 = vmatprep.subr.mxu0 0.0
    %1292 = vmatpush1.msra.mxu0 0.0
    %1293 = vmatprep.subr.mxu0 0.0
    %1294 = vmatpush1.msra.mxu0 0.0
    %1295 = vmatprep.subr.mxu0 0.0
    %1296 = vmatpush1.msra.mxu0 0.0
    %1297 = vmatprep.subr.mxu0 0.0
    %1298 = vmatpush1.msra.mxu0 0.0
    %1299 = vmatprep.subr.mxu0 0.0
    %1300 = vmatpush1.msra.mxu0 0.0
    %1301 = vmatprep.subr.mxu0 0.0
    %1302 = vmatpush1.msra.mxu0 0.0
    %1303 = vmatprep.subr.mxu0 0.0
    %1304 = vmatpush1.msra.mxu0 0.0
    %1305 = vmatprep.subr.mxu0 0.0
    %1306 = vmatpush1.msra.mxu0 0.0
    %1307 = vmatprep.subr.mxu0 0.0
    %1308 = vmatpush1.msra.mxu0 0.0
    %1309 = vmatprep.subr.mxu0 0.0
    %1310 = vmatpush1.msra.mxu0 0.0
    %1311 = vmatprep.subr.mxu0 0.0
    %1312 = vmatpush1.msra.mxu0 0.0
    %1313 = vmatprep.subr.mxu0 0.0
    %1314 = vmatpush1.msra.mxu0 0.0
    %1315 = vmatprep.subr.mxu0 0.0
    %1316 = vmatpush1.msra.mxu0 0.0
    %1317 = vmatprep.subr.mxu0 0.0
    %1318 = vmatpush1.msra.mxu0 0.0
    %1319 = vmatprep.subr.mxu0 0.0
    %1320 = vmatpush1.msra.mxu0 0.0
    %1321 = vmatprep.subr.mxu0 0.0
    %1322 = vmatpush1.msra.mxu0 0.0
    %1323 = vmatprep.subr.mxu0 0.0
    %1324 = vmatpush1.msra.mxu0 0.0
    %1325 = vmatprep.subr.mxu0 0.0
    %1326 = vmatpush1.msra.mxu0 0.0
    %1327 = vmatprep.subr.mxu0 0.0
    %1328 = vmatpush1.msra.mxu0 0.0
    %1329 = vmatprep.subr.mxu0 0.0
    %1330 = vmatpush1.msra.mxu0 0.0
    %1331 = vmatprep.subr.mxu0 0.0
    %1332 = vmatpush1.msra.mxu0 0.0
    %1333 = vmatprep.subr.mxu0 0.0
    %1334 = vmatpush1.msra.mxu0 0.0
    %1335 = vmatprep.subr.mxu0 0.0
    %1336 = vmatpush1.msra.mxu0 0.0
    %1337 = vmatprep.subr.mxu0 0.0
    %1338 = vmatpush1.msra.mxu0 0.0
    %1339 = vmatprep.mubr.f32.mxu0 0.0
    %1340 = vmatmul.mubr.f32.gmra.mrb[0].mxu0 %v1203
    %v1341 = vpop.f32.mrb[0].mxu0
    %v1342 = vadd.f32 %v497, %v1341
    %v1343 = vpop.f32.mrb[0].mxu0
    %1344 = vdwg.mxu0
    %1345 = vmatprep.subr.mxu0 0.0
    %1346 = vmatpush1.msra.mxu0 %v405
    %1347 = vmatprep.subr.mxu0 0.0
    %1348 = vmatpush1.msra.mxu0 %v406
    %1349 = vmatprep.subr.mxu0 0.0
    %1350 = vmatpush1.msra.mxu0 %v407
    %1351 = vmatprep.subr.mxu0 0.0
    %1352 = vmatpush1.msra.mxu0 %v408
    %1353 = vmatprep.subr.mxu0 0.0
    %1354 = vmatpush1.msra.mxu0 0.0
    %1355 = vmatprep.subr.mxu0 0.0
    %1356 = vmatpush1.msra.mxu0 0.0
    %1357 = vmatprep.subr.mxu0 0.0
    %1358 = vmatpush1.msra.mxu0 0.0
    %1359 = vmatprep.subr.mxu0 0.0
    %1360 = vmatpush1.msra.mxu0 0.0
    %1361 = vmatprep.subr.mxu0 0.0
    %1362 = vmatpush1.msra.mxu0 0.0
    %1363 = vmatprep.subr.mxu0 0.0
    %1364 = vmatpush1.msra.mxu0 0.0
    %1365 = vmatprep.subr.mxu0 0.0
    %1366 = vmatpush1.msra.mxu0 0.0
    %1367 = vmatprep.subr.mxu0 0.0
    %1368 = vmatpush1.msra.mxu0 0.0
    %1369 = vmatprep.subr.mxu0 0.0
    %1370 = vmatpush1.msra.mxu0 0.0
    %1371 = vmatprep.subr.mxu0 0.0
    %1372 = vmatpush1.msra.mxu0 0.0
    %1373 = vmatprep.subr.mxu0 0.0
    %1374 = vmatpush1.msra.mxu0 0.0
    %1375 = vmatprep.subr.mxu0 0.0
    %1376 = vmatpush1.msra.mxu0 0.0
    %1377 = vmatprep.subr.mxu0 0.0
    %1378 = vmatpush1.msra.mxu0 0.0
    %1379 = vmatprep.subr.mxu0 0.0
    %1380 = vmatpush1.msra.mxu0 0.0
    %1381 = vmatprep.subr.mxu0 0.0
    %1382 = vmatpush1.msra.mxu0 0.0
    %1383 = vmatprep.subr.mxu0 0.0
    %1384 = vmatpush1.msra.mxu0 0.0
    %1385 = vmatprep.subr.mxu0 0.0
    %1386 = vmatpush1.msra.mxu0 0.0
    %1387 = vmatprep.subr.mxu0 0.0
    %1388 = vmatpush1.msra.mxu0 0.0
    %1389 = vmatprep.subr.mxu0 0.0
    %1390 = vmatpush1.msra.mxu0 0.0
    %1391 = vmatprep.subr.mxu0 0.0
    %1392 = vmatpush1.msra.mxu0 0.0
    %1393 = vmatprep.subr.mxu0 0.0
    %1394 = vmatpush1.msra.mxu0 0.0
    %1395 = vmatprep.subr.mxu0 0.0
    %1396 = vmatpush1.msra.mxu0 0.0
    %1397 = vmatprep.subr.mxu0 0.0
    %1398 = vmatpush1.msra.mxu0 0.0
    %1399 = vmatprep.subr.mxu0 0.0
    %1400 = vmatpush1.msra.mxu0 0.0
    %1401 = vmatprep.subr.mxu0 0.0
    %1402 = vmatpush1.msra.mxu0 0.0
    %1403 = vmatprep.subr.mxu0 0.0
    %1404 = vmatpush1.msra.mxu0 0.0
    %1405 = vmatprep.subr.mxu0 0.0
    %1406 = vmatpush1.msra.mxu0 0.0
    %1407 = vmatprep.subr.mxu0 0.0
    %1408 = vmatpush1.msra.mxu0 0.0
    %1409 = vmatprep.mubr.f32.mxu0 0.0
    %1410 = vmatmul.mubr.f32.gmra.mrb[0].mxu0 %v1203
    %v1411 = vpop.f32.mrb[0].mxu0
    %v1412 = vadd.f32 %v573, %v1411
    %v1413 = vpop.f32.mrb[0].mxu0
    %1414 = vdwg.mxu0
    %v1416 = vrot.slane %v1272, 2
    %v1418 = vadd.f32 %v211, %v1416
    %v1419 = vxor.u32 %v1418, 2147483648
    %v1420 = vmul.f32 %v1419, 1.442695
    %v1421 = vpow.pop %v1420
    %v1422 = vadd.f32 %v1421, 1.0
    %v1423 = vrcp.pop %v1422
    %v1424 = vmul.f32 1.0, %v1423
    %v1426 = vrot.slane %v1342, 2
    %v1428 = vadd.f32 %v299, %v1426
    %v1429 = vxor.u32 %v1428, 2147483648
    %v1430 = vmul.f32 %v1429, 1.442695
    %v1431 = vpow.pop %v1430
    %v1432 = vadd.f32 %v1431, 1.0
    %v1433 = vrcp.pop %v1432
    %v1434 = vmul.f32 1.0, %v1433
    %v1436 = vrot.slane %v1412, 2
    %v1438 = vmul.f32 %v1424, %v1436
    %v1439 = vadd.f32 %v387, %v1438
    %v1440 = vtanh.pop %v1439
    %v1441 = vsub.f32 1.0, %v1434
    %v1442 = vmul.f32 %v1441, %v1440
    %v1443 = vrot.slane %v1201, 2
    %v1445 = vmul.f32 %v1434, %v1443
    %v1446 = vadd.f32 %v1442, %v1445
    %1447 = vset.pattern.permute.xlu0 0
    %1448 = vperm.xlu0 %1447, %v84
    %v1449 = vpop.permute.xlu0 %1448
    %v1452 = vrot.slane %v1446, 6
    %v1454 = vmul.f32 %v1449, %v1452
    %v1455 = vsub.f32 1.0, %v84
    %1457 = vset.pattern.permute.xlu0 0
    %1458 = vperm.xlu0 %1457, %v1455
    %v1459 = vpop.permute.xlu0 %1458
    %v1461 = vmul.f32 %v1459, %v1201
    %v1462 = vadd.f32 %v1454, %v1461
    %v1464 = vsel %vm137, %v1462, 0
    %1466 = vmatprep.subr.mxu0 0.0
    %1467 = vmatpush1.msra.mxu0 %v395
    %1468 = vmatprep.subr.mxu0 0.0
    %1469 = vmatpush1.msra.mxu0 %v396
    %1470 = vmatprep.subr.mxu0 0.0
    %1471 = vmatpush1.msra.mxu0 %v397
    %1472 = vmatprep.subr.mxu0 0.0
    %1473 = vmatpush1.msra.mxu0 %v398
    %1474 = vmatprep.subr.mxu0 0.0
    %1475 = vmatpush1.msra.mxu0 0.0
    %1476 = vmatprep.subr.mxu0 0.0
    %1477 = vmatpush1.msra.mxu0 0.0
    %1478 = vmatprep.subr.mxu0 0.0
    %1479 = vmatpush1.msra.mxu0 0.0
    %1480 = vmatprep.subr.mxu0 0.0
    %1481 = vmatpush1.msra.mxu0 0.0
    %1482 = vmatprep.subr.mxu0 0.0
    %1483 = vmatpush1.msra.mxu0 0.0
    %1484 = vmatprep.subr.mxu0 0.0
    %1485 = vmatpush1.msra.mxu0 0.0
    %1486 = vmatprep.subr.mxu0 0.0
    %1487 = vmatpush1.msra.mxu0 0.0
    %1488 = vmatprep.subr.mxu0 0.0
    %1489 = vmatpush1.msra.mxu0 0.0
    %1490 = vmatprep.subr.mxu0 0.0
    %1491 = vmatpush1.msra.mxu0 0.0
    %1492 = vmatprep.subr.mxu0 0.0
    %1493 = vmatpush1.msra.mxu0 0.0
    %1494 = vmatprep.subr.mxu0 0.0
    %1495 = vmatpush1.msra.mxu0 0.0
    %1496 = vmatprep.subr.mxu0 0.0
    %1497 = vmatpush1.msra.mxu0 0.0
    %1498 = vmatprep.subr.mxu0 0.0
    %1499 = vmatpush1.msra.mxu0 0.0
    %1500 = vmatprep.subr.mxu0 0.0
    %1501 = vmatpush1.msra.mxu0 0.0
    %1502 = vmatprep.subr.mxu0 0.0
    %1503 = vmatpush1.msra.mxu0 0.0
    %1504 = vmatprep.subr.mxu0 0.0
    %1505 = vmatpush1.msra.mxu0 0.0
    %1506 = vmatprep.subr.mxu0 0.0
    %1507 = vmatpush1.msra.mxu0 0.0
    %1508 = vmatprep.subr.mxu0 0.0
    %1509 = vmatpush1.msra.mxu0 0.0
    %1510 = vmatprep.subr.mxu0 0.0
    %1511 = vmatpush1.msra.mxu0 0.0
    %1512 = vmatprep.subr.mxu0 0.0
    %1513 = vmatpush1.msra.mxu0 0.0
    %1514 = vmatprep.subr.mxu0 0.0
    %1515 = vmatpush1.msra.mxu0 0.0
    %1516 = vmatprep.subr.mxu0 0.0
    %1517 = vmatpush1.msra.mxu0 0.0
    %1518 = vmatprep.subr.mxu0 0.0
    %1519 = vmatpush1.msra.mxu0 0.0
    %1520 = vmatprep.subr.mxu0 0.0
    %1521 = vmatpush1.msra.mxu0 0.0
    %1522 = vmatprep.subr.mxu0 0.0
    %1523 = vmatpush1.msra.mxu0 0.0
    %1524 = vmatprep.subr.mxu0 0.0
    %1525 = vmatpush1.msra.mxu0 0.0
    %1526 = vmatprep.subr.mxu0 0.0
    %1527 = vmatpush1.msra.mxu0 0.0
    %1528 = vmatprep.subr.mxu0 0.0
    %1529 = vmatpush1.msra.mxu0 0.0
    %1530 = vmatprep.mubr.f32.mxu0 0.0
    %1531 = vmatmul.mubr.f32.gmra.mrb[0].mxu0 %v1464
    %v1532 = vpop.f32.mrb[0].mxu0
    %v1533 = vadd.f32 %v418, %v1532
    %v1534 = vpop.f32.mrb[0].mxu0
    %1535 = vdwg.mxu0
    %1536 = vmatprep.subr.mxu0 0.0
    %1537 = vmatpush1.msra.mxu0 %v400
    %1538 = vmatprep.subr.mxu0 0.0
    %1539 = vmatpush1.msra.mxu0 %v401
    %1540 = vmatprep.subr.mxu0 0.0
    %1541 = vmatpush1.msra.mxu0 %v402
    %1542 = vmatprep.subr.mxu0 0.0
    %1543 = vmatpush1.msra.mxu0 %v403
    %1544 = vmatprep.subr.mxu0 0.0
    %1545 = vmatpush1.msra.mxu0 0.0
    %1546 = vmatprep.subr.mxu0 0.0
    %1547 = vmatpush1.msra.mxu0 0.0
    %1548 = vmatprep.subr.mxu0 0.0
    %1549 = vmatpush1.msra.mxu0 0.0
    %1550 = vmatprep.subr.mxu0 0.0
    %1551 = vmatpush1.msra.mxu0 0.0
    %1552 = vmatprep.subr.mxu0 0.0
    %1553 = vmatpush1.msra.mxu0 0.0
    %1554 = vmatprep.subr.mxu0 0.0
    %1555 = vmatpush1.msra.mxu0 0.0
    %1556 = vmatprep.subr.mxu0 0.0
    %1557 = vmatpush1.msra.mxu0 0.0
    %1558 = vmatprep.subr.mxu0 0.0
    %1559 = vmatpush1.msra.mxu0 0.0
    %1560 = vmatprep.subr.mxu0 0.0
    %1561 = vmatpush1.msra.mxu0 0.0
    %1562 = vmatprep.subr.mxu0 0.0
    %1563 = vmatpush1.msra.mxu0 0.0
    %1564 = vmatprep.subr.mxu0 0.0
    %1565 = vmatpush1.msra.mxu0 0.0
    %1566 = vmatprep.subr.mxu0 0.0
    %1567 = vmatpush1.msra.mxu0 0.0
    %1568 = vmatprep.subr.mxu0 0.0
    %1569 = vmatpush1.msra.mxu0 0.0
    %1570 = vmatprep.subr.mxu0 0.0
    %1571 = vmatpush1.msra.mxu0 0.0
    %1572 = vmatprep.subr.mxu0 0.0
    %1573 = vmatpush1.msra.mxu0 0.0
    %1574 = vmatprep.subr.mxu0 0.0
    %1575 = vmatpush1.msra.mxu0 0.0
    %1576 = vmatprep.subr.mxu0 0.0
    %1577 = vmatpush1.msra.mxu0 0.0
    %1578 = vmatprep.subr.mxu0 0.0
    %1579 = vmatpush1.msra.mxu0 0.0
    %1580 = vmatprep.subr.mxu0 0.0
    %1581 = vmatpush1.msra.mxu0 0.0
    %1582 = vmatprep.subr.mxu0 0.0
    %1583 = vmatpush1.msra.mxu0 0.0
    %1584 = vmatprep.subr.mxu0 0.0
    %1585 = vmatpush1.msra.mxu0 0.0
    %1586 = vmatprep.subr.mxu0 0.0
    %1587 = vmatpush1.msra.mxu0 0.0
    %1588 = vmatprep.subr.mxu0 0.0
    %1589 = vmatpush1.msra.mxu0 0.0
    %1590 = vmatprep.subr.mxu0 0.0
    %1591 = vmatpush1.msra.mxu0 0.0
    %1592 = vmatprep.subr.mxu0 0.0
    %1593 = vmatpush1.msra.mxu0 0.0
    %1594 = vmatprep.subr.mxu0 0.0
    %1595 = vmatpush1.msra.mxu0 0.0
    %1596 = vmatprep.subr.mxu0 0.0
    %1597 = vmatpush1.msra.mxu0 0.0
    %1598 = vmatprep.subr.mxu0 0.0
    %1599 = vmatpush1.msra.mxu0 0.0
    %1600 = vmatprep.mubr.f32.mxu0 0.0
    %1601 = vmatmul.mubr.f32.gmra.mrb[0].mxu0 %v1464
    %v1602 = vpop.f32.mrb[0].mxu0
    %v1603 = vadd.f32 %v497, %v1602
    %v1604 = vpop.f32.mrb[0].mxu0
    %1605 = vdwg.mxu0
    %1606 = vmatprep.subr.mxu0 0.0
    %1607 = vmatpush1.msra.mxu0 %v405
    %1608 = vmatprep.subr.mxu0 0.0
    %1609 = vmatpush1.msra.mxu0 %v406
    %1610 = vmatprep.subr.mxu0 0.0
    %1611 = vmatpush1.msra.mxu0 %v407
    %1612 = vmatprep.subr.mxu0 0.0
    %1613 = vmatpush1.msra.mxu0 %v408
    %1614 = vmatprep.subr.mxu0 0.0
    %1615 = vmatpush1.msra.mxu0 0.0
    %1616 = vmatprep.subr.mxu0 0.0
    %1617 = vmatpush1.msra.mxu0 0.0
    %1618 = vmatprep.subr.mxu0 0.0
    %1619 = vmatpush1.msra.mxu0 0.0
    %1620 = vmatprep.subr.mxu0 0.0
    %1621 = vmatpush1.msra.mxu0 0.0
    %1622 = vmatprep.subr.mxu0 0.0
    %1623 = vmatpush1.msra.mxu0 0.0
    %1624 = vmatprep.subr.mxu0 0.0
    %1625 = vmatpush1.msra.mxu0 0.0
    %1626 = vmatprep.subr.mxu0 0.0
    %1627 = vmatpush1.msra.mxu0 0.0
    %1628 = vmatprep.subr.mxu0 0.0
    %1629 = vmatpush1.msra.mxu0 0.0
    %1630 = vmatprep.subr.mxu0 0.0
    %1631 = vmatpush1.msra.mxu0 0.0
    %1632 = vmatprep.subr.mxu0 0.0
    %1633 = vmatpush1.msra.mxu0 0.0
    %1634 = vmatprep.subr.mxu0 0.0
    %1635 = vmatpush1.msra.mxu0 0.0
    %1636 = vmatprep.subr.mxu0 0.0
    %1637 = vmatpush1.msra.mxu0 0.0
    %1638 = vmatprep.subr.mxu0 0.0
    %1639 = vmatpush1.msra.mxu0 0.0
    %1640 = vmatprep.subr.mxu0 0.0
    %1641 = vmatpush1.msra.mxu0 0.0
    %1642 = vmatprep.subr.mxu0 0.0
    %1643 = vmatpush1.msra.mxu0 0.0
    %1644 = vmatprep.subr.mxu0 0.0
    %1645 = vmatpush1.msra.mxu0 0.0
    %1646 = vmatprep.subr.mxu0 0.0
    %1647 = vmatpush1.msra.mxu0 0.0
    %1648 = vmatprep.subr.mxu0 0.0
    %1649 = vmatpush1.msra.mxu0 0.0
    %1650 = vmatprep.subr.mxu0 0.0
    %1651 = vmatpush1.msra.mxu0 0.0
    %1652 = vmatprep.subr.mxu0 0.0
    %1653 = vmatpush1.msra.mxu0 0.0
    %1654 = vmatprep.subr.mxu0 0.0
    %1655 = vmatpush1.msra.mxu0 0.0
    %1656 = vmatprep.subr.mxu0 0.0
    %1657 = vmatpush1.msra.mxu0 0.0
    %1658 = vmatprep.subr.mxu0 0.0
    %1659 = vmatpush1.msra.mxu0 0.0
    %1660 = vmatprep.subr.mxu0 0.0
    %1661 = vmatpush1.msra.mxu0 0.0
    %1662 = vmatprep.subr.mxu0 0.0
    %1663 = vmatpush1.msra.mxu0 0.0
    %1664 = vmatprep.subr.mxu0 0.0
    %1665 = vmatpush1.msra.mxu0 0.0
    %1666 = vmatprep.subr.mxu0 0.0
    %1667 = vmatpush1.msra.mxu0 0.0
    %1668 = vmatprep.subr.mxu0 0.0
    %1669 = vmatpush1.msra.mxu0 0.0
    %1670 = vmatprep.mubr.f32.mxu0 0.0
    %1671 = vmatmul.mubr.f32.gmra.mrb[0].mxu0 %v1464
    %v1672 = vpop.f32.mrb[0].mxu0
    %v1673 = vadd.f32 %v573, %v1672
    %v1674 = vpop.f32.mrb[0].mxu0
    %1675 = vdwg.mxu0
    %v1676 = vadd.f32 %v216, %v1533
    %v1677 = vxor.u32 %v1676, 2147483648
    %v1678 = vmul.f32 %v1677, 1.442695
    %v1679 = vpow.pop %v1678
    %v1680 = vadd.f32 %v1679, 1.0
    %v1681 = vrcp.pop %v1680
    %v1682 = vmul.f32 1.0, %v1681
    %v1683 = vadd.f32 %v304, %v1603
    %v1684 = vxor.u32 %v1683, 2147483648
    %v1685 = vmul.f32 %v1684, 1.442695
    %v1686 = vpow.pop %v1685
    %v1687 = vadd.f32 %v1686, 1.0
    %v1688 = vrcp.pop %v1687
    %v1689 = vmul.f32 1.0, %v1688
    %v1690 = vmul.f32 %v1682, %v1673
    %v1691 = vadd.f32 %v392, %v1690
    %v1692 = vtanh.pop %v1691
    %v1693 = vsub.f32 1.0, %v1689
    %v1694 = vmul.f32 %v1693, %v1692
    %v1695 = vmul.f32 %v1689, %v1462
    %v1696 = vadd.f32 %v1694, %v1695
    %1698 = vset.pattern.permute.xlu0 0
    %1699 = vperm.xlu0 %1698, %v87
    %v1700 = vpop.permute.xlu0 %1699
    %v1702 = vmul.f32 %v1700, %v1696
    %v1703 = vsub.f32 1.0, %v87
    %1705 = vset.pattern.permute.xlu0 0
    %1706 = vperm.xlu0 %1705, %v1703
    %v1707 = vpop.permute.xlu0 %1706
    %v1709 = vmul.f32 %v1707, %v1462
    %v1710 = vadd.f32 %v1702, %v1709
    %v1712 = vsel %vm137, %v1710, 0
    %1714 = vmatprep.subr.mxu0 0.0
    %1715 = vmatpush1.msra.mxu0 %v395
    %1716 = vmatprep.subr.mxu0 0.0
    %1717 = vmatpush1.msra.mxu0 %v396
    %1718 = vmatprep.subr.mxu0 0.0
    %1719 = vmatpush1.msra.mxu0 %v397
    %1720 = vmatprep.subr.mxu0 0.0
    %1721 = vmatpush1.msra.mxu0 %v398
    %1722 = vmatprep.subr.mxu0 0.0
    %1723 = vmatpush1.msra.mxu0 0.0
    %1724 = vmatprep.subr.mxu0 0.0
    %1725 = vmatpush1.msra.mxu0 0.0
    %1726 = vmatprep.subr.mxu0 0.0
    %1727 = vmatpush1.msra.mxu0 0.0
    %1728 = vmatprep.subr.mxu0 0.0
    %1729 = vmatpush1.msra.mxu0 0.0
    %1730 = vmatprep.subr.mxu0 0.0
    %1731 = vmatpush1.msra.mxu0 0.0
    %1732 = vmatprep.subr.mxu0 0.0
    %1733 = vmatpush1.msra.mxu0 0.0
    %1734 = vmatprep.subr.mxu0 0.0
    %1735 = vmatpush1.msra.mxu0 0.0
    %1736 = vmatprep.subr.mxu0 0.0
    %1737 = vmatpush1.msra.mxu0 0.0
    %1738 = vmatprep.subr.mxu0 0.0
    %1739 = vmatpush1.msra.mxu0 0.0
    %1740 = vmatprep.subr.mxu0 0.0
    %1741 = vmatpush1.msra.mxu0 0.0
    %1742 = vmatprep.subr.mxu0 0.0
    %1743 = vmatpush1.msra.mxu0 0.0
    %1744 = vmatprep.subr.mxu0 0.0
    %1745 = vmatpush1.msra.mxu0 0.0
    %1746 = vmatprep.subr.mxu0 0.0
    %1747 = vmatpush1.msra.mxu0 0.0
    %1748 = vmatprep.subr.mxu0 0.0
    %1749 = vmatpush1.msra.mxu0 0.0
    %1750 = vmatprep.subr.mxu0 0.0
    %1751 = vmatpush1.msra.mxu0 0.0
    %1752 = vmatprep.subr.mxu0 0.0
    %1753 = vmatpush1.msra.mxu0 0.0
    %1754 = vmatprep.subr.mxu0 0.0
    %1755 = vmatpush1.msra.mxu0 0.0
    %1756 = vmatprep.subr.mxu0 0.0
    %1757 = vmatpush1.msra.mxu0 0.0
    %1758 = vmatprep.subr.mxu0 0.0
    %1759 = vmatpush1.msra.mxu0 0.0
    %1760 = vmatprep.subr.mxu0 0.0
    %1761 = vmatpush1.msra.mxu0 0.0
    %1762 = vmatprep.subr.mxu0 0.0
    %1763 = vmatpush1.msra.mxu0 0.0
    %1764 = vmatprep.subr.mxu0 0.0
    %1765 = vmatpush1.msra.mxu0 0.0
    %1766 = vmatprep.subr.mxu0 0.0
    %1767 = vmatpush1.msra.mxu0 0.0
    %1768 = vmatprep.subr.mxu0 0.0
    %1769 = vmatpush1.msra.mxu0 0.0
    %1770 = vmatprep.subr.mxu0 0.0
    %1771 = vmatpush1.msra.mxu0 0.0
    %1772 = vmatprep.subr.mxu0 0.0
    %1773 = vmatpush1.msra.mxu0 0.0
    %1774 = vmatprep.subr.mxu0 0.0
    %1775 = vmatpush1.msra.mxu0 0.0
    %1776 = vmatprep.subr.mxu0 0.0
    %1777 = vmatpush1.msra.mxu0 0.0
    %1778 = vmatprep.mubr.f32.mxu0 0.0
    %1779 = vmatmul.mubr.f32.gmra.mrb[0].mxu0 %v1712
    %v1780 = vpop.f32.mrb[0].mxu0
    %v1781 = vadd.f32 %v418, %v1780
    %v1782 = vpop.f32.mrb[0].mxu0
    %1783 = vdwg.mxu0
    %1784 = vmatprep.subr.mxu0 0.0
    %1785 = vmatpush1.msra.mxu0 %v400
    %1786 = vmatprep.subr.mxu0 0.0
    %1787 = vmatpush1.msra.mxu0 %v401
    %1788 = vmatprep.subr.mxu0 0.0
    %1789 = vmatpush1.msra.mxu0 %v402
    %1790 = vmatprep.subr.mxu0 0.0
    %1791 = vmatpush1.msra.mxu0 %v403
    %1792 = vmatprep.subr.mxu0 0.0
    %1793 = vmatpush1.msra.mxu0 0.0
    %1794 = vmatprep.subr.mxu0 0.0
    %1795 = vmatpush1.msra.mxu0 0.0
    %1796 = vmatprep.subr.mxu0 0.0
    %1797 = vmatpush1.msra.mxu0 0.0
    %1798 = vmatprep.subr.mxu0 0.0
    %1799 = vmatpush1.msra.mxu0 0.0
    %1800 = vmatprep.subr.mxu0 0.0
    %1801 = vmatpush1.msra.mxu0 0.0
    %1802 = vmatprep.subr.mxu0 0.0
    %1803 = vmatpush1.msra.mxu0 0.0
    %1804 = vmatprep.subr.mxu0 0.0
    %1805 = vmatpush1.msra.mxu0 0.0
    %1806 = vmatprep.subr.mxu0 0.0
    %1807 = vmatpush1.msra.mxu0 0.0
    %1808 = vmatprep.subr.mxu0 0.0
    %1809 = vmatpush1.msra.mxu0 0.0
    %1810 = vmatprep.subr.mxu0 0.0
    %1811 = vmatpush1.msra.mxu0 0.0
    %1812 = vmatprep.subr.mxu0 0.0
    %1813 = vmatpush1.msra.mxu0 0.0
    %1814 = vmatprep.subr.mxu0 0.0
    %1815 = vmatpush1.msra.mxu0 0.0
    %1816 = vmatprep.subr.mxu0 0.0
    %1817 = vmatpush1.msra.mxu0 0.0
    %1818 = vmatprep.subr.mxu0 0.0
    %1819 = vmatpush1.msra.mxu0 0.0
    %1820 = vmatprep.subr.mxu0 0.0
    %1821 = vmatpush1.msra.mxu0 0.0
    %1822 = vmatprep.subr.mxu0 0.0
    %1823 = vmatpush1.msra.mxu0 0.0
    %1824 = vmatprep.subr.mxu0 0.0
    %1825 = vmatpush1.msra.mxu0 0.0
    %1826 = vmatprep.subr.mxu0 0.0
    %1827 = vmatpush1.msra.mxu0 0.0
    %1828 = vmatprep.subr.mxu0 0.0
    %1829 = vmatpush1.msra.mxu0 0.0
    %1830 = vmatprep.subr.mxu0 0.0
    %1831 = vmatpush1.msra.mxu0 0.0
    %1832 = vmatprep.subr.mxu0 0.0
    %1833 = vmatpush1.msra.mxu0 0.0
    %1834 = vmatprep.subr.mxu0 0.0
    %1835 = vmatpush1.msra.mxu0 0.0
    %1836 = vmatprep.subr.mxu0 0.0
    %1837 = vmatpush1.msra.mxu0 0.0
    %1838 = vmatprep.subr.mxu0 0.0
    %1839 = vmatpush1.msra.mxu0 0.0
    %1840 = vmatprep.subr.mxu0 0.0
    %1841 = vmatpush1.msra.mxu0 0.0
    %1842 = vmatprep.subr.mxu0 0.0
    %1843 = vmatpush1.msra.mxu0 0.0
    %1844 = vmatprep.subr.mxu0 0.0
    %1845 = vmatpush1.msra.mxu0 0.0
    %1846 = vmatprep.subr.mxu0 0.0
    %1847 = vmatpush1.msra.mxu0 0.0
    %1848 = vmatprep.mubr.f32.mxu0 0.0
    %1849 = vmatmul.mubr.f32.gmra.mrb[0].mxu0 %v1712
    %v1850 = vpop.f32.mrb[0].mxu0
    %v1851 = vadd.f32 %v497, %v1850
    %v1852 = vpop.f32.mrb[0].mxu0
    %1853 = vdwg.mxu0
    %1854 = vmatprep.subr.mxu0 0.0
    %1855 = vmatpush1.msra.mxu0 %v405
    %1856 = vmatprep.subr.mxu0 0.0
    %1857 = vmatpush1.msra.mxu0 %v406
    %1858 = vmatprep.subr.mxu0 0.0
    %1859 = vmatpush1.msra.mxu0 %v407
    %1860 = vmatprep.subr.mxu0 0.0
    %1861 = vmatpush1.msra.mxu0 %v408
    %1862 = vmatprep.subr.mxu0 0.0
    %1863 = vmatpush1.msra.mxu0 0.0
    %1864 = vmatprep.subr.mxu0 0.0
    %1865 = vmatpush1.msra.mxu0 0.0
    %1866 = vmatprep.subr.mxu0 0.0
    %1867 = vmatpush1.msra.mxu0 0.0
    %1868 = vmatprep.subr.mxu0 0.0
    %1869 = vmatpush1.msra.mxu0 0.0
    %1870 = vmatprep.subr.mxu0 0.0
    %1871 = vmatpush1.msra.mxu0 0.0
    %1872 = vmatprep.subr.mxu0 0.0
    %1873 = vmatpush1.msra.mxu0 0.0
    %1874 = vmatprep.subr.mxu0 0.0
    %1875 = vmatpush1.msra.mxu0 0.0
    %1876 = vmatprep.subr.mxu0 0.0
    %1877 = vmatpush1.msra.mxu0 0.0
    %1878 = vmatprep.subr.mxu0 0.0
    %1879 = vmatpush1.msra.mxu0 0.0
    %1880 = vmatprep.subr.mxu0 0.0
    %1881 = vmatpush1.msra.mxu0 0.0
    %1882 = vmatprep.subr.mxu0 0.0
    %1883 = vmatpush1.msra.mxu0 0.0
    %1884 = vmatprep.subr.mxu0 0.0
    %1885 = vmatpush1.msra.mxu0 0.0
    %1886 = vmatprep.subr.mxu0 0.0
    %1887 = vmatpush1.msra.mxu0 0.0
    %1888 = vmatprep.subr.mxu0 0.0
    %1889 = vmatpush1.msra.mxu0 0.0
    %1890 = vmatprep.subr.mxu0 0.0
    %1891 = vmatpush1.msra.mxu0 0.0
    %1892 = vmatprep.subr.mxu0 0.0
    %1893 = vmatpush1.msra.mxu0 0.0
    %1894 = vmatprep.subr.mxu0 0.0
    %1895 = vmatpush1.msra.mxu0 0.0
    %1896 = vmatprep.subr.mxu0 0.0
    %1897 = vmatpush1.msra.mxu0 0.0
    %1898 = vmatprep.subr.mxu0 0.0
    %1899 = vmatpush1.msra.mxu0 0.0
    %1900 = vmatprep.subr.mxu0 0.0
    %1901 = vmatpush1.msra.mxu0 0.0
    %1902 = vmatprep.subr.mxu0 0.0
    %1903 = vmatpush1.msra.mxu0 0.0
    %1904 = vmatprep.subr.mxu0 0.0
    %1905 = vmatpush1.msra.mxu0 0.0
    %1906 = vmatprep.subr.mxu0 0.0
    %1907 = vmatpush1.msra.mxu0 0.0
    %1908 = vmatprep.subr.mxu0 0.0
    %1909 = vmatpush1.msra.mxu0 0.0
    %1910 = vmatprep.subr.mxu0 0.0
    %1911 = vmatpush1.msra.mxu0 0.0
    %1912 = vmatprep.subr.mxu0 0.0
    %1913 = vmatpush1.msra.mxu0 0.0
    %1914 = vmatprep.subr.mxu0 0.0
    %1915 = vmatpush1.msra.mxu0 0.0
    %1916 = vmatprep.subr.mxu0 0.0
    %1917 = vmatpush1.msra.mxu0 0.0
    %1918 = vmatprep.mubr.f32.mxu0 0.0
    %1919 = vmatmul.mubr.f32.gmra.mrb[0].mxu0 %v1712
    %v1920 = vpop.f32.mrb[0].mxu0
    %v1921 = vadd.f32 %v573, %v1920
    %v1922 = vpop.f32.mrb[0].mxu0
    %1923 = vdwg.mxu0
    %v1925 = vrot.slane %v1781, 6
    %v1927 = vadd.f32 %v216, %v1925
    %v1928 = vxor.u32 %v1927, 2147483648
    %v1929 = vmul.f32 %v1928, 1.442695
    %v1930 = vpow.pop %v1929
    %v1931 = vadd.f32 %v1930, 1.0
    %v1932 = vrcp.pop %v1931
    %v1933 = vmul.f32 1.0, %v1932
    %v1935 = vrot.slane %v1851, 6
    %v1937 = vadd.f32 %v304, %v1935
    %v1938 = vxor.u32 %v1937, 2147483648
    %v1939 = vmul.f32 %v1938, 1.442695
    %v1940 = vpow.pop %v1939
    %v1941 = vadd.f32 %v1940, 1.0
    %v1942 = vrcp.pop %v1941
    %v1943 = vmul.f32 1.0, %v1942
    %v1945 = vrot.slane %v1921, 6
    %v1947 = vmul.f32 %v1933, %v1945
    %v1948 = vadd.f32 %v392, %v1947
    %v1949 = vtanh.pop %v1948
    %v1950 = vsub.f32 1.0, %v1943
    %v1951 = vmul.f32 %v1950, %v1949
    %v1952 = vrot.slane %v1710, 6
    %v1954 = vmul.f32 %v1943, %v1952
    %v1955 = vadd.f32 %v1951, %v1954
    %1956 = vset.pattern.permute.xlu0 0
    %1957 = vperm.xlu0 %1956, %v90
    %v1958 = vpop.permute.xlu0 %1957
    %v1961 = vrot.slane %v1955, 2
    %v1963 = vmul.f32 %v1958, %v1961
    %v1964 = vsub.f32 1.0, %v90
    %1966 = vset.pattern.permute.xlu0 0
    %1967 = vperm.xlu0 %1966, %v1964
    %v1968 = vpop.permute.xlu0 %1967
    %v1970 = vmul.f32 %v1968, %v1710
    %v1971 = vadd.f32 %v1963, %v1970
    %v1973 = vsel %vm137, %v1971, 0
    %1975 = vmatprep.subr.mxu0 0.0
    %1976 = vmatpush1.msra.mxu0 %v395
    %1977 = vmatprep.subr.mxu0 0.0
    %1978 = vmatpush1.msra.mxu0 %v396
    %1979 = vmatprep.subr.mxu0 0.0
    %1980 = vmatpush1.msra.mxu0 %v397
    %1981 = vmatprep.subr.mxu0 0.0
    %1982 = vmatpush1.msra.mxu0 %v398
    %1983 = vmatprep.subr.mxu0 0.0
    %1984 = vmatpush1.msra.mxu0 0.0
    %1985 = vmatprep.subr.mxu0 0.0
    %1986 = vmatpush1.msra.mxu0 0.0
    %1987 = vmatprep.subr.mxu0 0.0
    %1988 = vmatpush1.msra.mxu0 0.0
    %1989 = vmatprep.subr.mxu0 0.0
    %1990 = vmatpush1.msra.mxu0 0.0
    %1991 = vmatprep.subr.mxu0 0.0
    %1992 = vmatpush1.msra.mxu0 0.0
    %1993 = vmatprep.subr.mxu0 0.0
    %1994 = vmatpush1.msra.mxu0 0.0
    %1995 = vmatprep.subr.mxu0 0.0
    %1996 = vmatpush1.msra.mxu0 0.0
    %1997 = vmatprep.subr.mxu0 0.0
    %1998 = vmatpush1.msra.mxu0 0.0
    %1999 = vmatprep.subr.mxu0 0.0
    %2000 = vmatpush1.msra.mxu0 0.0
    %2001 = vmatprep.subr.mxu0 0.0
    %2002 = vmatpush1.msra.mxu0 0.0
    %2003 = vmatprep.subr.mxu0 0.0
    %2004 = vmatpush1.msra.mxu0 0.0
    %2005 = vmatprep.subr.mxu0 0.0
    %2006 = vmatpush1.msra.mxu0 0.0
    %2007 = vmatprep.subr.mxu0 0.0
    %2008 = vmatpush1.msra.mxu0 0.0
    %2009 = vmatprep.subr.mxu0 0.0
    %2010 = vmatpush1.msra.mxu0 0.0
    %2011 = vmatprep.subr.mxu0 0.0
    %2012 = vmatpush1.msra.mxu0 0.0
    %2013 = vmatprep.subr.mxu0 0.0
    %2014 = vmatpush1.msra.mxu0 0.0
    %2015 = vmatprep.subr.mxu0 0.0
    %2016 = vmatpush1.msra.mxu0 0.0
    %2017 = vmatprep.subr.mxu0 0.0
    %2018 = vmatpush1.msra.mxu0 0.0
    %2019 = vmatprep.subr.mxu0 0.0
    %2020 = vmatpush1.msra.mxu0 0.0
    %2021 = vmatprep.subr.mxu0 0.0
    %2022 = vmatpush1.msra.mxu0 0.0
    %2023 = vmatprep.subr.mxu0 0.0
    %2024 = vmatpush1.msra.mxu0 0.0
    %2025 = vmatprep.subr.mxu0 0.0
    %2026 = vmatpush1.msra.mxu0 0.0
    %2027 = vmatprep.subr.mxu0 0.0
    %2028 = vmatpush1.msra.mxu0 0.0
    %2029 = vmatprep.subr.mxu0 0.0
    %2030 = vmatpush1.msra.mxu0 0.0
    %2031 = vmatprep.subr.mxu0 0.0
    %2032 = vmatpush1.msra.mxu0 0.0
    %2033 = vmatprep.subr.mxu0 0.0
    %2034 = vmatpush1.msra.mxu0 0.0
    %2035 = vmatprep.subr.mxu0 0.0
    %2036 = vmatpush1.msra.mxu0 0.0
    %2037 = vmatprep.subr.mxu0 0.0
    %2038 = vmatpush1.msra.mxu0 0.0
    %2039 = vmatprep.mubr.f32.mxu0 0.0
    %2040 = vmatmul.mubr.f32.gmra.mrb[0].mxu0 %v1973
    %v2041 = vpop.f32.mrb[0].mxu0
    %v2042 = vadd.f32 %v418, %v2041
    %v2043 = vpop.f32.mrb[0].mxu0
    %2044 = vdwg.mxu0
    %2045 = vmatprep.subr.mxu0 0.0
    %2046 = vmatpush1.msra.mxu0 %v400
    %2047 = vmatprep.subr.mxu0 0.0
    %2048 = vmatpush1.msra.mxu0 %v401
    %2049 = vmatprep.subr.mxu0 0.0
    %2050 = vmatpush1.msra.mxu0 %v402
    %2051 = vmatprep.subr.mxu0 0.0
    %2052 = vmatpush1.msra.mxu0 %v403
    %2053 = vmatprep.subr.mxu0 0.0
    %2054 = vmatpush1.msra.mxu0 0.0
    %2055 = vmatprep.subr.mxu0 0.0
    %2056 = vmatpush1.msra.mxu0 0.0
    %2057 = vmatprep.subr.mxu0 0.0
    %2058 = vmatpush1.msra.mxu0 0.0
    %2059 = vmatprep.subr.mxu0 0.0
    %2060 = vmatpush1.msra.mxu0 0.0
    %2061 = vmatprep.subr.mxu0 0.0
    %2062 = vmatpush1.msra.mxu0 0.0
    %2063 = vmatprep.subr.mxu0 0.0
    %2064 = vmatpush1.msra.mxu0 0.0
    %2065 = vmatprep.subr.mxu0 0.0
    %2066 = vmatpush1.msra.mxu0 0.0
    %2067 = vmatprep.subr.mxu0 0.0
    %2068 = vmatpush1.msra.mxu0 0.0
    %2069 = vmatprep.subr.mxu0 0.0
    %2070 = vmatpush1.msra.mxu0 0.0
    %2071 = vmatprep.subr.mxu0 0.0
    %2072 = vmatpush1.msra.mxu0 0.0
    %2073 = vmatprep.subr.mxu0 0.0
    %2074 = vmatpush1.msra.mxu0 0.0
    %2075 = vmatprep.subr.mxu0 0.0
    %2076 = vmatpush1.msra.mxu0 0.0
    %2077 = vmatprep.subr.mxu0 0.0
    %2078 = vmatpush1.msra.mxu0 0.0
    %2079 = vmatprep.subr.mxu0 0.0
    %2080 = vmatpush1.msra.mxu0 0.0
    %2081 = vmatprep.subr.mxu0 0.0
    %2082 = vmatpush1.msra.mxu0 0.0
    %2083 = vmatprep.subr.mxu0 0.0
    %2084 = vmatpush1.msra.mxu0 0.0
    %2085 = vmatprep.subr.mxu0 0.0
    %2086 = vmatpush1.msra.mxu0 0.0
    %2087 = vmatprep.subr.mxu0 0.0
    %2088 = vmatpush1.msra.mxu0 0.0
    %2089 = vmatprep.subr.mxu0 0.0
    %2090 = vmatpush1.msra.mxu0 0.0
    %2091 = vmatprep.subr.mxu0 0.0
    %2092 = vmatpush1.msra.mxu0 0.0
    %2093 = vmatprep.subr.mxu0 0.0
    %2094 = vmatpush1.msra.mxu0 0.0
    %2095 = vmatprep.subr.mxu0 0.0
    %2096 = vmatpush1.msra.mxu0 0.0
    %2097 = vmatprep.subr.mxu0 0.0
    %2098 = vmatpush1.msra.mxu0 0.0
    %2099 = vmatprep.subr.mxu0 0.0
    %2100 = vmatpush1.msra.mxu0 0.0
    %2101 = vmatprep.subr.mxu0 0.0
    %2102 = vmatpush1.msra.mxu0 0.0
    %2103 = vmatprep.subr.mxu0 0.0
    %2104 = vmatpush1.msra.mxu0 0.0
    %2105 = vmatprep.subr.mxu0 0.0
    %2106 = vmatpush1.msra.mxu0 0.0
    %2107 = vmatprep.subr.mxu0 0.0
    %2108 = vmatpush1.msra.mxu0 0.0
    %2109 = vmatprep.mubr.f32.mxu0 0.0
    %2110 = vmatmul.mubr.f32.gmra.mrb[0].mxu0 %v1973
    %v2111 = vpop.f32.mrb[0].mxu0
    %v2112 = vadd.f32 %v497, %v2111
    %v2113 = vpop.f32.mrb[0].mxu0
    %2114 = vdwg.mxu0
    %2115 = vmatprep.subr.mxu0 0.0
    %2116 = vmatpush1.msra.mxu0 %v405
    %2117 = vmatprep.subr.mxu0 0.0
    %2118 = vmatpush1.msra.mxu0 %v406
    %2119 = vmatprep.subr.mxu0 0.0
    %2120 = vmatpush1.msra.mxu0 %v407
    %2121 = vmatprep.subr.mxu0 0.0
    %2122 = vmatpush1.msra.mxu0 %v408
    %2123 = vmatprep.subr.mxu0 0.0
    %2124 = vmatpush1.msra.mxu0 0.0
    %2125 = vmatprep.subr.mxu0 0.0
    %2126 = vmatpush1.msra.mxu0 0.0
    %2127 = vmatprep.subr.mxu0 0.0
    %2128 = vmatpush1.msra.mxu0 0.0
    %2129 = vmatprep.subr.mxu0 0.0
    %2130 = vmatpush1.msra.mxu0 0.0
    %2131 = vmatprep.subr.mxu0 0.0
    %2132 = vmatpush1.msra.mxu0 0.0
    %2133 = vmatprep.subr.mxu0 0.0
    %2134 = vmatpush1.msra.mxu0 0.0
    %2135 = vmatprep.subr.mxu0 0.0
    %2136 = vmatpush1.msra.mxu0 0.0
    %2137 = vmatprep.subr.mxu0 0.0
    %2138 = vmatpush1.msra.mxu0 0.0
    %2139 = vmatprep.subr.mxu0 0.0
    %2140 = vmatpush1.msra.mxu0 0.0
    %2141 = vmatprep.subr.mxu0 0.0
    %2142 = vmatpush1.msra.mxu0 0.0
    %2143 = vmatprep.subr.mxu0 0.0
    %2144 = vmatpush1.msra.mxu0 0.0
    %2145 = vmatprep.subr.mxu0 0.0
    %2146 = vmatpush1.msra.mxu0 0.0
    %2147 = vmatprep.subr.mxu0 0.0
    %2148 = vmatpush1.msra.mxu0 0.0
    %2149 = vmatprep.subr.mxu0 0.0
    %2150 = vmatpush1.msra.mxu0 0.0
    %2151 = vmatprep.subr.mxu0 0.0
    %2152 = vmatpush1.msra.mxu0 0.0
    %2153 = vmatprep.subr.mxu0 0.0
    %2154 = vmatpush1.msra.mxu0 0.0
    %2155 = vmatprep.subr.mxu0 0.0
    %2156 = vmatpush1.msra.mxu0 0.0
    %2157 = vmatprep.subr.mxu0 0.0
    %2158 = vmatpush1.msra.mxu0 0.0
    %2159 = vmatprep.subr.mxu0 0.0
    %2160 = vmatpush1.msra.mxu0 0.0
    %2161 = vmatprep.subr.mxu0 0.0
    %2162 = vmatpush1.msra.mxu0 0.0
    %2163 = vmatprep.subr.mxu0 0.0
    %2164 = vmatpush1.msra.mxu0 0.0
    %2165 = vmatprep.subr.mxu0 0.0
    %2166 = vmatpush1.msra.mxu0 0.0
    %2167 = vmatprep.subr.mxu0 0.0
    %2168 = vmatpush1.msra.mxu0 0.0
    %2169 = vmatprep.subr.mxu0 0.0
    %2170 = vmatpush1.msra.mxu0 0.0
    %2171 = vmatprep.subr.mxu0 0.0
    %2172 = vmatpush1.msra.mxu0 0.0
    %2173 = vmatprep.subr.mxu0 0.0
    %2174 = vmatpush1.msra.mxu0 0.0
    %2175 = vmatprep.subr.mxu0 0.0
    %2176 = vmatpush1.msra.mxu0 0.0
    %2177 = vmatprep.subr.mxu0 0.0
    %2178 = vmatpush1.msra.mxu0 0.0
    %2179 = vmatprep.mubr.f32.mxu0 0.0
    %2180 = vmatmul.mubr.f32.gmra.mrb[0].mxu0 %v1973
    %v2181 = vpop.f32.mrb[0].mxu0
    %v2182 = vadd.f32 %v573, %v2181
    %v2183 = vpop.f32.mrb[0].mxu0
    %2184 = vdwg.mxu0
    %v2186 = vrot.slane %v2042, 4
    %v2188 = vadd.f32 %v216, %v2186
    %v2189 = vxor.u32 %v2188, 2147483648
    %v2190 = vmul.f32 %v2189, 1.442695
    %v2191 = vpow.pop %v2190
    %v2192 = vadd.f32 %v2191, 1.0
    %v2193 = vrcp.pop %v2192
    %v2194 = vmul.f32 1.0, %v2193
    %v2196 = vrot.slane %v2112, 4
    %v2198 = vadd.f32 %v304, %v2196
    %v2199 = vxor.u32 %v2198, 2147483648
    %v2200 = vmul.f32 %v2199, 1.442695
    %v2201 = vpow.pop %v2200
    %v2202 = vadd.f32 %v2201, 1.0
    %v2203 = vrcp.pop %v2202
    %v2204 = vmul.f32 1.0, %v2203
    %v2206 = vrot.slane %v2182, 4
    %v2208 = vmul.f32 %v2194, %v2206
    %v2209 = vadd.f32 %v392, %v2208
    %v2210 = vtanh.pop %v2209
    %v2211 = vsub.f32 1.0, %v2204
    %v2212 = vmul.f32 %v2211, %v2210
    %v2213 = vrot.slane %v1971, 4
    %v2215 = vmul.f32 %v2204, %v2213
    %v2216 = vadd.f32 %v2212, %v2215
    %2217 = vset.pattern.permute.xlu0 0
    %2218 = vperm.xlu0 %2217, %v93
    %v2219 = vpop.permute.xlu0 %2218
    %v2222 = vrot.slane %v2216, 4
    %v2224 = vmul.f32 %v2219, %v2222
    %v2225 = vsub.f32 1.0, %v93
    %2227 = vset.pattern.permute.xlu0 0
    %2228 = vperm.xlu0 %2227, %v2225
    %v2229 = vpop.permute.xlu0 %2228
    %v2231 = vmul.f32 %v2229, %v1971
    %v2232 = vadd.f32 %v2224, %v2231
    %v2234 = vsel %vm137, %v2232, 0
    %2236 = vmatprep.subr.mxu0 0.0
    %2237 = vmatpush1.msra.mxu0 %v395
    %2238 = vmatprep.subr.mxu0 0.0
    %2239 = vmatpush1.msra.mxu0 %v396
    %2240 = vmatprep.subr.mxu0 0.0
    %2241 = vmatpush1.msra.mxu0 %v397
    %2242 = vmatprep.subr.mxu0 0.0
    %2243 = vmatpush1.msra.mxu0 %v398
    %2244 = vmatprep.subr.mxu0 0.0
    %2245 = vmatpush1.msra.mxu0 0.0
    %2246 = vmatprep.subr.mxu0 0.0
    %2247 = vmatpush1.msra.mxu0 0.0
    %2248 = vmatprep.subr.mxu0 0.0
    %2249 = vmatpush1.msra.mxu0 0.0
    %2250 = vmatprep.subr.mxu0 0.0
    %2251 = vmatpush1.msra.mxu0 0.0
    %2252 = vmatprep.subr.mxu0 0.0
    %2253 = vmatpush1.msra.mxu0 0.0
    %2254 = vmatprep.subr.mxu0 0.0
    %2255 = vmatpush1.msra.mxu0 0.0
    %2256 = vmatprep.subr.mxu0 0.0
    %2257 = vmatpush1.msra.mxu0 0.0
    %2258 = vmatprep.subr.mxu0 0.0
    %2259 = vmatpush1.msra.mxu0 0.0
    %2260 = vmatprep.subr.mxu0 0.0
    %2261 = vmatpush1.msra.mxu0 0.0
    %2262 = vmatprep.subr.mxu0 0.0
    %2263 = vmatpush1.msra.mxu0 0.0
    %2264 = vmatprep.subr.mxu0 0.0
    %2265 = vmatpush1.msra.mxu0 0.0
    %2266 = vmatprep.subr.mxu0 0.0
    %2267 = vmatpush1.msra.mxu0 0.0
    %2268 = vmatprep.subr.mxu0 0.0
    %2269 = vmatpush1.msra.mxu0 0.0
    %2270 = vmatprep.subr.mxu0 0.0
    %2271 = vmatpush1.msra.mxu0 0.0
    %2272 = vmatprep.subr.mxu0 0.0
    %2273 = vmatpush1.msra.mxu0 0.0
    %2274 = vmatprep.subr.mxu0 0.0
    %2275 = vmatpush1.msra.mxu0 0.0
    %2276 = vmatprep.subr.mxu0 0.0
    %2277 = vmatpush1.msra.mxu0 0.0
    %2278 = vmatprep.subr.mxu0 0.0
    %2279 = vmatpush1.msra.mxu0 0.0
    %2280 = vmatprep.subr.mxu0 0.0
    %2281 = vmatpush1.msra.mxu0 0.0
    %2282 = vmatprep.subr.mxu0 0.0
    %2283 = vmatpush1.msra.mxu0 0.0
    %2284 = vmatprep.subr.mxu0 0.0
    %2285 = vmatpush1.msra.mxu0 0.0
    %2286 = vmatprep.subr.mxu0 0.0
    %2287 = vmatpush1.msra.mxu0 0.0
    %2288 = vmatprep.subr.mxu0 0.0
    %2289 = vmatpush1.msra.mxu0 0.0
    %2290 = vmatprep.subr.mxu0 0.0
    %2291 = vmatpush1.msra.mxu0 0.0
    %2292 = vmatprep.subr.mxu0 0.0
    %2293 = vmatpush1.msra.mxu0 0.0
    %2294 = vmatprep.subr.mxu0 0.0
    %2295 = vmatpush1.msra.mxu0 0.0
    %2296 = vmatprep.subr.mxu0 0.0
    %2297 = vmatpush1.msra.mxu0 0.0
    %2298 = vmatprep.subr.mxu0 0.0
    %2299 = vmatpush1.msra.mxu0 0.0
    %2300 = vmatprep.mubr.f32.mxu0 0.0
    %2301 = vmatmul.mubr.f32.gmra.mrb[0].mxu0 %v2234
    %v2302 = vpop.f32.mrb[0].mxu0
    %v2303 = vadd.f32 %v418, %v2302
    %v2304 = vpop.f32.mrb[0].mxu0
    %2305 = vdwg.mxu0
    %2306 = vmatprep.subr.mxu0 0.0
    %2307 = vmatpush1.msra.mxu0 %v400
    %2308 = vmatprep.subr.mxu0 0.0
    %2309 = vmatpush1.msra.mxu0 %v401
    %2310 = vmatprep.subr.mxu0 0.0
    %2311 = vmatpush1.msra.mxu0 %v402
    %2312 = vmatprep.subr.mxu0 0.0
    %2313 = vmatpush1.msra.mxu0 %v403
    %2314 = vmatprep.subr.mxu0 0.0
    %2315 = vmatpush1.msra.mxu0 0.0
    %2316 = vmatprep.subr.mxu0 0.0
    %2317 = vmatpush1.msra.mxu0 0.0
    %2318 = vmatprep.subr.mxu0 0.0
    %2319 = vmatpush1.msra.mxu0 0.0
    %2320 = vmatprep.subr.mxu0 0.0
    %2321 = vmatpush1.msra.mxu0 0.0
    %2322 = vmatprep.subr.mxu0 0.0
    %2323 = vmatpush1.msra.mxu0 0.0
    %2324 = vmatprep.subr.mxu0 0.0
    %2325 = vmatpush1.msra.mxu0 0.0
    %2326 = vmatprep.subr.mxu0 0.0
    %2327 = vmatpush1.msra.mxu0 0.0
    %2328 = vmatprep.subr.mxu0 0.0
    %2329 = vmatpush1.msra.mxu0 0.0
    %2330 = vmatprep.subr.mxu0 0.0
    %2331 = vmatpush1.msra.mxu0 0.0
    %2332 = vmatprep.subr.mxu0 0.0
    %2333 = vmatpush1.msra.mxu0 0.0
    %2334 = vmatprep.subr.mxu0 0.0
    %2335 = vmatpush1.msra.mxu0 0.0
    %2336 = vmatprep.subr.mxu0 0.0
    %2337 = vmatpush1.msra.mxu0 0.0
    %2338 = vmatprep.subr.mxu0 0.0
    %2339 = vmatpush1.msra.mxu0 0.0
    %2340 = vmatprep.subr.mxu0 0.0
    %2341 = vmatpush1.msra.mxu0 0.0
    %2342 = vmatprep.subr.mxu0 0.0
    %2343 = vmatpush1.msra.mxu0 0.0
    %2344 = vmatprep.subr.mxu0 0.0
    %2345 = vmatpush1.msra.mxu0 0.0
    %2346 = vmatprep.subr.mxu0 0.0
    %2347 = vmatpush1.msra.mxu0 0.0
    %2348 = vmatprep.subr.mxu0 0.0
    %2349 = vmatpush1.msra.mxu0 0.0
    %2350 = vmatprep.subr.mxu0 0.0
    %2351 = vmatpush1.msra.mxu0 0.0
    %2352 = vmatprep.subr.mxu0 0.0
    %2353 = vmatpush1.msra.mxu0 0.0
    %2354 = vmatprep.subr.mxu0 0.0
    %2355 = vmatpush1.msra.mxu0 0.0
    %2356 = vmatprep.subr.mxu0 0.0
    %2357 = vmatpush1.msra.mxu0 0.0
    %2358 = vmatprep.subr.mxu0 0.0
    %2359 = vmatpush1.msra.mxu0 0.0
    %2360 = vmatprep.subr.mxu0 0.0
    %2361 = vmatpush1.msra.mxu0 0.0
    %2362 = vmatprep.subr.mxu0 0.0
    %2363 = vmatpush1.msra.mxu0 0.0
    %2364 = vmatprep.subr.mxu0 0.0
    %2365 = vmatpush1.msra.mxu0 0.0
    %2366 = vmatprep.subr.mxu0 0.0
    %2367 = vmatpush1.msra.mxu0 0.0
    %2368 = vmatprep.subr.mxu0 0.0
    %2369 = vmatpush1.msra.mxu0 0.0
    %2370 = vmatprep.mubr.f32.mxu0 0.0
    %2371 = vmatmul.mubr.f32.gmra.mrb[0].mxu0 %v2234
    %v2372 = vpop.f32.mrb[0].mxu0
    %v2373 = vadd.f32 %v497, %v2372
    %v2374 = vpop.f32.mrb[0].mxu0
    %2375 = vdwg.mxu0
    %2376 = vmatprep.subr.mxu0 0.0
    %2377 = vmatpush1.msra.mxu0 %v405
    %2378 = vmatprep.subr.mxu0 0.0
    %2379 = vmatpush1.msra.mxu0 %v406
    %2380 = vmatprep.subr.mxu0 0.0
    %2381 = vmatpush1.msra.mxu0 %v407
    %2382 = vmatprep.subr.mxu0 0.0
    %2383 = vmatpush1.msra.mxu0 %v408
    %2384 = vmatprep.subr.mxu0 0.0
    %2385 = vmatpush1.msra.mxu0 0.0
    %2386 = vmatprep.subr.mxu0 0.0
    %2387 = vmatpush1.msra.mxu0 0.0
    %2388 = vmatprep.subr.mxu0 0.0
    %2389 = vmatpush1.msra.mxu0 0.0
    %2390 = vmatprep.subr.mxu0 0.0
    %2391 = vmatpush1.msra.mxu0 0.0
    %2392 = vmatprep.subr.mxu0 0.0
    %2393 = vmatpush1.msra.mxu0 0.0
    %2394 = vmatprep.subr.mxu0 0.0
    %2395 = vmatpush1.msra.mxu0 0.0
    %2396 = vmatprep.subr.mxu0 0.0
    %2397 = vmatpush1.msra.mxu0 0.0
    %2398 = vmatprep.subr.mxu0 0.0
    %2399 = vmatpush1.msra.mxu0 0.0
    %2400 = vmatprep.subr.mxu0 0.0
    %2401 = vmatpush1.msra.mxu0 0.0
    %2402 = vmatprep.subr.mxu0 0.0
    %2403 = vmatpush1.msra.mxu0 0.0
    %2404 = vmatprep.subr.mxu0 0.0
    %2405 = vmatpush1.msra.mxu0 0.0
    %2406 = vmatprep.subr.mxu0 0.0
    %2407 = vmatpush1.msra.mxu0 0.0
    %2408 = vmatprep.subr.mxu0 0.0
    %2409 = vmatpush1.msra.mxu0 0.0
    %2410 = vmatprep.subr.mxu0 0.0
    %2411 = vmatpush1.msra.mxu0 0.0
    %2412 = vmatprep.subr.mxu0 0.0
    %2413 = vmatpush1.msra.mxu0 0.0
    %2414 = vmatprep.subr.mxu0 0.0
    %2415 = vmatpush1.msra.mxu0 0.0
    %2416 = vmatprep.subr.mxu0 0.0
    %2417 = vmatpush1.msra.mxu0 0.0
    %2418 = vmatprep.subr.mxu0 0.0
    %2419 = vmatpush1.msra.mxu0 0.0
    %2420 = vmatprep.subr.mxu0 0.0
    %2421 = vmatpush1.msra.mxu0 0.0
    %2422 = vmatprep.subr.mxu0 0.0
    %2423 = vmatpush1.msra.mxu0 0.0
    %2424 = vmatprep.subr.mxu0 0.0
    %2425 = vmatpush1.msra.mxu0 0.0
    %2426 = vmatprep.subr.mxu0 0.0
    %2427 = vmatpush1.msra.mxu0 0.0
    %2428 = vmatprep.subr.mxu0 0.0
    %2429 = vmatpush1.msra.mxu0 0.0
    %2430 = vmatprep.subr.mxu0 0.0
    %2431 = vmatpush1.msra.mxu0 0.0
    %2432 = vmatprep.subr.mxu0 0.0
    %2433 = vmatpush1.msra.mxu0 0.0
    %2434 = vmatprep.subr.mxu0 0.0
    %2435 = vmatpush1.msra.mxu0 0.0
    %2436 = vmatprep.subr.mxu0 0.0
    %2437 = vmatpush1.msra.mxu0 0.0
    %2438 = vmatprep.subr.mxu0 0.0
    %2439 = vmatpush1.msra.mxu0 0.0
    %2440 = vmatprep.mubr.f32.mxu0 0.0
    %2441 = vmatmul.mubr.f32.gmra.mrb[0].mxu0 %v2234
    %v2442 = vpop.f32.mrb[0].mxu0
    %v2443 = vadd.f32 %v573, %v2442
    %v2444 = vpop.f32.mrb[0].mxu0
    %2445 = vdwg.mxu0
    %v2447 = vrot.slane %v2303, 2
    %v2449 = vadd.f32 %v216, %v2447
    %v2450 = vxor.u32 %v2449, 2147483648
    %v2451 = vmul.f32 %v2450, 1.442695
    %v2452 = vpow.pop %v2451
    %v2453 = vadd.f32 %v2452, 1.0
    %v2454 = vrcp.pop %v2453
    %v2455 = vmul.f32 1.0, %v2454
    %v2457 = vrot.slane %v2373, 2
    %v2459 = vadd.f32 %v304, %v2457
    %v2460 = vxor.u32 %v2459, 2147483648
    %v2461 = vmul.f32 %v2460, 1.442695
    %v2462 = vpow.pop %v2461
    %v2463 = vadd.f32 %v2462, 1.0
    %v2464 = vrcp.pop %v2463
    %v2465 = vmul.f32 1.0, %v2464
    %v2467 = vrot.slane %v2443, 2
    %v2469 = vmul.f32 %v2455, %v2467
    %v2470 = vadd.f32 %v392, %v2469
    %v2471 = vtanh.pop %v2470
    %v2472 = vsub.f32 1.0, %v2465
    %v2473 = vmul.f32 %v2472, %v2471
    %v2474 = vrot.slane %v2232, 2
    %v2476 = vmul.f32 %v2465, %v2474
    %v2477 = vadd.f32 %v2473, %v2476
    %2478 = vset.pattern.permute.xlu0 0
    %2479 = vperm.xlu0 %2478, %v96
    %v2480 = vpop.permute.xlu0 %2479
    %v2483 = vrot.slane %v2477, 6
    %v2485 = vmul.f32 %v2480, %v2483
    %v2486 = vsub.f32 1.0, %v96
    %2488 = vset.pattern.permute.xlu0 0
    %2489 = vperm.xlu0 %2488, %v2486
    %v2490 = vpop.permute.xlu0 %2489
    %v2492 = vmul.f32 %v2490, %v2232
    %v2493 = vadd.f32 %v2485, %v2492
    %v2494 = vrot.slane %v940, 6
    %v2496 = vrot.slane %v1201, 4
    %v2498 = vrot.slane %v1462, 2
    %v2500 = vrot.slane %v1971, 6
    %v2502 = vrot.slane %v2232, 4
    %v2505 = vrot.slane %v2493, 2
    %v2507 = vsel %vm115, %v679, %v2494
    %v2508 = vsel %vm117, %v2507, %v2496
    %v2509 = vsel %vm119, %v2508, %v2498
    %v2510 = vsel %vm115, %v1710, %v2500
    %v2511 = vsel %vm117, %v2510, %v2502
    %v2512 = vsel %vm119, %v2511, %v2505
    %s2513 = scalar_lea.vmem [#allocation5], 96
    %v2514 = vld [vmem:[%s2513] sm:$0xff]
    %v2515 = vld [vmem:[%s2513 + $0x8] sm:$0xff]
    %v2516 = vld [vmem:[%s2513 + $0x10] sm:$0xff]
    %v2517 = vld [vmem:[%s2513 + $0x18] sm:$0xff]
    %s2518 = scalar_lea.vmem %s4, 3
    %v2519 = vld [vmem:[%s2518] sm:$0x1]
    %v2521 = vlaneseq
    %v2522 = vshrl.u32 %v2521, 7
    %v2523 = vsub.s32 0, %v2522
    %v2524 = vrot.slane %v2519, %v2523
    %v2527 = vsel %vm137, %v2509, 0
    %v2530 = vsel %vm137, %v2512, 0
    %2532 = vmatprep.subr.mxu0 0.0
    %2533 = vmatpush1.msra.mxu0 %v2514
    %2534 = vmatprep.subr.mxu0 0.0
    %2535 = vmatpush1.msra.mxu0 %v2515
    %2536 = vmatprep.subr.mxu0 0.0
    %2537 = vmatpush1.msra.mxu0 %v2516
    %2538 = vmatprep.subr.mxu0 0.0
    %2539 = vmatpush1.msra.mxu0 %v2517
    %2540 = vmatprep.subr.mxu0 0.0
    %2541 = vmatpush1.msra.mxu0 0.0
    %2542 = vmatprep.subr.mxu0 0.0
    %2543 = vmatpush1.msra.mxu0 0.0
    %2544 = vmatprep.subr.mxu0 0.0
    %2545 = vmatpush1.msra.mxu0 0.0
    %2546 = vmatprep.subr.mxu0 0.0
    %2547 = vmatpush1.msra.mxu0 0.0
    %2548 = vmatprep.subr.mxu0 0.0
    %2549 = vmatpush1.msra.mxu0 0.0
    %2550 = vmatprep.subr.mxu0 0.0
    %2551 = vmatpush1.msra.mxu0 0.0
    %2552 = vmatprep.subr.mxu0 0.0
    %2553 = vmatpush1.msra.mxu0 0.0
    %2554 = vmatprep.subr.mxu0 0.0
    %2555 = vmatpush1.msra.mxu0 0.0
    %2556 = vmatprep.subr.mxu0 0.0
    %2557 = vmatpush1.msra.mxu0 0.0
    %2558 = vmatprep.subr.mxu0 0.0
    %2559 = vmatpush1.msra.mxu0 0.0
    %2560 = vmatprep.subr.mxu0 0.0
    %2561 = vmatpush1.msra.mxu0 0.0
    %2562 = vmatprep.subr.mxu0 0.0
    %2563 = vmatpush1.msra.mxu0 0.0
    %2564 = vmatprep.subr.mxu0 0.0
    %2565 = vmatpush1.msra.mxu0 0.0
    %2566 = vmatprep.subr.mxu0 0.0
    %2567 = vmatpush1.msra.mxu0 0.0
    %2568 = vmatprep.subr.mxu0 0.0
    %2569 = vmatpush1.msra.mxu0 0.0
    %2570 = vmatprep.subr.mxu0 0.0
    %2571 = vmatpush1.msra.mxu0 0.0
    %2572 = vmatprep.subr.mxu0 0.0
    %2573 = vmatpush1.msra.mxu0 0.0
    %2574 = vmatprep.subr.mxu0 0.0
    %2575 = vmatpush1.msra.mxu0 0.0
    %2576 = vmatprep.subr.mxu0 0.0
    %2577 = vmatpush1.msra.mxu0 0.0
    %2578 = vmatprep.subr.mxu0 0.0
    %2579 = vmatpush1.msra.mxu0 0.0
    %2580 = vmatprep.subr.mxu0 0.0
    %2581 = vmatpush1.msra.mxu0 0.0
    %2582 = vmatprep.subr.mxu0 0.0
    %2583 = vmatpush1.msra.mxu0 0.0
    %2584 = vmatprep.subr.mxu0 0.0
    %2585 = vmatpush1.msra.mxu0 0.0
    %2586 = vmatprep.subr.mxu0 0.0
    %2587 = vmatpush1.msra.mxu0 0.0
    %2588 = vmatprep.subr.mxu0 0.0
    %2589 = vmatpush1.msra.mxu0 0.0
    %2590 = vmatprep.subr.mxu0 0.0
    %2591 = vmatpush1.msra.mxu0 0.0
    %2592 = vmatprep.subr.mxu0 0.0
    %2593 = vmatpush1.msra.mxu0 0.0
    %2594 = vmatprep.subr.mxu0 0.0
    %2595 = vmatpush1.msra.mxu0 0.0
    %2596 = vmatprep.mubr.f32.mxu0 0.0
    %2597 = vmatmul.mubr.f32.gmra.mrb[0].mxu0 %v2527
    %v2598 = vpop.f32.mrb[0].mxu0
    %v2599 = vadd.f32 %v2524, %v2598
    %v2600 = vpop.f32.mrb[0].mxu0
    %2601 = vmatprep.mubr.f32.mxu0 0.0
    %2602 = vmatmul.mubr.f32.gmra.mrb[0].mxu0 %v2530
    %v2603 = vpop.f32.mrb[0].mxu0
    %v2604 = vadd.f32 %v2524, %v2603
    %v2605 = vpop.f32.mrb[0].mxu0
    %2606 = vdwg.mxu0
    %s2607 = scalar_lea.vmem [#allocation5], 128
    %v2608 = vld [vmem:[%s2607] sm:$0xff]
    %v2609 = vld [vmem:[%s2607 + $0x8] sm:$0xff]
    %v2610 = vld [vmem:[%s2607 + $0x10] sm:$0xff]
    %v2611 = vld [vmem:[%s2607 + $0x18] sm:$0xff]
    %s2612 = scalar_lea.vmem %s4, 4
    %v2613 = vld [vmem:[%s2612] sm:$0x1]
    %v2615 = vlaneseq
    %v2616 = vshrl.u32 %v2615, 7
    %v2617 = vsub.s32 0, %v2616
    %v2618 = vrot.slane %v2613, %v2617
    %2620 = vmatprep.subr.mxu0 0.0
    %2621 = vmatpush1.msra.mxu0 %v2608
    %2622 = vmatprep.subr.mxu0 0.0
    %2623 = vmatpush1.msra.mxu0 %v2609
    %2624 = vmatprep.subr.mxu0 0.0
    %2625 = vmatpush1.msra.mxu0 %v2610
    %2626 = vmatprep.subr.mxu0 0.0
    %2627 = vmatpush1.msra.mxu0 %v2611
    %2628 = vmatprep.subr.mxu0 0.0
    %2629 = vmatpush1.msra.mxu0 0.0
    %2630 = vmatprep.subr.mxu0 0.0
    %2631 = vmatpush1.msra.mxu0 0.0
    %2632 = vmatprep.subr.mxu0 0.0
    %2633 = vmatpush1.msra.mxu0 0.0
    %2634 = vmatprep.subr.mxu0 0.0
    %2635 = vmatpush1.msra.mxu0 0.0
    %2636 = vmatprep.subr.mxu0 0.0
    %2637 = vmatpush1.msra.mxu0 0.0
    %2638 = vmatprep.subr.mxu0 0.0
    %2639 = vmatpush1.msra.mxu0 0.0
    %2640 = vmatprep.subr.mxu0 0.0
    %2641 = vmatpush1.msra.mxu0 0.0
    %2642 = vmatprep.subr.mxu0 0.0
    %2643 = vmatpush1.msra.mxu0 0.0
    %2644 = vmatprep.subr.mxu0 0.0
    %2645 = vmatpush1.msra.mxu0 0.0
    %2646 = vmatprep.subr.mxu0 0.0
    %2647 = vmatpush1.msra.mxu0 0.0
    %2648 = vmatprep.subr.mxu0 0.0
    %2649 = vmatpush1.msra.mxu0 0.0
    %2650 = vmatprep.subr.mxu0 0.0
    %2651 = vmatpush1.msra.mxu0 0.0
    %2652 = vmatprep.subr.mxu0 0.0
    %2653 = vmatpush1.msra.mxu0 0.0
    %2654 = vmatprep.subr.mxu0 0.0
    %2655 = vmatpush1.msra.mxu0 0.0
    %2656 = vmatprep.subr.mxu0 0.0
    %2657 = vmatpush1.msra.mxu0 0.0
    %2658 = vmatprep.subr.mxu0 0.0
    %2659 = vmatpush1.msra.mxu0 0.0
    %2660 = vmatprep.subr.mxu0 0.0
    %2661 = vmatpush1.msra.mxu0 0.0
    %2662 = vmatprep.subr.mxu0 0.0
    %2663 = vmatpush1.msra.mxu0 0.0
    %2664 = vmatprep.subr.mxu0 0.0
    %2665 = vmatpush1.msra.mxu0 0.0
    %2666 = vmatprep.subr.mxu0 0.0
    %2667 = vmatpush1.msra.mxu0 0.0
    %2668 = vmatprep.subr.mxu0 0.0
    %2669 = vmatpush1.msra.mxu0 0.0
    %2670 = vmatprep.subr.mxu0 0.0
    %2671 = vmatpush1.msra.mxu0 0.0
    %2672 = vmatprep.subr.mxu0 0.0
    %2673 = vmatpush1.msra.mxu0 0.0
    %2674 = vmatprep.subr.mxu0 0.0
    %2675 = vmatpush1.msra.mxu0 0.0
    %2676 = vmatprep.subr.mxu0 0.0
    %2677 = vmatpush1.msra.mxu0 0.0
    %2678 = vmatprep.subr.mxu0 0.0
    %2679 = vmatpush1.msra.mxu0 0.0
    %2680 = vmatprep.subr.mxu0 0.0
    %2681 = vmatpush1.msra.mxu0 0.0
    %2682 = vmatprep.subr.mxu0 0.0
    %2683 = vmatpush1.msra.mxu0 0.0
    %2684 = vmatprep.mubr.f32.mxu0 0.0
    %2685 = vmatmul.mubr.f32.gmra.mrb[0].mxu0 %v2527
    %v2686 = vpop.f32.mrb[0].mxu0
    %v2687 = vadd.f32 %v2618, %v2686
    %v2688 = vpop.f32.mrb[0].mxu0
    %2689 = vmatprep.mubr.f32.mxu0 0.0
    %2690 = vmatmul.mubr.f32.gmra.mrb[0].mxu0 %v2530
    %v2691 = vpop.f32.mrb[0].mxu0
    %v2692 = vadd.f32 %v2618, %v2691
    %v2693 = vpop.f32.mrb[0].mxu0
    %2694 = vdwg.mxu0
    %s2695 = scalar_lea.vmem [#allocation5], 160
    %v2696 = vld [vmem:[%s2695] sm:$0xff]
    %v2697 = vld [vmem:[%s2695 + $0x8] sm:$0xff]
    %v2698 = vld [vmem:[%s2695 + $0x10] sm:$0xff]
    %v2699 = vld [vmem:[%s2695 + $0x18] sm:$0xff]
    %s2700 = scalar_lea.vmem %s4, 5
    %v2701 = vld [vmem:[%s2700] sm:$0x1]
    %v2703 = vlaneseq
    %v2704 = vshrl.u32 %v2703, 7
    %v2705 = vsub.s32 0, %v2704
    %v2706 = vrot.slane %v2701, %v2705
    %2708 = vmatprep.subr.mxu0 0.0
    %2709 = vmatpush1.msra.mxu0 %v2696
    %2710 = vmatprep.subr.mxu0 0.0
    %2711 = vmatpush1.msra.mxu0 %v2697
    %2712 = vmatprep.subr.mxu0 0.0
    %2713 = vmatpush1.msra.mxu0 %v2698
    %2714 = vmatprep.subr.mxu0 0.0
    %2715 = vmatpush1.msra.mxu0 %v2699
    %2716 = vmatprep.subr.mxu0 0.0
    %2717 = vmatpush1.msra.mxu0 0.0
    %2718 = vmatprep.subr.mxu0 0.0
    %2719 = vmatpush1.msra.mxu0 0.0
    %2720 = vmatprep.subr.mxu0 0.0
    %2721 = vmatpush1.msra.mxu0 0.0
    %2722 = vmatprep.subr.mxu0 0.0
    %2723 = vmatpush1.msra.mxu0 0.0
    %2724 = vmatprep.subr.mxu0 0.0
    %2725 = vmatpush1.msra.mxu0 0.0
    %2726 = vmatprep.subr.mxu0 0.0
    %2727 = vmatpush1.msra.mxu0 0.0
    %2728 = vmatprep.subr.mxu0 0.0
    %2729 = vmatpush1.msra.mxu0 0.0
    %2730 = vmatprep.subr.mxu0 0.0
    %2731 = vmatpush1.msra.mxu0 0.0
    %2732 = vmatprep.subr.mxu0 0.0
    %2733 = vmatpush1.msra.mxu0 0.0
    %2734 = vmatprep.subr.mxu0 0.0
    %2735 = vmatpush1.msra.mxu0 0.0
    %2736 = vmatprep.subr.mxu0 0.0
    %2737 = vmatpush1.msra.mxu0 0.0
    %2738 = vmatprep.subr.mxu0 0.0
    %2739 = vmatpush1.msra.mxu0 0.0
    %2740 = vmatprep.subr.mxu0 0.0
    %2741 = vmatpush1.msra.mxu0 0.0
    %2742 = vmatprep.subr.mxu0 0.0
    %2743 = vmatpush1.msra.mxu0 0.0
    %2744 = vmatprep.subr.mxu0 0.0
    %2745 = vmatpush1.msra.mxu0 0.0
    %2746 = vmatprep.subr.mxu0 0.0
    %2747 = vmatpush1.msra.mxu0 0.0
    %2748 = vmatprep.subr.mxu0 0.0
    %2749 = vmatpush1.msra.mxu0 0.0
    %2750 = vmatprep.subr.mxu0 0.0
    %2751 = vmatpush1.msra.mxu0 0.0
    %2752 = vmatprep.subr.mxu0 0.0
    %2753 = vmatpush1.msra.mxu0 0.0
    %2754 = vmatprep.subr.mxu0 0.0
    %2755 = vmatpush1.msra.mxu0 0.0
    %2756 = vmatprep.subr.mxu0 0.0
    %2757 = vmatpush1.msra.mxu0 0.0
    %2758 = vmatprep.subr.mxu0 0.0
    %2759 = vmatpush1.msra.mxu0 0.0
    %2760 = vmatprep.subr.mxu0 0.0
    %2761 = vmatpush1.msra.mxu0 0.0
    %2762 = vmatprep.subr.mxu0 0.0
    %2763 = vmatpush1.msra.mxu0 0.0
    %2764 = vmatprep.subr.mxu0 0.0
    %2765 = vmatpush1.msra.mxu0 0.0
    %2766 = vmatprep.subr.mxu0 0.0
    %2767 = vmatpush1.msra.mxu0 0.0
    %2768 = vmatprep.subr.mxu0 0.0
    %2769 = vmatpush1.msra.mxu0 0.0
    %2770 = vmatprep.subr.mxu0 0.0
    %2771 = vmatpush1.msra.mxu0 0.0
    %2772 = vmatprep.mubr.f32.mxu0 0.0
    %2773 = vmatmul.mubr.f32.gmra.mrb[0].mxu0 %v2527
    %v2774 = vpop.f32.mrb[0].mxu0
    %v2775 = vadd.f32 %v2706, %v2774
    %v2776 = vpop.f32.mrb[0].mxu0
    %2777 = vmatprep.mubr.f32.mxu0 0.0
    %2778 = vmatmul.mubr.f32.gmra.mrb[0].mxu0 %v2530
    %v2779 = vpop.f32.mrb[0].mxu0
    %v2780 = vadd.f32 %v2706, %v2779
    %v2781 = vpop.f32.mrb[0].mxu0
    %2782 = vdwg.mxu0
    %s2783 = scalar_lea.vmem [#allocation7], 96
    %v2784 = vld [vmem:[%s2783] sm:$0xff]
    %v2785 = vld [vmem:[%s2783 + $0x8] sm:$0xff]
    %v2786 = vld [vmem:[%s2783 + $0x10] sm:$0xff]
    %v2787 = vld [vmem:[%s2783 + $0x18] sm:$0xff]
    %s2788 = scalar_lea.vmem [#allocation7], 128
    %v2789 = vld [vmem:[%s2788] sm:$0xff]
    %v2790 = vld [vmem:[%s2788 + $0x8] sm:$0xff]
    %v2791 = vld [vmem:[%s2788 + $0x10] sm:$0xff]
    %v2792 = vld [vmem:[%s2788 + $0x18] sm:$0xff]
    %s2793 = scalar_lea.vmem [#allocation7], 160
    %v2794 = vld [vmem:[%s2793] sm:$0xff]
    %v2795 = vld [vmem:[%s2793 + $0x8] sm:$0xff]
    %v2796 = vld [vmem:[%s2793 + $0x10] sm:$0xff]
    %v2797 = vld [vmem:[%s2793 + $0x18] sm:$0xff]
    %s2798 = scalar_lea.vmem %s5, 3
    %v2799 = vld [vmem:[%s2798] sm:$0x1]
    %s2800 = scalar_lea.vmem %s5, 4
    %v2801 = vld [vmem:[%s2800] sm:$0x1]
    %s2802 = scalar_lea.vmem %s5, 5
    %v2803 = vld [vmem:[%s2802] sm:$0x1]
    %v2805 = vlaneseq
    %v2806 = vshrl.u32 %v2805, 7
    %v2807 = vsub.s32 0, %v2806
    %v2808 = vrot.slane %v2799, %v2807
    %2810 = vmatprep.subr.mxu0 0.0
    %2811 = vmatpush1.msra.mxu0 %v2784
    %2812 = vmatprep.subr.mxu0 0.0
    %2813 = vmatpush1.msra.mxu0 %v2785
    %2814 = vmatprep.subr.mxu0 0.0
    %2815 = vmatpush1.msra.mxu0 %v2786
    %2816 = vmatprep.subr.mxu0 0.0
    %2817 = vmatpush1.msra.mxu0 %v2787
    %2818 = vmatprep.subr.mxu0 0.0
    %2819 = vmatpush1.msra.mxu0 0.0
    %2820 = vmatprep.subr.mxu0 0.0
    %2821 = vmatpush1.msra.mxu0 0.0
    %2822 = vmatprep.subr.mxu0 0.0
    %2823 = vmatpush1.msra.mxu0 0.0
    %2824 = vmatprep.subr.mxu0 0.0
    %2825 = vmatpush1.msra.mxu0 0.0
    %2826 = vmatprep.subr.mxu0 0.0
    %2827 = vmatpush1.msra.mxu0 0.0
    %2828 = vmatprep.subr.mxu0 0.0
    %2829 = vmatpush1.msra.mxu0 0.0
    %2830 = vmatprep.subr.mxu0 0.0
    %2831 = vmatpush1.msra.mxu0 0.0
    %2832 = vmatprep.subr.mxu0 0.0
    %2833 = vmatpush1.msra.mxu0 0.0
    %2834 = vmatprep.subr.mxu0 0.0
    %2835 = vmatpush1.msra.mxu0 0.0
    %2836 = vmatprep.subr.mxu0 0.0
    %2837 = vmatpush1.msra.mxu0 0.0
    %2838 = vmatprep.subr.mxu0 0.0
    %2839 = vmatpush1.msra.mxu0 0.0
    %2840 = vmatprep.subr.mxu0 0.0
    %2841 = vmatpush1.msra.mxu0 0.0
    %2842 = vmatprep.subr.mxu0 0.0
    %2843 = vmatpush1.msra.mxu0 0.0
    %2844 = vmatprep.subr.mxu0 0.0
    %2845 = vmatpush1.msra.mxu0 0.0
    %2846 = vmatprep.subr.mxu0 0.0
    %2847 = vmatpush1.msra.mxu0 0.0
    %2848 = vmatprep.subr.mxu0 0.0
    %2849 = vmatpush1.msra.mxu0 0.0
    %2850 = vmatprep.subr.mxu0 0.0
    %2851 = vmatpush1.msra.mxu0 0.0
    %2852 = vmatprep.subr.mxu0 0.0
    %2853 = vmatpush1.msra.mxu0 0.0
    %2854 = vmatprep.subr.mxu0 0.0
    %2855 = vmatpush1.msra.mxu0 0.0
    %2856 = vmatprep.subr.mxu0 0.0
    %2857 = vmatpush1.msra.mxu0 0.0
    %2858 = vmatprep.subr.mxu0 0.0
    %2859 = vmatpush1.msra.mxu0 0.0
    %2860 = vmatprep.subr.mxu0 0.0
    %2861 = vmatpush1.msra.mxu0 0.0
    %2862 = vmatprep.subr.mxu0 0.0
    %2863 = vmatpush1.msra.mxu0 0.0
    %2864 = vmatprep.subr.mxu0 0.0
    %2865 = vmatpush1.msra.mxu0 0.0
    %2866 = vmatprep.subr.mxu0 0.0
    %2867 = vmatpush1.msra.mxu0 0.0
    %2868 = vmatprep.subr.mxu0 0.0
    %2869 = vmatpush1.msra.mxu0 0.0
    %2870 = vmatprep.subr.mxu0 0.0
    %2871 = vmatpush1.msra.mxu0 0.0
    %2872 = vmatprep.subr.mxu0 0.0
    %2873 = vmatpush1.msra.mxu0 0.0
    %2874 = vmatprep.mubr.f32.mxu0 0.0
    %2875 = vmatmul.mubr.f32.gmra.mrb[0].mxu0 %v421
    %v2876 = vpop.f32.mrb[0].mxu0
    %v2877 = vadd.f32 %v2808, %v2876
    %v2878 = vpop.f32.mrb[0].mxu0
    %2879 = vdwg.mxu0
    %v2881 = vlaneseq
    %v2882 = vshrl.u32 %v2881, 7
    %v2883 = vsub.s32 0, %v2882
    %v2884 = vrot.slane %v2801, %v2883
    %2886 = vmatprep.subr.mxu0 0.0
    %2887 = vmatpush1.msra.mxu0 %v2789
    %2888 = vmatprep.subr.mxu0 0.0
    %2889 = vmatpush1.msra.mxu0 %v2790
    %2890 = vmatprep.subr.mxu0 0.0
    %2891 = vmatpush1.msra.mxu0 %v2791
    %2892 = vmatprep.subr.mxu0 0.0
    %2893 = vmatpush1.msra.mxu0 %v2792
    %2894 = vmatprep.subr.mxu0 0.0
    %2895 = vmatpush1.msra.mxu0 0.0
    %2896 = vmatprep.subr.mxu0 0.0
    %2897 = vmatpush1.msra.mxu0 0.0
    %2898 = vmatprep.subr.mxu0 0.0
    %2899 = vmatpush1.msra.mxu0 0.0
    %2900 = vmatprep.subr.mxu0 0.0
    %2901 = vmatpush1.msra.mxu0 0.0
    %2902 = vmatprep.subr.mxu0 0.0
    %2903 = vmatpush1.msra.mxu0 0.0
    %2904 = vmatprep.subr.mxu0 0.0
    %2905 = vmatpush1.msra.mxu0 0.0
    %2906 = vmatprep.subr.mxu0 0.0
    %2907 = vmatpush1.msra.mxu0 0.0
    %2908 = vmatprep.subr.mxu0 0.0
    %2909 = vmatpush1.msra.mxu0 0.0
    %2910 = vmatprep.subr.mxu0 0.0
    %2911 = vmatpush1.msra.mxu0 0.0
    %2912 = vmatprep.subr.mxu0 0.0
    %2913 = vmatpush1.msra.mxu0 0.0
    %2914 = vmatprep.subr.mxu0 0.0
    %2915 = vmatpush1.msra.mxu0 0.0
    %2916 = vmatprep.subr.mxu0 0.0
    %2917 = vmatpush1.msra.mxu0 0.0
    %2918 = vmatprep.subr.mxu0 0.0
    %2919 = vmatpush1.msra.mxu0 0.0
    %2920 = vmatprep.subr.mxu0 0.0
    %2921 = vmatpush1.msra.mxu0 0.0
    %2922 = vmatprep.subr.mxu0 0.0
    %2923 = vmatpush1.msra.mxu0 0.0
    %2924 = vmatprep.subr.mxu0 0.0
    %2925 = vmatpush1.msra.mxu0 0.0
    %2926 = vmatprep.subr.mxu0 0.0
    %2927 = vmatpush1.msra.mxu0 0.0
    %2928 = vmatprep.subr.mxu0 0.0
    %2929 = vmatpush1.msra.mxu0 0.0
    %2930 = vmatprep.subr.mxu0 0.0
    %2931 = vmatpush1.msra.mxu0 0.0
    %2932 = vmatprep.subr.mxu0 0.0
    %2933 = vmatpush1.msra.mxu0 0.0
    %2934 = vmatprep.subr.mxu0 0.0
    %2935 = vmatpush1.msra.mxu0 0.0
    %2936 = vmatprep.subr.mxu0 0.0
    %2937 = vmatpush1.msra.mxu0 0.0
    %2938 = vmatprep.subr.mxu0 0.0
    %2939 = vmatpush1.msra.mxu0 0.0
    %2940 = vmatprep.subr.mxu0 0.0
    %2941 = vmatpush1.msra.mxu0 0.0
    %2942 = vmatprep.subr.mxu0 0.0
    %2943 = vmatpush1.msra.mxu0 0.0
    %2944 = vmatprep.subr.mxu0 0.0
    %2945 = vmatpush1.msra.mxu0 0.0
    %2946 = vmatprep.subr.mxu0 0.0
    %2947 = vmatpush1.msra.mxu0 0.0
    %2948 = vmatprep.subr.mxu0 0.0
    %2949 = vmatpush1.msra.mxu0 0.0
    %2950 = vmatprep.mubr.f32.mxu0 0.0
    %2951 = vmatmul.mubr.f32.gmra.mrb[0].mxu0 %v421
    %v2952 = vpop.f32.mrb[0].mxu0
    %v2953 = vadd.f32 %v2884, %v2952
    %v2954 = vpop.f32.mrb[0].mxu0
    %2955 = vdwg.mxu0
    %v2957 = vlaneseq
    %v2958 = vshrl.u32 %v2957, 7
    %v2959 = vsub.s32 0, %v2958
    %v2960 = vrot.slane %v2803, %v2959
    %2962 = vmatprep.subr.mxu0 0.0
    %2963 = vmatpush1.msra.mxu0 %v2794
    %2964 = vmatprep.subr.mxu0 0.0
    %2965 = vmatpush1.msra.mxu0 %v2795
    %2966 = vmatprep.subr.mxu0 0.0
    %2967 = vmatpush1.msra.mxu0 %v2796
    %2968 = vmatprep.subr.mxu0 0.0
    %2969 = vmatpush1.msra.mxu0 %v2797
    %2970 = vmatprep.subr.mxu0 0.0
    %2971 = vmatpush1.msra.mxu0 0.0
    %2972 = vmatprep.subr.mxu0 0.0
    %2973 = vmatpush1.msra.mxu0 0.0
    %2974 = vmatprep.subr.mxu0 0.0
    %2975 = vmatpush1.msra.mxu0 0.0
    %2976 = vmatprep.subr.mxu0 0.0
    %2977 = vmatpush1.msra.mxu0 0.0
    %2978 = vmatprep.subr.mxu0 0.0
    %2979 = vmatpush1.msra.mxu0 0.0
    %2980 = vmatprep.subr.mxu0 0.0
    %2981 = vmatpush1.msra.mxu0 0.0
    %2982 = vmatprep.subr.mxu0 0.0
    %2983 = vmatpush1.msra.mxu0 0.0
    %2984 = vmatprep.subr.mxu0 0.0
    %2985 = vmatpush1.msra.mxu0 0.0
    %2986 = vmatprep.subr.mxu0 0.0
    %2987 = vmatpush1.msra.mxu0 0.0
    %2988 = vmatprep.subr.mxu0 0.0
    %2989 = vmatpush1.msra.mxu0 0.0
    %2990 = vmatprep.subr.mxu0 0.0
    %2991 = vmatpush1.msra.mxu0 0.0
    %2992 = vmatprep.subr.mxu0 0.0
    %2993 = vmatpush1.msra.mxu0 0.0
    %2994 = vmatprep.subr.mxu0 0.0
    %2995 = vmatpush1.msra.mxu0 0.0
    %2996 = vmatprep.subr.mxu0 0.0
    %2997 = vmatpush1.msra.mxu0 0.0
    %2998 = vmatprep.subr.mxu0 0.0
    %2999 = vmatpush1.msra.mxu0 0.0
    %3000 = vmatprep.subr.mxu0 0.0
    %3001 = vmatpush1.msra.mxu0 0.0
    %3002 = vmatprep.subr.mxu0 0.0
    %3003 = vmatpush1.msra.mxu0 0.0
    %3004 = vmatprep.subr.mxu0 0.0
    %3005 = vmatpush1.msra.mxu0 0.0
    %3006 = vmatprep.subr.mxu0 0.0
    %3007 = vmatpush1.msra.mxu0 0.0
    %3008 = vmatprep.subr.mxu0 0.0
    %3009 = vmatpush1.msra.mxu0 0.0
    %3010 = vmatprep.subr.mxu0 0.0
    %3011 = vmatpush1.msra.mxu0 0.0
    %3012 = vmatprep.subr.mxu0 0.0
    %3013 = vmatpush1.msra.mxu0 0.0
    %3014 = vmatprep.subr.mxu0 0.0
    %3015 = vmatpush1.msra.mxu0 0.0
    %3016 = vmatprep.subr.mxu0 0.0
    %3017 = vmatpush1.msra.mxu0 0.0
    %3018 = vmatprep.subr.mxu0 0.0
    %3019 = vmatpush1.msra.mxu0 0.0
    %3020 = vmatprep.subr.mxu0 0.0
    %3021 = vmatpush1.msra.mxu0 0.0
    %3022 = vmatprep.subr.mxu0 0.0
    %3023 = vmatpush1.msra.mxu0 0.0
    %3024 = vmatprep.subr.mxu0 0.0
    %3025 = vmatpush1.msra.mxu0 0.0
    %3026 = vmatprep.mubr.f32.mxu0 0.0
    %3027 = vmatmul.mubr.f32.gmra.mrb[0].mxu0 %v421
    %v3028 = vpop.f32.mrb[0].mxu0
    %v3029 = vadd.f32 %v2960, %v3028
    %v3030 = vpop.f32.mrb[0].mxu0
    %3031 = vdwg.mxu0
    %v3032 = vadd.f32 %v2599, %v2877
    %v3033 = vxor.u32 %v3032, 2147483648
    %v3034 = vmul.f32 %v3033, 1.442695
    %v3035 = vpow.pop %v3034
    %v3036 = vadd.f32 %v3035, 1.0
    %v3037 = vrcp.pop %v3036
    %v3038 = vmul.f32 1.0, %v3037
    %v3039 = vadd.f32 %v2687, %v2953
    %v3040 = vxor.u32 %v3039, 2147483648
    %v3041 = vmul.f32 %v3040, 1.442695
    %v3042 = vpow.pop %v3041
    %v3043 = vadd.f32 %v3042, 1.0
    %v3044 = vrcp.pop %v3043
    %v3045 = vmul.f32 1.0, %v3044
    %v3046 = vmul.f32 %v3038, %v3029
    %v3047 = vadd.f32 %v2775, %v3046
    %v3048 = vtanh.pop %v3047
    %v3049 = vsub.f32 1.0, %v3045
    %v3050 = vmul.f32 %v3049, %v3048
    %v3051 = vmul.f32 %v3045, 0.0
    %v3052 = vadd.f32 %v3050, %v3051
    %v3053 = vmul.f32 %v669, %v3052
    %v3054 = vadd.f32 %v3053, %v678
    %v3056 = vsel %vm137, %v3054, 0
    %3058 = vmatprep.subr.mxu0 0.0
    %3059 = vmatpush1.msra.mxu0 %v2784
    %3060 = vmatprep.subr.mxu0 0.0
    %3061 = vmatpush1.msra.mxu0 %v2785
    %3062 = vmatprep.subr.mxu0 0.0
    %3063 = vmatpush1.msra.mxu0 %v2786
    %3064 = vmatprep.subr.mxu0 0.0
    %3065 = vmatpush1.msra.mxu0 %v2787
    %3066 = vmatprep.subr.mxu0 0.0
    %3067 = vmatpush1.msra.mxu0 0.0
    %3068 = vmatprep.subr.mxu0 0.0
    %3069 = vmatpush1.msra.mxu0 0.0
    %3070 = vmatprep.subr.mxu0 0.0
    %3071 = vmatpush1.msra.mxu0 0.0
    %3072 = vmatprep.subr.mxu0 0.0
    %3073 = vmatpush1.msra.mxu0 0.0
    %3074 = vmatprep.subr.mxu0 0.0
    %3075 = vmatpush1.msra.mxu0 0.0
    %3076 = vmatprep.subr.mxu0 0.0
    %3077 = vmatpush1.msra.mxu0 0.0
    %3078 = vmatprep.subr.mxu0 0.0
    %3079 = vmatpush1.msra.mxu0 0.0
    %3080 = vmatprep.subr.mxu0 0.0
    %3081 = vmatpush1.msra.mxu0 0.0
    %3082 = vmatprep.subr.mxu0 0.0
    %3083 = vmatpush1.msra.mxu0 0.0
    %3084 = vmatprep.subr.mxu0 0.0
    %3085 = vmatpush1.msra.mxu0 0.0
    %3086 = vmatprep.subr.mxu0 0.0
    %3087 = vmatpush1.msra.mxu0 0.0
    %3088 = vmatprep.subr.mxu0 0.0
    %3089 = vmatpush1.msra.mxu0 0.0
    %3090 = vmatprep.subr.mxu0 0.0
    %3091 = vmatpush1.msra.mxu0 0.0
    %3092 = vmatprep.subr.mxu0 0.0
    %3093 = vmatpush1.msra.mxu0 0.0
    %3094 = vmatprep.subr.mxu0 0.0
    %3095 = vmatpush1.msra.mxu0 0.0
    %3096 = vmatprep.subr.mxu0 0.0
    %3097 = vmatpush1.msra.mxu0 0.0
    %3098 = vmatprep.subr.mxu0 0.0
    %3099 = vmatpush1.msra.mxu0 0.0
    %3100 = vmatprep.subr.mxu0 0.0
    %3101 = vmatpush1.msra.mxu0 0.0
    %3102 = vmatprep.subr.mxu0 0.0
    %3103 = vmatpush1.msra.mxu0 0.0
    %3104 = vmatprep.subr.mxu0 0.0
    %3105 = vmatpush1.msra.mxu0 0.0
    %3106 = vmatprep.subr.mxu0 0.0
    %3107 = vmatpush1.msra.mxu0 0.0
    %3108 = vmatprep.subr.mxu0 0.0
    %3109 = vmatpush1.msra.mxu0 0.0
    %3110 = vmatprep.subr.mxu0 0.0
    %3111 = vmatpush1.msra.mxu0 0.0
    %3112 = vmatprep.subr.mxu0 0.0
    %3113 = vmatpush1.msra.mxu0 0.0
    %3114 = vmatprep.subr.mxu0 0.0
    %3115 = vmatpush1.msra.mxu0 0.0
    %3116 = vmatprep.subr.mxu0 0.0
    %3117 = vmatpush1.msra.mxu0 0.0
    %3118 = vmatprep.subr.mxu0 0.0
    %3119 = vmatpush1.msra.mxu0 0.0
    %3120 = vmatprep.subr.mxu0 0.0
    %3121 = vmatpush1.msra.mxu0 0.0
    %3122 = vmatprep.mubr.f32.mxu0 0.0
    %3123 = vmatmul.mubr.f32.gmra.mrb[0].mxu0 %v3056
    %v3124 = vpop.f32.mrb[0].mxu0
    %v3125 = vadd.f32 %v2808, %v3124
    %v3126 = vpop.f32.mrb[0].mxu0
    %3127 = vdwg.mxu0
    %3128 = vmatprep.subr.mxu0 0.0
    %3129 = vmatpush1.msra.mxu0 %v2789
    %3130 = vmatprep.subr.mxu0 0.0
    %3131 = vmatpush1.msra.mxu0 %v2790
    %3132 = vmatprep.subr.mxu0 0.0
    %3133 = vmatpush1.msra.mxu0 %v2791
    %3134 = vmatprep.subr.mxu0 0.0
    %3135 = vmatpush1.msra.mxu0 %v2792
    %3136 = vmatprep.subr.mxu0 0.0
    %3137 = vmatpush1.msra.mxu0 0.0
    %3138 = vmatprep.subr.mxu0 0.0
    %3139 = vmatpush1.msra.mxu0 0.0
    %3140 = vmatprep.subr.mxu0 0.0
    %3141 = vmatpush1.msra.mxu0 0.0
    %3142 = vmatprep.subr.mxu0 0.0
    %3143 = vmatpush1.msra.mxu0 0.0
    %3144 = vmatprep.subr.mxu0 0.0
    %3145 = vmatpush1.msra.mxu0 0.0
    %3146 = vmatprep.subr.mxu0 0.0
    %3147 = vmatpush1.msra.mxu0 0.0
    %3148 = vmatprep.subr.mxu0 0.0
    %3149 = vmatpush1.msra.mxu0 0.0
    %3150 = vmatprep.subr.mxu0 0.0
    %3151 = vmatpush1.msra.mxu0 0.0
    %3152 = vmatprep.subr.mxu0 0.0
    %3153 = vmatpush1.msra.mxu0 0.0
    %3154 = vmatprep.subr.mxu0 0.0
    %3155 = vmatpush1.msra.mxu0 0.0
    %3156 = vmatprep.subr.mxu0 0.0
    %3157 = vmatpush1.msra.mxu0 0.0
    %3158 = vmatprep.subr.mxu0 0.0
    %3159 = vmatpush1.msra.mxu0 0.0
    %3160 = vmatprep.subr.mxu0 0.0
    %3161 = vmatpush1.msra.mxu0 0.0
    %3162 = vmatprep.subr.mxu0 0.0
    %3163 = vmatpush1.msra.mxu0 0.0
    %3164 = vmatprep.subr.mxu0 0.0
    %3165 = vmatpush1.msra.mxu0 0.0
    %3166 = vmatprep.subr.mxu0 0.0
    %3167 = vmatpush1.msra.mxu0 0.0
    %3168 = vmatprep.subr.mxu0 0.0
    %3169 = vmatpush1.msra.mxu0 0.0
    %3170 = vmatprep.subr.mxu0 0.0
    %3171 = vmatpush1.msra.mxu0 0.0
    %3172 = vmatprep.subr.mxu0 0.0
    %3173 = vmatpush1.msra.mxu0 0.0
    %3174 = vmatprep.subr.mxu0 0.0
    %3175 = vmatpush1.msra.mxu0 0.0
    %3176 = vmatprep.subr.mxu0 0.0
    %3177 = vmatpush1.msra.mxu0 0.0
    %3178 = vmatprep.subr.mxu0 0.0
    %3179 = vmatpush1.msra.mxu0 0.0
    %3180 = vmatprep.subr.mxu0 0.0
    %3181 = vmatpush1.msra.mxu0 0.0
    %3182 = vmatprep.subr.mxu0 0.0
    %3183 = vmatpush1.msra.mxu0 0.0
    %3184 = vmatprep.subr.mxu0 0.0
    %3185 = vmatpush1.msra.mxu0 0.0
    %3186 = vmatprep.subr.mxu0 0.0
    %3187 = vmatpush1.msra.mxu0 0.0
    %3188 = vmatprep.subr.mxu0 0.0
    %3189 = vmatpush1.msra.mxu0 0.0
    %3190 = vmatprep.subr.mxu0 0.0
    %3191 = vmatpush1.msra.mxu0 0.0
    %3192 = vmatprep.mubr.f32.mxu0 0.0
    %3193 = vmatmul.mubr.f32.gmra.mrb[0].mxu0 %v3056
    %v3194 = vpop.f32.mrb[0].mxu0
    %v3195 = vadd.f32 %v2884, %v3194
    %v3196 = vpop.f32.mrb[0].mxu0
    %3197 = vdwg.mxu0
    %3198 = vmatprep.subr.mxu0 0.0
    %3199 = vmatpush1.msra.mxu0 %v2794
    %3200 = vmatprep.subr.mxu0 0.0
    %3201 = vmatpush1.msra.mxu0 %v2795
    %3202 = vmatprep.subr.mxu0 0.0
    %3203 = vmatpush1.msra.mxu0 %v2796
    %3204 = vmatprep.subr.mxu0 0.0
    %3205 = vmatpush1.msra.mxu0 %v2797
    %3206 = vmatprep.subr.mxu0 0.0
    %3207 = vmatpush1.msra.mxu0 0.0
    %3208 = vmatprep.subr.mxu0 0.0
    %3209 = vmatpush1.msra.mxu0 0.0
    %3210 = vmatprep.subr.mxu0 0.0
    %3211 = vmatpush1.msra.mxu0 0.0
    %3212 = vmatprep.subr.mxu0 0.0
    %3213 = vmatpush1.msra.mxu0 0.0
    %3214 = vmatprep.subr.mxu0 0.0
    %3215 = vmatpush1.msra.mxu0 0.0
    %3216 = vmatprep.subr.mxu0 0.0
    %3217 = vmatpush1.msra.mxu0 0.0
    %3218 = vmatprep.subr.mxu0 0.0
    %3219 = vmatpush1.msra.mxu0 0.0
    %3220 = vmatprep.subr.mxu0 0.0
    %3221 = vmatpush1.msra.mxu0 0.0
    %3222 = vmatprep.subr.mxu0 0.0
    %3223 = vmatpush1.msra.mxu0 0.0
    %3224 = vmatprep.subr.mxu0 0.0
    %3225 = vmatpush1.msra.mxu0 0.0
    %3226 = vmatprep.subr.mxu0 0.0
    %3227 = vmatpush1.msra.mxu0 0.0
    %3228 = vmatprep.subr.mxu0 0.0
    %3229 = vmatpush1.msra.mxu0 0.0
    %3230 = vmatprep.subr.mxu0 0.0
    %3231 = vmatpush1.msra.mxu0 0.0
    %3232 = vmatprep.subr.mxu0 0.0
    %3233 = vmatpush1.msra.mxu0 0.0
    %3234 = vmatprep.subr.mxu0 0.0
    %3235 = vmatpush1.msra.mxu0 0.0
    %3236 = vmatprep.subr.mxu0 0.0
    %3237 = vmatpush1.msra.mxu0 0.0
    %3238 = vmatprep.subr.mxu0 0.0
    %3239 = vmatpush1.msra.mxu0 0.0
    %3240 = vmatprep.subr.mxu0 0.0
    %3241 = vmatpush1.msra.mxu0 0.0
    %3242 = vmatprep.subr.mxu0 0.0
    %3243 = vmatpush1.msra.mxu0 0.0
    %3244 = vmatprep.subr.mxu0 0.0
    %3245 = vmatpush1.msra.mxu0 0.0
    %3246 = vmatprep.subr.mxu0 0.0
    %3247 = vmatpush1.msra.mxu0 0.0
    %3248 = vmatprep.subr.mxu0 0.0
    %3249 = vmatpush1.msra.mxu0 0.0
    %3250 = vmatprep.subr.mxu0 0.0
    %3251 = vmatpush1.msra.mxu0 0.0
    %3252 = vmatprep.subr.mxu0 0.0
    %3253 = vmatpush1.msra.mxu0 0.0
    %3254 = vmatprep.subr.mxu0 0.0
    %3255 = vmatpush1.msra.mxu0 0.0
    %3256 = vmatprep.subr.mxu0 0.0
    %3257 = vmatpush1.msra.mxu0 0.0
    %3258 = vmatprep.subr.mxu0 0.0
    %3259 = vmatpush1.msra.mxu0 0.0
    %3260 = vmatprep.subr.mxu0 0.0
    %3261 = vmatpush1.msra.mxu0 0.0
    %3262 = vmatprep.mubr.f32.mxu0 0.0
    %3263 = vmatmul.mubr.f32.gmra.mrb[0].mxu0 %v3056
    %v3264 = vpop.f32.mrb[0].mxu0
    %v3265 = vadd.f32 %v2960, %v3264
    %v3266 = vpop.f32.mrb[0].mxu0
    %3267 = vdwg.mxu0
    %v3269 = vrot.slane %v3125, 6
    %v3271 = vadd.f32 %v2599, %v3269
    %v3272 = vxor.u32 %v3271, 2147483648
    %v3273 = vmul.f32 %v3272, 1.442695
    %v3274 = vpow.pop %v3273
    %v3275 = vadd.f32 %v3274, 1.0
    %v3276 = vrcp.pop %v3275
    %v3277 = vmul.f32 1.0, %v3276
    %v3279 = vrot.slane %v3195, 6
    %v3281 = vadd.f32 %v2687, %v3279
    %v3282 = vxor.u32 %v3281, 2147483648
    %v3283 = vmul.f32 %v3282, 1.442695
    %v3284 = vpow.pop %v3283
    %v3285 = vadd.f32 %v3284, 1.0
    %v3286 = vrcp.pop %v3285
    %v3287 = vmul.f32 1.0, %v3286
    %v3289 = vrot.slane %v3265, 6
    %v3291 = vmul.f32 %v3277, %v3289
    %v3292 = vadd.f32 %v2775, %v3291
    %v3293 = vtanh.pop %v3292
    %v3294 = vsub.f32 1.0, %v3287
    %v3295 = vmul.f32 %v3294, %v3293
    %v3296 = vrot.slane %v3054, 6
    %v3298 = vmul.f32 %v3287, %v3296
    %v3299 = vadd.f32 %v3295, %v3298
    %v3301 = vrot.slane %v3299, 2
    %v3303 = vmul.f32 %v927, %v3301
    %v3304 = vmul.f32 %v937, %v3054
    %v3305 = vadd.f32 %v3303, %v3304
    %v3307 = vsel %vm137, %v3305, 0
    %3309 = vmatprep.subr.mxu0 0.0
    %3310 = vmatpush1.msra.mxu0 %v2784
    %3311 = vmatprep.subr.mxu0 0.0
    %3312 = vmatpush1.msra.mxu0 %v2785
    %3313 = vmatprep.subr.mxu0 0.0
    %3314 = vmatpush1.msra.mxu0 %v2786
    %3315 = vmatprep.subr.mxu0 0.0
    %3316 = vmatpush1.msra.mxu0 %v2787
    %3317 = vmatprep.subr.mxu0 0.0
    %3318 = vmatpush1.msra.mxu0 0.0
    %3319 = vmatprep.subr.mxu0 0.0
    %3320 = vmatpush1.msra.mxu0 0.0
    %3321 = vmatprep.subr.mxu0 0.0
    %3322 = vmatpush1.msra.mxu0 0.0
    %3323 = vmatprep.subr.mxu0 0.0
    %3324 = vmatpush1.msra.mxu0 0.0
    %3325 = vmatprep.subr.mxu0 0.0
    %3326 = vmatpush1.msra.mxu0 0.0
    %3327 = vmatprep.subr.mxu0 0.0
    %3328 = vmatpush1.msra.mxu0 0.0
    %3329 = vmatprep.subr.mxu0 0.0
    %3330 = vmatpush1.msra.mxu0 0.0
    %3331 = vmatprep.subr.mxu0 0.0
    %3332 = vmatpush1.msra.mxu0 0.0
    %3333 = vmatprep.subr.mxu0 0.0
    %3334 = vmatpush1.msra.mxu0 0.0
    %3335 = vmatprep.subr.mxu0 0.0
    %3336 = vmatpush1.msra.mxu0 0.0
    %3337 = vmatprep.subr.mxu0 0.0
    %3338 = vmatpush1.msra.mxu0 0.0
    %3339 = vmatprep.subr.mxu0 0.0
    %3340 = vmatpush1.msra.mxu0 0.0
    %3341 = vmatprep.subr.mxu0 0.0
    %3342 = vmatpush1.msra.mxu0 0.0
    %3343 = vmatprep.subr.mxu0 0.0
    %3344 = vmatpush1.msra.mxu0 0.0
    %3345 = vmatprep.subr.mxu0 0.0
    %3346 = vmatpush1.msra.mxu0 0.0
    %3347 = vmatprep.subr.mxu0 0.0
    %3348 = vmatpush1.msra.mxu0 0.0
    %3349 = vmatprep.subr.mxu0 0.0
    %3350 = vmatpush1.msra.mxu0 0.0
    %3351 = vmatprep.subr.mxu0 0.0
    %3352 = vmatpush1.msra.mxu0 0.0
    %3353 = vmatprep.subr.mxu0 0.0
    %3354 = vmatpush1.msra.mxu0 0.0
    %3355 = vmatprep.subr.mxu0 0.0
    %3356 = vmatpush1.msra.mxu0 0.0
    %3357 = vmatprep.subr.mxu0 0.0
    %3358 = vmatpush1.msra.mxu0 0.0
    %3359 = vmatprep.subr.mxu0 0.0
    %3360 = vmatpush1.msra.mxu0 0.0
    %3361 = vmatprep.subr.mxu0 0.0
    %3362 = vmatpush1.msra.mxu0 0.0
    %3363 = vmatprep.subr.mxu0 0.0
    %3364 = vmatpush1.msra.mxu0 0.0
    %3365 = vmatprep.subr.mxu0 0.0
    %3366 = vmatpush1.msra.mxu0 0.0
    %3367 = vmatprep.subr.mxu0 0.0
    %3368 = vmatpush1.msra.mxu0 0.0
    %3369 = vmatprep.subr.mxu0 0.0
    %3370 = vmatpush1.msra.mxu0 0.0
    %3371 = vmatprep.subr.mxu0 0.0
    %3372 = vmatpush1.msra.mxu0 0.0
    %3373 = vmatprep.mubr.f32.mxu0 0.0
    %3374 = vmatmul.mubr.f32.gmra.mrb[0].mxu0 %v3307
    %v3375 = vpop.f32.mrb[0].mxu0
    %v3376 = vadd.f32 %v2808, %v3375
    %v3377 = vpop.f32.mrb[0].mxu0
    %3378 = vdwg.mxu0
    %3379 = vmatprep.subr.mxu0 0.0
    %3380 = vmatpush1.msra.mxu0 %v2789
    %3381 = vmatprep.subr.mxu0 0.0
    %3382 = vmatpush1.msra.mxu0 %v2790
    %3383 = vmatprep.subr.mxu0 0.0
    %3384 = vmatpush1.msra.mxu0 %v2791
    %3385 = vmatprep.subr.mxu0 0.0
    %3386 = vmatpush1.msra.mxu0 %v2792
    %3387 = vmatprep.subr.mxu0 0.0
    %3388 = vmatpush1.msra.mxu0 0.0
    %3389 = vmatprep.subr.mxu0 0.0
    %3390 = vmatpush1.msra.mxu0 0.0
    %3391 = vmatprep.subr.mxu0 0.0
    %3392 = vmatpush1.msra.mxu0 0.0
    %3393 = vmatprep.subr.mxu0 0.0
    %3394 = vmatpush1.msra.mxu0 0.0
    %3395 = vmatprep.subr.mxu0 0.0
    %3396 = vmatpush1.msra.mxu0 0.0
    %3397 = vmatprep.subr.mxu0 0.0
    %3398 = vmatpush1.msra.mxu0 0.0
    %3399 = vmatprep.subr.mxu0 0.0
    %3400 = vmatpush1.msra.mxu0 0.0
    %3401 = vmatprep.subr.mxu0 0.0
    %3402 = vmatpush1.msra.mxu0 0.0
    %3403 = vmatprep.subr.mxu0 0.0
    %3404 = vmatpush1.msra.mxu0 0.0
    %3405 = vmatprep.subr.mxu0 0.0
    %3406 = vmatpush1.msra.mxu0 0.0
    %3407 = vmatprep.subr.mxu0 0.0
    %3408 = vmatpush1.msra.mxu0 0.0
    %3409 = vmatprep.subr.mxu0 0.0
    %3410 = vmatpush1.msra.mxu0 0.0
    %3411 = vmatprep.subr.mxu0 0.0
    %3412 = vmatpush1.msra.mxu0 0.0
    %3413 = vmatprep.subr.mxu0 0.0
    %3414 = vmatpush1.msra.mxu0 0.0
    %3415 = vmatprep.subr.mxu0 0.0
    %3416 = vmatpush1.msra.mxu0 0.0
    %3417 = vmatprep.subr.mxu0 0.0
    %3418 = vmatpush1.msra.mxu0 0.0
    %3419 = vmatprep.subr.mxu0 0.0
    %3420 = vmatpush1.msra.mxu0 0.0
    %3421 = vmatprep.subr.mxu0 0.0
    %3422 = vmatpush1.msra.mxu0 0.0
    %3423 = vmatprep.subr.mxu0 0.0
    %3424 = vmatpush1.msra.mxu0 0.0
    %3425 = vmatprep.subr.mxu0 0.0
    %3426 = vmatpush1.msra.mxu0 0.0
    %3427 = vmatprep.subr.mxu0 0.0
    %3428 = vmatpush1.msra.mxu0 0.0
    %3429 = vmatprep.subr.mxu0 0.0
    %3430 = vmatpush1.msra.mxu0 0.0
    %3431 = vmatprep.subr.mxu0 0.0
    %3432 = vmatpush1.msra.mxu0 0.0
    %3433 = vmatprep.subr.mxu0 0.0
    %3434 = vmatpush1.msra.mxu0 0.0
    %3435 = vmatprep.subr.mxu0 0.0
    %3436 = vmatpush1.msra.mxu0 0.0
    %3437 = vmatprep.subr.mxu0 0.0
    %3438 = vmatpush1.msra.mxu0 0.0
    %3439 = vmatprep.subr.mxu0 0.0
    %3440 = vmatpush1.msra.mxu0 0.0
    %3441 = vmatprep.subr.mxu0 0.0
    %3442 = vmatpush1.msra.mxu0 0.0
    %3443 = vmatprep.mubr.f32.mxu0 0.0
    %3444 = vmatmul.mubr.f32.gmra.mrb[0].mxu0 %v3307
    %v3445 = vpop.f32.mrb[0].mxu0
    %v3446 = vadd.f32 %v2884, %v3445
    %v3447 = vpop.f32.mrb[0].mxu0
    %3448 = vdwg.mxu0
    %3449 = vmatprep.subr.mxu0 0.0
    %3450 = vmatpush1.msra.mxu0 %v2794
    %3451 = vmatprep.subr.mxu0 0.0
    %3452 = vmatpush1.msra.mxu0 %v2795
    %3453 = vmatprep.subr.mxu0 0.0
    %3454 = vmatpush1.msra.mxu0 %v2796
    %3455 = vmatprep.subr.mxu0 0.0
    %3456 = vmatpush1.msra.mxu0 %v2797
    %3457 = vmatprep.subr.mxu0 0.0
    %3458 = vmatpush1.msra.mxu0 0.0
    %3459 = vmatprep.subr.mxu0 0.0
    %3460 = vmatpush1.msra.mxu0 0.0
    %3461 = vmatprep.subr.mxu0 0.0
    %3462 = vmatpush1.msra.mxu0 0.0
    %3463 = vmatprep.subr.mxu0 0.0
    %3464 = vmatpush1.msra.mxu0 0.0
    %3465 = vmatprep.subr.mxu0 0.0
    %3466 = vmatpush1.msra.mxu0 0.0
    %3467 = vmatprep.subr.mxu0 0.0
    %3468 = vmatpush1.msra.mxu0 0.0
    %3469 = vmatprep.subr.mxu0 0.0
    %3470 = vmatpush1.msra.mxu0 0.0
    %3471 = vmatprep.subr.mxu0 0.0
    %3472 = vmatpush1.msra.mxu0 0.0
    %3473 = vmatprep.subr.mxu0 0.0
    %3474 = vmatpush1.msra.mxu0 0.0
    %3475 = vmatprep.subr.mxu0 0.0
    %3476 = vmatpush1.msra.mxu0 0.0
    %3477 = vmatprep.subr.mxu0 0.0
    %3478 = vmatpush1.msra.mxu0 0.0
    %3479 = vmatprep.subr.mxu0 0.0
    %3480 = vmatpush1.msra.mxu0 0.0
    %3481 = vmatprep.subr.mxu0 0.0
    %3482 = vmatpush1.msra.mxu0 0.0
    %3483 = vmatprep.subr.mxu0 0.0
    %3484 = vmatpush1.msra.mxu0 0.0
    %3485 = vmatprep.subr.mxu0 0.0
    %3486 = vmatpush1.msra.mxu0 0.0
    %3487 = vmatprep.subr.mxu0 0.0
    %3488 = vmatpush1.msra.mxu0 0.0
    %3489 = vmatprep.subr.mxu0 0.0
    %3490 = vmatpush1.msra.mxu0 0.0
    %3491 = vmatprep.subr.mxu0 0.0
    %3492 = vmatpush1.msra.mxu0 0.0
    %3493 = vmatprep.subr.mxu0 0.0
    %3494 = vmatpush1.msra.mxu0 0.0
    %3495 = vmatprep.subr.mxu0 0.0
    %3496 = vmatpush1.msra.mxu0 0.0
    %3497 = vmatprep.subr.mxu0 0.0
    %3498 = vmatpush1.msra.mxu0 0.0
    %3499 = vmatprep.subr.mxu0 0.0
    %3500 = vmatpush1.msra.mxu0 0.0
    %3501 = vmatprep.subr.mxu0 0.0
    %3502 = vmatpush1.msra.mxu0 0.0
    %3503 = vmatprep.subr.mxu0 0.0
    %3504 = vmatpush1.msra.mxu0 0.0
    %3505 = vmatprep.subr.mxu0 0.0
    %3506 = vmatpush1.msra.mxu0 0.0
    %3507 = vmatprep.subr.mxu0 0.0
    %3508 = vmatpush1.msra.mxu0 0.0
    %3509 = vmatprep.subr.mxu0 0.0
    %3510 = vmatpush1.msra.mxu0 0.0
    %3511 = vmatprep.subr.mxu0 0.0
    %3512 = vmatpush1.msra.mxu0 0.0
    %3513 = vmatprep.mubr.f32.mxu0 0.0
    %3514 = vmatmul.mubr.f32.gmra.mrb[0].mxu0 %v3307
    %v3515 = vpop.f32.mrb[0].mxu0
    %v3516 = vadd.f32 %v2960, %v3515
    %v3517 = vpop.f32.mrb[0].mxu0
    %3518 = vdwg.mxu0
    %v3520 = vrot.slane %v3376, 4
    %v3522 = vadd.f32 %v2599, %v3520
    %v3523 = vxor.u32 %v3522, 2147483648
    %v3524 = vmul.f32 %v3523, 1.442695
    %v3525 = vpow.pop %v3524
    %v3526 = vadd.f32 %v3525, 1.0
    %v3527 = vrcp.pop %v3526
    %v3528 = vmul.f32 1.0, %v3527
    %v3530 = vrot.slane %v3446, 4
    %v3532 = vadd.f32 %v2687, %v3530
    %v3533 = vxor.u32 %v3532, 2147483648
    %v3534 = vmul.f32 %v3533, 1.442695
    %v3535 = vpow.pop %v3534
    %v3536 = vadd.f32 %v3535, 1.0
    %v3537 = vrcp.pop %v3536
    %v3538 = vmul.f32 1.0, %v3537
    %v3540 = vrot.slane %v3516, 4
    %v3542 = vmul.f32 %v3528, %v3540
    %v3543 = vadd.f32 %v2775, %v3542
    %v3544 = vtanh.pop %v3543
    %v3545 = vsub.f32 1.0, %v3538
    %v3546 = vmul.f32 %v3545, %v3544
    %v3547 = vrot.slane %v3305, 4
    %v3549 = vmul.f32 %v3538, %v3547
    %v3550 = vadd.f32 %v3546, %v3549
    %v3552 = vrot.slane %v3550, 4
    %v3554 = vmul.f32 %v1188, %v3552
    %v3555 = vmul.f32 %v1198, %v3305
    %v3556 = vadd.f32 %v3554, %v3555
    %v3558 = vsel %vm137, %v3556, 0
    %3560 = vmatprep.subr.mxu0 0.0
    %3561 = vmatpush1.msra.mxu0 %v2784
    %3562 = vmatprep.subr.mxu0 0.0
    %3563 = vmatpush1.msra.mxu0 %v2785
    %3564 = vmatprep.subr.mxu0 0.0
    %3565 = vmatpush1.msra.mxu0 %v2786
    %3566 = vmatprep.subr.mxu0 0.0
    %3567 = vmatpush1.msra.mxu0 %v2787
    %3568 = vmatprep.subr.mxu0 0.0
    %3569 = vmatpush1.msra.mxu0 0.0
    %3570 = vmatprep.subr.mxu0 0.0
    %3571 = vmatpush1.msra.mxu0 0.0
    %3572 = vmatprep.subr.mxu0 0.0
    %3573 = vmatpush1.msra.mxu0 0.0
    %3574 = vmatprep.subr.mxu0 0.0
    %3575 = vmatpush1.msra.mxu0 0.0
    %3576 = vmatprep.subr.mxu0 0.0
    %3577 = vmatpush1.msra.mxu0 0.0
    %3578 = vmatprep.subr.mxu0 0.0
    %3579 = vmatpush1.msra.mxu0 0.0
    %3580 = vmatprep.subr.mxu0 0.0
    %3581 = vmatpush1.msra.mxu0 0.0
    %3582 = vmatprep.subr.mxu0 0.0
    %3583 = vmatpush1.msra.mxu0 0.0
    %3584 = vmatprep.subr.mxu0 0.0
    %3585 = vmatpush1.msra.mxu0 0.0
    %3586 = vmatprep.subr.mxu0 0.0
    %3587 = vmatpush1.msra.mxu0 0.0
    %3588 = vmatprep.subr.mxu0 0.0
    %3589 = vmatpush1.msra.mxu0 0.0
    %3590 = vmatprep.subr.mxu0 0.0
    %3591 = vmatpush1.msra.mxu0 0.0
    %3592 = vmatprep.subr.mxu0 0.0
    %3593 = vmatpush1.msra.mxu0 0.0
    %3594 = vmatprep.subr.mxu0 0.0
    %3595 = vmatpush1.msra.mxu0 0.0
    %3596 = vmatprep.subr.mxu0 0.0
    %3597 = vmatpush1.msra.mxu0 0.0
    %3598 = vmatprep.subr.mxu0 0.0
    %3599 = vmatpush1.msra.mxu0 0.0
    %3600 = vmatprep.subr.mxu0 0.0
    %3601 = vmatpush1.msra.mxu0 0.0
    %3602 = vmatprep.subr.mxu0 0.0
    %3603 = vmatpush1.msra.mxu0 0.0
    %3604 = vmatprep.subr.mxu0 0.0
    %3605 = vmatpush1.msra.mxu0 0.0
    %3606 = vmatprep.subr.mxu0 0.0
    %3607 = vmatpush1.msra.mxu0 0.0
    %3608 = vmatprep.subr.mxu0 0.0
    %3609 = vmatpush1.msra.mxu0 0.0
    %3610 = vmatprep.subr.mxu0 0.0
    %3611 = vmatpush1.msra.mxu0 0.0
    %3612 = vmatprep.subr.mxu0 0.0
    %3613 = vmatpush1.msra.mxu0 0.0
    %3614 = vmatprep.subr.mxu0 0.0
    %3615 = vmatpush1.msra.mxu0 0.0
    %3616 = vmatprep.subr.mxu0 0.0
    %3617 = vmatpush1.msra.mxu0 0.0
    %3618 = vmatprep.subr.mxu0 0.0
    %3619 = vmatpush1.msra.mxu0 0.0
    %3620 = vmatprep.subr.mxu0 0.0
    %3621 = vmatpush1.msra.mxu0 0.0
    %3622 = vmatprep.subr.mxu0 0.0
    %3623 = vmatpush1.msra.mxu0 0.0
    %3624 = vmatprep.mubr.f32.mxu0 0.0
    %3625 = vmatmul.mubr.f32.gmra.mrb[0].mxu0 %v3558
    %v3626 = vpop.f32.mrb[0].mxu0
    %v3627 = vadd.f32 %v2808, %v3626
    %v3628 = vpop.f32.mrb[0].mxu0
    %3629 = vdwg.mxu0
    %3630 = vmatprep.subr.mxu0 0.0
    %3631 = vmatpush1.msra.mxu0 %v2789
    %3632 = vmatprep.subr.mxu0 0.0
    %3633 = vmatpush1.msra.mxu0 %v2790
    %3634 = vmatprep.subr.mxu0 0.0
    %3635 = vmatpush1.msra.mxu0 %v2791
    %3636 = vmatprep.subr.mxu0 0.0
    %3637 = vmatpush1.msra.mxu0 %v2792
    %3638 = vmatprep.subr.mxu0 0.0
    %3639 = vmatpush1.msra.mxu0 0.0
    %3640 = vmatprep.subr.mxu0 0.0
    %3641 = vmatpush1.msra.mxu0 0.0
    %3642 = vmatprep.subr.mxu0 0.0
    %3643 = vmatpush1.msra.mxu0 0.0
    %3644 = vmatprep.subr.mxu0 0.0
    %3645 = vmatpush1.msra.mxu0 0.0
    %3646 = vmatprep.subr.mxu0 0.0
    %3647 = vmatpush1.msra.mxu0 0.0
    %3648 = vmatprep.subr.mxu0 0.0
    %3649 = vmatpush1.msra.mxu0 0.0
    %3650 = vmatprep.subr.mxu0 0.0
    %3651 = vmatpush1.msra.mxu0 0.0
    %3652 = vmatprep.subr.mxu0 0.0
    %3653 = vmatpush1.msra.mxu0 0.0
    %3654 = vmatprep.subr.mxu0 0.0
    %3655 = vmatpush1.msra.mxu0 0.0
    %3656 = vmatprep.subr.mxu0 0.0
    %3657 = vmatpush1.msra.mxu0 0.0
    %3658 = vmatprep.subr.mxu0 0.0
    %3659 = vmatpush1.msra.mxu0 0.0
    %3660 = vmatprep.subr.mxu0 0.0
    %3661 = vmatpush1.msra.mxu0 0.0
    %3662 = vmatprep.subr.mxu0 0.0
    %3663 = vmatpush1.msra.mxu0 0.0
    %3664 = vmatprep.subr.mxu0 0.0
    %3665 = vmatpush1.msra.mxu0 0.0
    %3666 = vmatprep.subr.mxu0 0.0
    %3667 = vmatpush1.msra.mxu0 0.0
    %3668 = vmatprep.subr.mxu0 0.0
    %3669 = vmatpush1.msra.mxu0 0.0
    %3670 = vmatprep.subr.mxu0 0.0
    %3671 = vmatpush1.msra.mxu0 0.0
    %3672 = vmatprep.subr.mxu0 0.0
    %3673 = vmatpush1.msra.mxu0 0.0
    %3674 = vmatprep.subr.mxu0 0.0
    %3675 = vmatpush1.msra.mxu0 0.0
    %3676 = vmatprep.subr.mxu0 0.0
    %3677 = vmatpush1.msra.mxu0 0.0
    %3678 = vmatprep.subr.mxu0 0.0
    %3679 = vmatpush1.msra.mxu0 0.0
    %3680 = vmatprep.subr.mxu0 0.0
    %3681 = vmatpush1.msra.mxu0 0.0
    %3682 = vmatprep.subr.mxu0 0.0
    %3683 = vmatpush1.msra.mxu0 0.0
    %3684 = vmatprep.subr.mxu0 0.0
    %3685 = vmatpush1.msra.mxu0 0.0
    %3686 = vmatprep.subr.mxu0 0.0
    %3687 = vmatpush1.msra.mxu0 0.0
    %3688 = vmatprep.subr.mxu0 0.0
    %3689 = vmatpush1.msra.mxu0 0.0
    %3690 = vmatprep.subr.mxu0 0.0
    %3691 = vmatpush1.msra.mxu0 0.0
    %3692 = vmatprep.subr.mxu0 0.0
    %3693 = vmatpush1.msra.mxu0 0.0
    %3694 = vmatprep.mubr.f32.mxu0 0.0
    %3695 = vmatmul.mubr.f32.gmra.mrb[0].mxu0 %v3558
    %v3696 = vpop.f32.mrb[0].mxu0
    %v3697 = vadd.f32 %v2884, %v3696
    %v3698 = vpop.f32.mrb[0].mxu0
    %3699 = vdwg.mxu0
    %3700 = vmatprep.subr.mxu0 0.0
    %3701 = vmatpush1.msra.mxu0 %v2794
    %3702 = vmatprep.subr.mxu0 0.0
    %3703 = vmatpush1.msra.mxu0 %v2795
    %3704 = vmatprep.subr.mxu0 0.0
    %3705 = vmatpush1.msra.mxu0 %v2796
    %3706 = vmatprep.subr.mxu0 0.0
    %3707 = vmatpush1.msra.mxu0 %v2797
    %3708 = vmatprep.subr.mxu0 0.0
    %3709 = vmatpush1.msra.mxu0 0.0
    %3710 = vmatprep.subr.mxu0 0.0
    %3711 = vmatpush1.msra.mxu0 0.0
    %3712 = vmatprep.subr.mxu0 0.0
    %3713 = vmatpush1.msra.mxu0 0.0
    %3714 = vmatprep.subr.mxu0 0.0
    %3715 = vmatpush1.msra.mxu0 0.0
    %3716 = vmatprep.subr.mxu0 0.0
    %3717 = vmatpush1.msra.mxu0 0.0
    %3718 = vmatprep.subr.mxu0 0.0
    %3719 = vmatpush1.msra.mxu0 0.0
    %3720 = vmatprep.subr.mxu0 0.0
    %3721 = vmatpush1.msra.mxu0 0.0
    %3722 = vmatprep.subr.mxu0 0.0
    %3723 = vmatpush1.msra.mxu0 0.0
    %3724 = vmatprep.subr.mxu0 0.0
    %3725 = vmatpush1.msra.mxu0 0.0
    %3726 = vmatprep.subr.mxu0 0.0
    %3727 = vmatpush1.msra.mxu0 0.0
    %3728 = vmatprep.subr.mxu0 0.0
    %3729 = vmatpush1.msra.mxu0 0.0
    %3730 = vmatprep.subr.mxu0 0.0
    %3731 = vmatpush1.msra.mxu0 0.0
    %3732 = vmatprep.subr.mxu0 0.0
    %3733 = vmatpush1.msra.mxu0 0.0
    %3734 = vmatprep.subr.mxu0 0.0
    %3735 = vmatpush1.msra.mxu0 0.0
    %3736 = vmatprep.subr.mxu0 0.0
    %3737 = vmatpush1.msra.mxu0 0.0
    %3738 = vmatprep.subr.mxu0 0.0
    %3739 = vmatpush1.msra.mxu0 0.0
    %3740 = vmatprep.subr.mxu0 0.0
    %3741 = vmatpush1.msra.mxu0 0.0
    %3742 = vmatprep.subr.mxu0 0.0
    %3743 = vmatpush1.msra.mxu0 0.0
    %3744 = vmatprep.subr.mxu0 0.0
    %3745 = vmatpush1.msra.mxu0 0.0
    %3746 = vmatprep.subr.mxu0 0.0
    %3747 = vmatpush1.msra.mxu0 0.0
    %3748 = vmatprep.subr.mxu0 0.0
    %3749 = vmatpush1.msra.mxu0 0.0
    %3750 = vmatprep.subr.mxu0 0.0
    %3751 = vmatpush1.msra.mxu0 0.0
    %3752 = vmatprep.subr.mxu0 0.0
    %3753 = vmatpush1.msra.mxu0 0.0
    %3754 = vmatprep.subr.mxu0 0.0
    %3755 = vmatpush1.msra.mxu0 0.0
    %3756 = vmatprep.subr.mxu0 0.0
    %3757 = vmatpush1.msra.mxu0 0.0
    %3758 = vmatprep.subr.mxu0 0.0
    %3759 = vmatpush1.msra.mxu0 0.0
    %3760 = vmatprep.subr.mxu0 0.0
    %3761 = vmatpush1.msra.mxu0 0.0
    %3762 = vmatprep.subr.mxu0 0.0
    %3763 = vmatpush1.msra.mxu0 0.0
    %3764 = vmatprep.mubr.f32.mxu0 0.0
    %3765 = vmatmul.mubr.f32.gmra.mrb[0].mxu0 %v3558
    %v3766 = vpop.f32.mrb[0].mxu0
    %v3767 = vadd.f32 %v2960, %v3766
    %v3768 = vpop.f32.mrb[0].mxu0
    %3769 = vdwg.mxu0
    %v3771 = vrot.slane %v3627, 2
    %v3773 = vadd.f32 %v2599, %v3771
    %v3774 = vxor.u32 %v3773, 2147483648
    %v3775 = vmul.f32 %v3774, 1.442695
    %v3776 = vpow.pop %v3775
    %v3777 = vadd.f32 %v3776, 1.0
    %v3778 = vrcp.pop %v3777
    %v3779 = vmul.f32 1.0, %v3778
    %v3781 = vrot.slane %v3697, 2
    %v3783 = vadd.f32 %v2687, %v3781
    %v3784 = vxor.u32 %v3783, 2147483648
    %v3785 = vmul.f32 %v3784, 1.442695
    %v3786 = vpow.pop %v3785
    %v3787 = vadd.f32 %v3786, 1.0
    %v3788 = vrcp.pop %v3787
    %v3789 = vmul.f32 1.0, %v3788
    %v3791 = vrot.slane %v3767, 2
    %v3793 = vmul.f32 %v3779, %v3791
    %v3794 = vadd.f32 %v2775, %v3793
    %v3795 = vtanh.pop %v3794
    %v3796 = vsub.f32 1.0, %v3789
    %v3797 = vmul.f32 %v3796, %v3795
    %v3798 = vrot.slane %v3556, 2
    %v3800 = vmul.f32 %v3789, %v3798
    %v3801 = vadd.f32 %v3797, %v3800
    %v3803 = vrot.slane %v3801, 6
    %v3805 = vmul.f32 %v1449, %v3803
    %v3806 = vmul.f32 %v1459, %v3556
    %v3807 = vadd.f32 %v3805, %v3806
    %v3809 = vsel %vm137, %v3807, 0
    %3811 = vmatprep.subr.mxu0 0.0
    %3812 = vmatpush1.msra.mxu0 %v2784
    %3813 = vmatprep.subr.mxu0 0.0
    %3814 = vmatpush1.msra.mxu0 %v2785
    %3815 = vmatprep.subr.mxu0 0.0
    %3816 = vmatpush1.msra.mxu0 %v2786
    %3817 = vmatprep.subr.mxu0 0.0
    %3818 = vmatpush1.msra.mxu0 %v2787
    %3819 = vmatprep.subr.mxu0 0.0
    %3820 = vmatpush1.msra.mxu0 0.0
    %3821 = vmatprep.subr.mxu0 0.0
    %3822 = vmatpush1.msra.mxu0 0.0
    %3823 = vmatprep.subr.mxu0 0.0
    %3824 = vmatpush1.msra.mxu0 0.0
    %3825 = vmatprep.subr.mxu0 0.0
    %3826 = vmatpush1.msra.mxu0 0.0
    %3827 = vmatprep.subr.mxu0 0.0
    %3828 = vmatpush1.msra.mxu0 0.0
    %3829 = vmatprep.subr.mxu0 0.0
    %3830 = vmatpush1.msra.mxu0 0.0
    %3831 = vmatprep.subr.mxu0 0.0
    %3832 = vmatpush1.msra.mxu0 0.0
    %3833 = vmatprep.subr.mxu0 0.0
    %3834 = vmatpush1.msra.mxu0 0.0
    %3835 = vmatprep.subr.mxu0 0.0
    %3836 = vmatpush1.msra.mxu0 0.0
    %3837 = vmatprep.subr.mxu0 0.0
    %3838 = vmatpush1.msra.mxu0 0.0
    %3839 = vmatprep.subr.mxu0 0.0
    %3840 = vmatpush1.msra.mxu0 0.0
    %3841 = vmatprep.subr.mxu0 0.0
    %3842 = vmatpush1.msra.mxu0 0.0
    %3843 = vmatprep.subr.mxu0 0.0
    %3844 = vmatpush1.msra.mxu0 0.0
    %3845 = vmatprep.subr.mxu0 0.0
    %3846 = vmatpush1.msra.mxu0 0.0
    %3847 = vmatprep.subr.mxu0 0.0
    %3848 = vmatpush1.msra.mxu0 0.0
    %3849 = vmatprep.subr.mxu0 0.0
    %3850 = vmatpush1.msra.mxu0 0.0
    %3851 = vmatprep.subr.mxu0 0.0
    %3852 = vmatpush1.msra.mxu0 0.0
    %3853 = vmatprep.subr.mxu0 0.0
    %3854 = vmatpush1.msra.mxu0 0.0
    %3855 = vmatprep.subr.mxu0 0.0
    %3856 = vmatpush1.msra.mxu0 0.0
    %3857 = vmatprep.subr.mxu0 0.0
    %3858 = vmatpush1.msra.mxu0 0.0
    %3859 = vmatprep.subr.mxu0 0.0
    %3860 = vmatpush1.msra.mxu0 0.0
    %3861 = vmatprep.subr.mxu0 0.0
    %3862 = vmatpush1.msra.mxu0 0.0
    %3863 = vmatprep.subr.mxu0 0.0
    %3864 = vmatpush1.msra.mxu0 0.0
    %3865 = vmatprep.subr.mxu0 0.0
    %3866 = vmatpush1.msra.mxu0 0.0
    %3867 = vmatprep.subr.mxu0 0.0
    %3868 = vmatpush1.msra.mxu0 0.0
    %3869 = vmatprep.subr.mxu0 0.0
    %3870 = vmatpush1.msra.mxu0 0.0
    %3871 = vmatprep.subr.mxu0 0.0
    %3872 = vmatpush1.msra.mxu0 0.0
    %3873 = vmatprep.subr.mxu0 0.0
    %3874 = vmatpush1.msra.mxu0 0.0
    %3875 = vmatprep.mubr.f32.mxu0 0.0
    %3876 = vmatmul.mubr.f32.gmra.mrb[0].mxu0 %v3809
    %v3877 = vpop.f32.mrb[0].mxu0
    %v3878 = vadd.f32 %v2808, %v3877
    %v3879 = vpop.f32.mrb[0].mxu0
    %3880 = vdwg.mxu0
    %3881 = vmatprep.subr.mxu0 0.0
    %3882 = vmatpush1.msra.mxu0 %v2789
    %3883 = vmatprep.subr.mxu0 0.0
    %3884 = vmatpush1.msra.mxu0 %v2790
    %3885 = vmatprep.subr.mxu0 0.0
    %3886 = vmatpush1.msra.mxu0 %v2791
    %3887 = vmatprep.subr.mxu0 0.0
    %3888 = vmatpush1.msra.mxu0 %v2792
    %3889 = vmatprep.subr.mxu0 0.0
    %3890 = vmatpush1.msra.mxu0 0.0
    %3891 = vmatprep.subr.mxu0 0.0
    %3892 = vmatpush1.msra.mxu0 0.0
    %3893 = vmatprep.subr.mxu0 0.0
    %3894 = vmatpush1.msra.mxu0 0.0
    %3895 = vmatprep.subr.mxu0 0.0
    %3896 = vmatpush1.msra.mxu0 0.0
    %3897 = vmatprep.subr.mxu0 0.0
    %3898 = vmatpush1.msra.mxu0 0.0
    %3899 = vmatprep.subr.mxu0 0.0
    %3900 = vmatpush1.msra.mxu0 0.0
    %3901 = vmatprep.subr.mxu0 0.0
    %3902 = vmatpush1.msra.mxu0 0.0
    %3903 = vmatprep.subr.mxu0 0.0
    %3904 = vmatpush1.msra.mxu0 0.0
    %3905 = vmatprep.subr.mxu0 0.0
    %3906 = vmatpush1.msra.mxu0 0.0
    %3907 = vmatprep.subr.mxu0 0.0
    %3908 = vmatpush1.msra.mxu0 0.0
    %3909 = vmatprep.subr.mxu0 0.0
    %3910 = vmatpush1.msra.mxu0 0.0
    %3911 = vmatprep.subr.mxu0 0.0
    %3912 = vmatpush1.msra.mxu0 0.0
    %3913 = vmatprep.subr.mxu0 0.0
    %3914 = vmatpush1.msra.mxu0 0.0
    %3915 = vmatprep.subr.mxu0 0.0
    %3916 = vmatpush1.msra.mxu0 0.0
    %3917 = vmatprep.subr.mxu0 0.0
    %3918 = vmatpush1.msra.mxu0 0.0
    %3919 = vmatprep.subr.mxu0 0.0
    %3920 = vmatpush1.msra.mxu0 0.0
    %3921 = vmatprep.subr.mxu0 0.0
    %3922 = vmatpush1.msra.mxu0 0.0
    %3923 = vmatprep.subr.mxu0 0.0
    %3924 = vmatpush1.msra.mxu0 0.0
    %3925 = vmatprep.subr.mxu0 0.0
    %3926 = vmatpush1.msra.mxu0 0.0
    %3927 = vmatprep.subr.mxu0 0.0
    %3928 = vmatpush1.msra.mxu0 0.0
    %3929 = vmatprep.subr.mxu0 0.0
    %3930 = vmatpush1.msra.mxu0 0.0
    %3931 = vmatprep.subr.mxu0 0.0
    %3932 = vmatpush1.msra.mxu0 0.0
    %3933 = vmatprep.subr.mxu0 0.0
    %3934 = vmatpush1.msra.mxu0 0.0
    %3935 = vmatprep.subr.mxu0 0.0
    %3936 = vmatpush1.msra.mxu0 0.0
    %3937 = vmatprep.subr.mxu0 0.0
    %3938 = vmatpush1.msra.mxu0 0.0
    %3939 = vmatprep.subr.mxu0 0.0
    %3940 = vmatpush1.msra.mxu0 0.0
    %3941 = vmatprep.subr.mxu0 0.0
    %3942 = vmatpush1.msra.mxu0 0.0
    %3943 = vmatprep.subr.mxu0 0.0
    %3944 = vmatpush1.msra.mxu0 0.0
    %3945 = vmatprep.mubr.f32.mxu0 0.0
    %3946 = vmatmul.mubr.f32.gmra.mrb[0].mxu0 %v3809
    %v3947 = vpop.f32.mrb[0].mxu0
    %v3948 = vadd.f32 %v2884, %v3947
    %v3949 = vpop.f32.mrb[0].mxu0
    %3950 = vdwg.mxu0
    %3951 = vmatprep.subr.mxu0 0.0
    %3952 = vmatpush1.msra.mxu0 %v2794
    %3953 = vmatprep.subr.mxu0 0.0
    %3954 = vmatpush1.msra.mxu0 %v2795
    %3955 = vmatprep.subr.mxu0 0.0
    %3956 = vmatpush1.msra.mxu0 %v2796
    %3957 = vmatprep.subr.mxu0 0.0
    %3958 = vmatpush1.msra.mxu0 %v2797
    %3959 = vmatprep.subr.mxu0 0.0
    %3960 = vmatpush1.msra.mxu0 0.0
    %3961 = vmatprep.subr.mxu0 0.0
    %3962 = vmatpush1.msra.mxu0 0.0
    %3963 = vmatprep.subr.mxu0 0.0
    %3964 = vmatpush1.msra.mxu0 0.0
    %3965 = vmatprep.subr.mxu0 0.0
    %3966 = vmatpush1.msra.mxu0 0.0
    %3967 = vmatprep.subr.mxu0 0.0
    %3968 = vmatpush1.msra.mxu0 0.0
    %3969 = vmatprep.subr.mxu0 0.0
    %3970 = vmatpush1.msra.mxu0 0.0
    %3971 = vmatprep.subr.mxu0 0.0
    %3972 = vmatpush1.msra.mxu0 0.0
    %3973 = vmatprep.subr.mxu0 0.0
    %3974 = vmatpush1.msra.mxu0 0.0
    %3975 = vmatprep.subr.mxu0 0.0
    %3976 = vmatpush1.msra.mxu0 0.0
    %3977 = vmatprep.subr.mxu0 0.0
    %3978 = vmatpush1.msra.mxu0 0.0
    %3979 = vmatprep.subr.mxu0 0.0
    %3980 = vmatpush1.msra.mxu0 0.0
    %3981 = vmatprep.subr.mxu0 0.0
    %3982 = vmatpush1.msra.mxu0 0.0
    %3983 = vmatprep.subr.mxu0 0.0
    %3984 = vmatpush1.msra.mxu0 0.0
    %3985 = vmatprep.subr.mxu0 0.0
    %3986 = vmatpush1.msra.mxu0 0.0
    %3987 = vmatprep.subr.mxu0 0.0
    %3988 = vmatpush1.msra.mxu0 0.0
    %3989 = vmatprep.subr.mxu0 0.0
    %3990 = vmatpush1.msra.mxu0 0.0
    %3991 = vmatprep.subr.mxu0 0.0
    %3992 = vmatpush1.msra.mxu0 0.0
    %3993 = vmatprep.subr.mxu0 0.0
    %3994 = vmatpush1.msra.mxu0 0.0
    %3995 = vmatprep.subr.mxu0 0.0
    %3996 = vmatpush1.msra.mxu0 0.0
    %3997 = vmatprep.subr.mxu0 0.0
    %3998 = vmatpush1.msra.mxu0 0.0
    %3999 = vmatprep.subr.mxu0 0.0
    %4000 = vmatpush1.msra.mxu0 0.0
    %4001 = vmatprep.subr.mxu0 0.0
    %4002 = vmatpush1.msra.mxu0 0.0
    %4003 = vmatprep.subr.mxu0 0.0
    %4004 = vmatpush1.msra.mxu0 0.0
    %4005 = vmatprep.subr.mxu0 0.0
    %4006 = vmatpush1.msra.mxu0 0.0
    %4007 = vmatprep.subr.mxu0 0.0
    %4008 = vmatpush1.msra.mxu0 0.0
    %4009 = vmatprep.subr.mxu0 0.0
    %4010 = vmatpush1.msra.mxu0 0.0
    %4011 = vmatprep.subr.mxu0 0.0
    %4012 = vmatpush1.msra.mxu0 0.0
    %4013 = vmatprep.subr.mxu0 0.0
    %4014 = vmatpush1.msra.mxu0 0.0
    %4015 = vmatprep.mubr.f32.mxu0 0.0
    %4016 = vmatmul.mubr.f32.gmra.mrb[0].mxu0 %v3809
    %v4017 = vpop.f32.mrb[0].mxu0
    %v4018 = vadd.f32 %v2960, %v4017
    %v4019 = vpop.f32.mrb[0].mxu0
    %4020 = vdwg.mxu0
    %v4021 = vadd.f32 %v2604, %v3878
    %v4022 = vxor.u32 %v4021, 2147483648
    %v4023 = vmul.f32 %v4022, 1.442695
    %v4024 = vpow.pop %v4023
    %v4025 = vadd.f32 %v4024, 1.0
    %v4026 = vrcp.pop %v4025
    %v4027 = vmul.f32 1.0, %v4026
    %v4028 = vadd.f32 %v2692, %v3948
    %v4029 = vxor.u32 %v4028, 2147483648
    %v4030 = vmul.f32 %v4029, 1.442695
    %v4031 = vpow.pop %v4030
    %v4032 = vadd.f32 %v4031, 1.0
    %v4033 = vrcp.pop %v4032
    %v4034 = vmul.f32 1.0, %v4033
    %v4035 = vmul.f32 %v4027, %v4018
    %v4036 = vadd.f32 %v2780, %v4035
    %v4037 = vtanh.pop %v4036
    %v4038 = vsub.f32 1.0, %v4034
    %v4039 = vmul.f32 %v4038, %v4037
    %v4040 = vmul.f32 %v4034, %v3807
    %v4041 = vadd.f32 %v4039, %v4040
    %v4042 = vmul.f32 %v1700, %v4041
    %v4043 = vmul.f32 %v1707, %v3807
    %v4044 = vadd.f32 %v4042, %v4043
    %v4046 = vsel %vm137, %v4044, 0
    %4048 = vmatprep.subr.mxu0 0.0
    %4049 = vmatpush1.msra.mxu0 %v2784
    %4050 = vmatprep.subr.mxu0 0.0
    %4051 = vmatpush1.msra.mxu0 %v2785
    %4052 = vmatprep.subr.mxu0 0.0
    %4053 = vmatpush1.msra.mxu0 %v2786
    %4054 = vmatprep.subr.mxu0 0.0
    %4055 = vmatpush1.msra.mxu0 %v2787
    %4056 = vmatprep.subr.mxu0 0.0
    %4057 = vmatpush1.msra.mxu0 0.0
    %4058 = vmatprep.subr.mxu0 0.0
    %4059 = vmatpush1.msra.mxu0 0.0
    %4060 = vmatprep.subr.mxu0 0.0
    %4061 = vmatpush1.msra.mxu0 0.0
    %4062 = vmatprep.subr.mxu0 0.0
    %4063 = vmatpush1.msra.mxu0 0.0
    %4064 = vmatprep.subr.mxu0 0.0
    %4065 = vmatpush1.msra.mxu0 0.0
    %4066 = vmatprep.subr.mxu0 0.0
    %4067 = vmatpush1.msra.mxu0 0.0
    %4068 = vmatprep.subr.mxu0 0.0
    %4069 = vmatpush1.msra.mxu0 0.0
    %4070 = vmatprep.subr.mxu0 0.0
    %4071 = vmatpush1.msra.mxu0 0.0
    %4072 = vmatprep.subr.mxu0 0.0
    %4073 = vmatpush1.msra.mxu0 0.0
    %4074 = vmatprep.subr.mxu0 0.0
    %4075 = vmatpush1.msra.mxu0 0.0
    %4076 = vmatprep.subr.mxu0 0.0
    %4077 = vmatpush1.msra.mxu0 0.0
    %4078 = vmatprep.subr.mxu0 0.0
    %4079 = vmatpush1.msra.mxu0 0.0
    %4080 = vmatprep.subr.mxu0 0.0
    %4081 = vmatpush1.msra.mxu0 0.0
    %4082 = vmatprep.subr.mxu0 0.0
    %4083 = vmatpush1.msra.mxu0 0.0
    %4084 = vmatprep.subr.mxu0 0.0
    %4085 = vmatpush1.msra.mxu0 0.0
    %4086 = vmatprep.subr.mxu0 0.0
    %4087 = vmatpush1.msra.mxu0 0.0
    %4088 = vmatprep.subr.mxu0 0.0
    %4089 = vmatpush1.msra.mxu0 0.0
    %4090 = vmatprep.subr.mxu0 0.0
    %4091 = vmatpush1.msra.mxu0 0.0
    %4092 = vmatprep.subr.mxu0 0.0
    %4093 = vmatpush1.msra.mxu0 0.0
    %4094 = vmatprep.subr.mxu0 0.0
    %4095 = vmatpush1.msra.mxu0 0.0
    %4096 = vmatprep.subr.mxu0 0.0
    %4097 = vmatpush1.msra.mxu0 0.0
    %4098 = vmatprep.subr.mxu0 0.0
    %4099 = vmatpush1.msra.mxu0 0.0
    %4100 = vmatprep.subr.mxu0 0.0
    %4101 = vmatpush1.msra.mxu0 0.0
    %4102 = vmatprep.subr.mxu0 0.0
    %4103 = vmatpush1.msra.mxu0 0.0
    %4104 = vmatprep.subr.mxu0 0.0
    %4105 = vmatpush1.msra.mxu0 0.0
    %4106 = vmatprep.subr.mxu0 0.0
    %4107 = vmatpush1.msra.mxu0 0.0
    %4108 = vmatprep.subr.mxu0 0.0
    %4109 = vmatpush1.msra.mxu0 0.0
    %4110 = vmatprep.subr.mxu0 0.0
    %4111 = vmatpush1.msra.mxu0 0.0
    %4112 = vmatprep.mubr.f32.mxu0 0.0
    %4113 = vmatmul.mubr.f32.gmra.mrb[0].mxu0 %v4046
    %v4114 = vpop.f32.mrb[0].mxu0
    %v4115 = vadd.f32 %v2808, %v4114
    %v4116 = vpop.f32.mrb[0].mxu0
    %4117 = vdwg.mxu0
    %4118 = vmatprep.subr.mxu0 0.0
    %4119 = vmatpush1.msra.mxu0 %v2789
    %4120 = vmatprep.subr.mxu0 0.0
    %4121 = vmatpush1.msra.mxu0 %v2790
    %4122 = vmatprep.subr.mxu0 0.0
    %4123 = vmatpush1.msra.mxu0 %v2791
    %4124 = vmatprep.subr.mxu0 0.0
    %4125 = vmatpush1.msra.mxu0 %v2792
    %4126 = vmatprep.subr.mxu0 0.0
    %4127 = vmatpush1.msra.mxu0 0.0
    %4128 = vmatprep.subr.mxu0 0.0
    %4129 = vmatpush1.msra.mxu0 0.0
    %4130 = vmatprep.subr.mxu0 0.0
    %4131 = vmatpush1.msra.mxu0 0.0
    %4132 = vmatprep.subr.mxu0 0.0
    %4133 = vmatpush1.msra.mxu0 0.0
    %4134 = vmatprep.subr.mxu0 0.0
    %4135 = vmatpush1.msra.mxu0 0.0
    %4136 = vmatprep.subr.mxu0 0.0
    %4137 = vmatpush1.msra.mxu0 0.0
    %4138 = vmatprep.subr.mxu0 0.0
    %4139 = vmatpush1.msra.mxu0 0.0
    %4140 = vmatprep.subr.mxu0 0.0
    %4141 = vmatpush1.msra.mxu0 0.0
    %4142 = vmatprep.subr.mxu0 0.0
    %4143 = vmatpush1.msra.mxu0 0.0
    %4144 = vmatprep.subr.mxu0 0.0
    %4145 = vmatpush1.msra.mxu0 0.0
    %4146 = vmatprep.subr.mxu0 0.0
    %4147 = vmatpush1.msra.mxu0 0.0
    %4148 = vmatprep.subr.mxu0 0.0
    %4149 = vmatpush1.msra.mxu0 0.0
    %4150 = vmatprep.subr.mxu0 0.0
    %4151 = vmatpush1.msra.mxu0 0.0
    %4152 = vmatprep.subr.mxu0 0.0
    %4153 = vmatpush1.msra.mxu0 0.0
    %4154 = vmatprep.subr.mxu0 0.0
    %4155 = vmatpush1.msra.mxu0 0.0
    %4156 = vmatprep.subr.mxu0 0.0
    %4157 = vmatpush1.msra.mxu0 0.0
    %4158 = vmatprep.subr.mxu0 0.0
    %4159 = vmatpush1.msra.mxu0 0.0
    %4160 = vmatprep.subr.mxu0 0.0
    %4161 = vmatpush1.msra.mxu0 0.0
    %4162 = vmatprep.subr.mxu0 0.0
    %4163 = vmatpush1.msra.mxu0 0.0
    %4164 = vmatprep.subr.mxu0 0.0
    %4165 = vmatpush1.msra.mxu0 0.0
    %4166 = vmatprep.subr.mxu0 0.0
    %4167 = vmatpush1.msra.mxu0 0.0
    %4168 = vmatprep.subr.mxu0 0.0
    %4169 = vmatpush1.msra.mxu0 0.0
    %4170 = vmatprep.subr.mxu0 0.0
    %4171 = vmatpush1.msra.mxu0 0.0
    %4172 = vmatprep.subr.mxu0 0.0
    %4173 = vmatpush1.msra.mxu0 0.0
    %4174 = vmatprep.subr.mxu0 0.0
    %4175 = vmatpush1.msra.mxu0 0.0
    %4176 = vmatprep.subr.mxu0 0.0
    %4177 = vmatpush1.msra.mxu0 0.0
    %4178 = vmatprep.subr.mxu0 0.0
    %4179 = vmatpush1.msra.mxu0 0.0
    %4180 = vmatprep.subr.mxu0 0.0
    %4181 = vmatpush1.msra.mxu0 0.0
    %4182 = vmatprep.mubr.f32.mxu0 0.0
    %4183 = vmatmul.mubr.f32.gmra.mrb[0].mxu0 %v4046
    %v4184 = vpop.f32.mrb[0].mxu0
    %v4185 = vadd.f32 %v2884, %v4184
    %v4186 = vpop.f32.mrb[0].mxu0
    %4187 = vdwg.mxu0
    %4188 = vmatprep.subr.mxu0 0.0
    %4189 = vmatpush1.msra.mxu0 %v2794
    %4190 = vmatprep.subr.mxu0 0.0
    %4191 = vmatpush1.msra.mxu0 %v2795
    %4192 = vmatprep.subr.mxu0 0.0
    %4193 = vmatpush1.msra.mxu0 %v2796
    %4194 = vmatprep.subr.mxu0 0.0
    %4195 = vmatpush1.msra.mxu0 %v2797
    %4196 = vmatprep.subr.mxu0 0.0
    %4197 = vmatpush1.msra.mxu0 0.0
    %4198 = vmatprep.subr.mxu0 0.0
    %4199 = vmatpush1.msra.mxu0 0.0
    %4200 = vmatprep.subr.mxu0 0.0
    %4201 = vmatpush1.msra.mxu0 0.0
    %4202 = vmatprep.subr.mxu0 0.0
    %4203 = vmatpush1.msra.mxu0 0.0
    %4204 = vmatprep.subr.mxu0 0.0
    %4205 = vmatpush1.msra.mxu0 0.0
    %4206 = vmatprep.subr.mxu0 0.0
    %4207 = vmatpush1.msra.mxu0 0.0
    %4208 = vmatprep.subr.mxu0 0.0
    %4209 = vmatpush1.msra.mxu0 0.0
    %4210 = vmatprep.subr.mxu0 0.0
    %4211 = vmatpush1.msra.mxu0 0.0
    %4212 = vmatprep.subr.mxu0 0.0
    %4213 = vmatpush1.msra.mxu0 0.0
    %4214 = vmatprep.subr.mxu0 0.0
    %4215 = vmatpush1.msra.mxu0 0.0
    %4216 = vmatprep.subr.mxu0 0.0
    %4217 = vmatpush1.msra.mxu0 0.0
    %4218 = vmatprep.subr.mxu0 0.0
    %4219 = vmatpush1.msra.mxu0 0.0
    %4220 = vmatprep.subr.mxu0 0.0
    %4221 = vmatpush1.msra.mxu0 0.0
    %4222 = vmatprep.subr.mxu0 0.0
    %4223 = vmatpush1.msra.mxu0 0.0
    %4224 = vmatprep.subr.mxu0 0.0
    %4225 = vmatpush1.msra.mxu0 0.0
    %4226 = vmatprep.subr.mxu0 0.0
    %4227 = vmatpush1.msra.mxu0 0.0
    %4228 = vmatprep.subr.mxu0 0.0
    %4229 = vmatpush1.msra.mxu0 0.0
    %4230 = vmatprep.subr.mxu0 0.0
    %4231 = vmatpush1.msra.mxu0 0.0
    %4232 = vmatprep.subr.mxu0 0.0
    %4233 = vmatpush1.msra.mxu0 0.0
    %4234 = vmatprep.subr.mxu0 0.0
    %4235 = vmatpush1.msra.mxu0 0.0
    %4236 = vmatprep.subr.mxu0 0.0
    %4237 = vmatpush1.msra.mxu0 0.0
    %4238 = vmatprep.subr.mxu0 0.0
    %4239 = vmatpush1.msra.mxu0 0.0
    %4240 = vmatprep.subr.mxu0 0.0
    %4241 = vmatpush1.msra.mxu0 0.0
    %4242 = vmatprep.subr.mxu0 0.0
    %4243 = vmatpush1.msra.mxu0 0.0
    %4244 = vmatprep.subr.mxu0 0.0
    %4245 = vmatpush1.msra.mxu0 0.0
    %4246 = vmatprep.subr.mxu0 0.0
    %4247 = vmatpush1.msra.mxu0 0.0
    %4248 = vmatprep.subr.mxu0 0.0
    %4249 = vmatpush1.msra.mxu0 0.0
    %4250 = vmatprep.subr.mxu0 0.0
    %4251 = vmatpush1.msra.mxu0 0.0
    %4252 = vmatprep.mubr.f32.mxu0 0.0
    %4253 = vmatmul.mubr.f32.gmra.mrb[0].mxu0 %v4046
    %v4254 = vpop.f32.mrb[0].mxu0
    %v4255 = vadd.f32 %v2960, %v4254
    %v4256 = vpop.f32.mrb[0].mxu0
    %4257 = vdwg.mxu0
    %v4259 = vrot.slane %v4115, 6
    %v4261 = vadd.f32 %v2604, %v4259
    %v4262 = vxor.u32 %v4261, 2147483648
    %v4263 = vmul.f32 %v4262, 1.442695
    %v4264 = vpow.pop %v4263
    %v4265 = vadd.f32 %v4264, 1.0
    %v4266 = vrcp.pop %v4265
    %v4267 = vmul.f32 1.0, %v4266
    %v4269 = vrot.slane %v4185, 6
    %v4271 = vadd.f32 %v2692, %v4269
    %v4272 = vxor.u32 %v4271, 2147483648
    %v4273 = vmul.f32 %v4272, 1.442695
    %v4274 = vpow.pop %v4273
    %v4275 = vadd.f32 %v4274, 1.0
    %v4276 = vrcp.pop %v4275
    %v4277 = vmul.f32 1.0, %v4276
    %v4279 = vrot.slane %v4255, 6
    %v4281 = vmul.f32 %v4267, %v4279
    %v4282 = vadd.f32 %v2780, %v4281
    %v4283 = vtanh.pop %v4282
    %v4284 = vsub.f32 1.0, %v4277
    %v4285 = vmul.f32 %v4284, %v4283
    %v4286 = vrot.slane %v4044, 6
    %v4288 = vmul.f32 %v4277, %v4286
    %v4289 = vadd.f32 %v4285, %v4288
    %v4291 = vrot.slane %v4289, 2
    %v4293 = vmul.f32 %v1958, %v4291
    %v4294 = vmul.f32 %v1968, %v4044
    %v4295 = vadd.f32 %v4293, %v4294
    %v4297 = vsel %vm137, %v4295, 0
    %4299 = vmatprep.subr.mxu0 0.0
    %4300 = vmatpush1.msra.mxu0 %v2784
    %4301 = vmatprep.subr.mxu0 0.0
    %4302 = vmatpush1.msra.mxu0 %v2785
    %4303 = vmatprep.subr.mxu0 0.0
    %4304 = vmatpush1.msra.mxu0 %v2786
    %4305 = vmatprep.subr.mxu0 0.0
    %4306 = vmatpush1.msra.mxu0 %v2787
    %4307 = vmatprep.subr.mxu0 0.0
    %4308 = vmatpush1.msra.mxu0 0.0
    %4309 = vmatprep.subr.mxu0 0.0
    %4310 = vmatpush1.msra.mxu0 0.0
    %4311 = vmatprep.subr.mxu0 0.0
    %4312 = vmatpush1.msra.mxu0 0.0
    %4313 = vmatprep.subr.mxu0 0.0
    %4314 = vmatpush1.msra.mxu0 0.0
    %4315 = vmatprep.subr.mxu0 0.0
    %4316 = vmatpush1.msra.mxu0 0.0
    %4317 = vmatprep.subr.mxu0 0.0
    %4318 = vmatpush1.msra.mxu0 0.0
    %4319 = vmatprep.subr.mxu0 0.0
    %4320 = vmatpush1.msra.mxu0 0.0
    %4321 = vmatprep.subr.mxu0 0.0
    %4322 = vmatpush1.msra.mxu0 0.0
    %4323 = vmatprep.subr.mxu0 0.0
    %4324 = vmatpush1.msra.mxu0 0.0
    %4325 = vmatprep.subr.mxu0 0.0
    %4326 = vmatpush1.msra.mxu0 0.0
    %4327 = vmatprep.subr.mxu0 0.0
    %4328 = vmatpush1.msra.mxu0 0.0
    %4329 = vmatprep.subr.mxu0 0.0
    %4330 = vmatpush1.msra.mxu0 0.0
    %4331 = vmatprep.subr.mxu0 0.0
    %4332 = vmatpush1.msra.mxu0 0.0
    %4333 = vmatprep.subr.mxu0 0.0
    %4334 = vmatpush1.msra.mxu0 0.0
    %4335 = vmatprep.subr.mxu0 0.0
    %4336 = vmatpush1.msra.mxu0 0.0
    %4337 = vmatprep.subr.mxu0 0.0
    %4338 = vmatpush1.msra.mxu0 0.0
    %4339 = vmatprep.subr.mxu0 0.0
    %4340 = vmatpush1.msra.mxu0 0.0
    %4341 = vmatprep.subr.mxu0 0.0
    %4342 = vmatpush1.msra.mxu0 0.0
    %4343 = vmatprep.subr.mxu0 0.0
    %4344 = vmatpush1.msra.mxu0 0.0
    %4345 = vmatprep.subr.mxu0 0.0
    %4346 = vmatpush1.msra.mxu0 0.0
    %4347 = vmatprep.subr.mxu0 0.0
    %4348 = vmatpush1.msra.mxu0 0.0
    %4349 = vmatprep.subr.mxu0 0.0
    %4350 = vmatpush1.msra.mxu0 0.0
    %4351 = vmatprep.subr.mxu0 0.0
    %4352 = vmatpush1.msra.mxu0 0.0
    %4353 = vmatprep.subr.mxu0 0.0
    %4354 = vmatpush1.msra.mxu0 0.0
    %4355 = vmatprep.subr.mxu0 0.0
    %4356 = vmatpush1.msra.mxu0 0.0
    %4357 = vmatprep.subr.mxu0 0.0
    %4358 = vmatpush1.msra.mxu0 0.0
    %4359 = vmatprep.subr.mxu0 0.0
    %4360 = vmatpush1.msra.mxu0 0.0
    %4361 = vmatprep.subr.mxu0 0.0
    %4362 = vmatpush1.msra.mxu0 0.0
    %4363 = vmatprep.mubr.f32.mxu0 0.0
    %4364 = vmatmul.mubr.f32.gmra.mrb[0].mxu0 %v4297
    %v4365 = vpop.f32.mrb[0].mxu0
    %v4366 = vadd.f32 %v2808, %v4365
    %v4367 = vpop.f32.mrb[0].mxu0
    %4368 = vdwg.mxu0
    %4369 = vmatprep.subr.mxu0 0.0
    %4370 = vmatpush1.msra.mxu0 %v2789
    %4371 = vmatprep.subr.mxu0 0.0
    %4372 = vmatpush1.msra.mxu0 %v2790
    %4373 = vmatprep.subr.mxu0 0.0
    %4374 = vmatpush1.msra.mxu0 %v2791
    %4375 = vmatprep.subr.mxu0 0.0
    %4376 = vmatpush1.msra.mxu0 %v2792
    %4377 = vmatprep.subr.mxu0 0.0
    %4378 = vmatpush1.msra.mxu0 0.0
    %4379 = vmatprep.subr.mxu0 0.0
    %4380 = vmatpush1.msra.mxu0 0.0
    %4381 = vmatprep.subr.mxu0 0.0
    %4382 = vmatpush1.msra.mxu0 0.0
    %4383 = vmatprep.subr.mxu0 0.0
    %4384 = vmatpush1.msra.mxu0 0.0
    %4385 = vmatprep.subr.mxu0 0.0
    %4386 = vmatpush1.msra.mxu0 0.0
    %4387 = vmatprep.subr.mxu0 0.0
    %4388 = vmatpush1.msra.mxu0 0.0
    %4389 = vmatprep.subr.mxu0 0.0
    %4390 = vmatpush1.msra.mxu0 0.0
    %4391 = vmatprep.subr.mxu0 0.0
    %4392 = vmatpush1.msra.mxu0 0.0
    %4393 = vmatprep.subr.mxu0 0.0
    %4394 = vmatpush1.msra.mxu0 0.0
    %4395 = vmatprep.subr.mxu0 0.0
    %4396 = vmatpush1.msra.mxu0 0.0
    %4397 = vmatprep.subr.mxu0 0.0
    %4398 = vmatpush1.msra.mxu0 0.0
    %4399 = vmatprep.subr.mxu0 0.0
    %4400 = vmatpush1.msra.mxu0 0.0
    %4401 = vmatprep.subr.mxu0 0.0
    %4402 = vmatpush1.msra.mxu0 0.0
    %4403 = vmatprep.subr.mxu0 0.0
    %4404 = vmatpush1.msra.mxu0 0.0
    %4405 = vmatprep.subr.mxu0 0.0
    %4406 = vmatpush1.msra.mxu0 0.0
    %4407 = vmatprep.subr.mxu0 0.0
    %4408 = vmatpush1.msra.mxu0 0.0
    %4409 = vmatprep.subr.mxu0 0.0
    %4410 = vmatpush1.msra.mxu0 0.0
    %4411 = vmatprep.subr.mxu0 0.0
    %4412 = vmatpush1.msra.mxu0 0.0
    %4413 = vmatprep.subr.mxu0 0.0
    %4414 = vmatpush1.msra.mxu0 0.0
    %4415 = vmatprep.subr.mxu0 0.0
    %4416 = vmatpush1.msra.mxu0 0.0
    %4417 = vmatprep.subr.mxu0 0.0
    %4418 = vmatpush1.msra.mxu0 0.0
    %4419 = vmatprep.subr.mxu0 0.0
    %4420 = vmatpush1.msra.mxu0 0.0
    %4421 = vmatprep.subr.mxu0 0.0
    %4422 = vmatpush1.msra.mxu0 0.0
    %4423 = vmatprep.subr.mxu0 0.0
    %4424 = vmatpush1.msra.mxu0 0.0
    %4425 = vmatprep.subr.mxu0 0.0
    %4426 = vmatpush1.msra.mxu0 0.0
    %4427 = vmatprep.subr.mxu0 0.0
    %4428 = vmatpush1.msra.mxu0 0.0
    %4429 = vmatprep.subr.mxu0 0.0
    %4430 = vmatpush1.msra.mxu0 0.0
    %4431 = vmatprep.subr.mxu0 0.0
    %4432 = vmatpush1.msra.mxu0 0.0
    %4433 = vmatprep.mubr.f32.mxu0 0.0
    %4434 = vmatmul.mubr.f32.gmra.mrb[0].mxu0 %v4297
    %v4435 = vpop.f32.mrb[0].mxu0
    %v4436 = vadd.f32 %v2884, %v4435
    %v4437 = vpop.f32.mrb[0].mxu0
    %4438 = vdwg.mxu0
    %4439 = vmatprep.subr.mxu0 0.0
    %4440 = vmatpush1.msra.mxu0 %v2794
    %4441 = vmatprep.subr.mxu0 0.0
    %4442 = vmatpush1.msra.mxu0 %v2795
    %4443 = vmatprep.subr.mxu0 0.0
    %4444 = vmatpush1.msra.mxu0 %v2796
    %4445 = vmatprep.subr.mxu0 0.0
    %4446 = vmatpush1.msra.mxu0 %v2797
    %4447 = vmatprep.subr.mxu0 0.0
    %4448 = vmatpush1.msra.mxu0 0.0
    %4449 = vmatprep.subr.mxu0 0.0
    %4450 = vmatpush1.msra.mxu0 0.0
    %4451 = vmatprep.subr.mxu0 0.0
    %4452 = vmatpush1.msra.mxu0 0.0
    %4453 = vmatprep.subr.mxu0 0.0
    %4454 = vmatpush1.msra.mxu0 0.0
    %4455 = vmatprep.subr.mxu0 0.0
    %4456 = vmatpush1.msra.mxu0 0.0
    %4457 = vmatprep.subr.mxu0 0.0
    %4458 = vmatpush1.msra.mxu0 0.0
    %4459 = vmatprep.subr.mxu0 0.0
    %4460 = vmatpush1.msra.mxu0 0.0
    %4461 = vmatprep.subr.mxu0 0.0
    %4462 = vmatpush1.msra.mxu0 0.0
    %4463 = vmatprep.subr.mxu0 0.0
    %4464 = vmatpush1.msra.mxu0 0.0
    %4465 = vmatprep.subr.mxu0 0.0
    %4466 = vmatpush1.msra.mxu0 0.0
    %4467 = vmatprep.subr.mxu0 0.0
    %4468 = vmatpush1.msra.mxu0 0.0
    %4469 = vmatprep.subr.mxu0 0.0
    %4470 = vmatpush1.msra.mxu0 0.0
    %4471 = vmatprep.subr.mxu0 0.0
    %4472 = vmatpush1.msra.mxu0 0.0
    %4473 = vmatprep.subr.mxu0 0.0
    %4474 = vmatpush1.msra.mxu0 0.0
    %4475 = vmatprep.subr.mxu0 0.0
    %4476 = vmatpush1.msra.mxu0 0.0
    %4477 = vmatprep.subr.mxu0 0.0
    %4478 = vmatpush1.msra.mxu0 0.0
    %4479 = vmatprep.subr.mxu0 0.0
    %4480 = vmatpush1.msra.mxu0 0.0
    %4481 = vmatprep.subr.mxu0 0.0
    %4482 = vmatpush1.msra.mxu0 0.0
    %4483 = vmatprep.subr.mxu0 0.0
    %4484 = vmatpush1.msra.mxu0 0.0
    %4485 = vmatprep.subr.mxu0 0.0
    %4486 = vmatpush1.msra.mxu0 0.0
    %4487 = vmatprep.subr.mxu0 0.0
    %4488 = vmatpush1.msra.mxu0 0.0
    %4489 = vmatprep.subr.mxu0 0.0
    %4490 = vmatpush1.msra.mxu0 0.0
    %4491 = vmatprep.subr.mxu0 0.0
    %4492 = vmatpush1.msra.mxu0 0.0
    %4493 = vmatprep.subr.mxu0 0.0
    %4494 = vmatpush1.msra.mxu0 0.0
    %4495 = vmatprep.subr.mxu0 0.0
    %4496 = vmatpush1.msra.mxu0 0.0
    %4497 = vmatprep.subr.mxu0 0.0
    %4498 = vmatpush1.msra.mxu0 0.0
    %4499 = vmatprep.subr.mxu0 0.0
    %4500 = vmatpush1.msra.mxu0 0.0
    %4501 = vmatprep.subr.mxu0 0.0
    %4502 = vmatpush1.msra.mxu0 0.0
    %4503 = vmatprep.mubr.f32.mxu0 0.0
    %4504 = vmatmul.mubr.f32.gmra.mrb[0].mxu0 %v4297
    %v4505 = vpop.f32.mrb[0].mxu0
    %v4506 = vadd.f32 %v2960, %v4505
    %v4507 = vpop.f32.mrb[0].mxu0
    %4508 = vdwg.mxu0
    %v4510 = vrot.slane %v4366, 4
    %v4512 = vadd.f32 %v2604, %v4510
    %v4513 = vxor.u32 %v4512, 2147483648
    %v4514 = vmul.f32 %v4513, 1.442695
    %v4515 = vpow.pop %v4514
    %v4516 = vadd.f32 %v4515, 1.0
    %v4517 = vrcp.pop %v4516
    %v4518 = vmul.f32 1.0, %v4517
    %v4520 = vrot.slane %v4436, 4
    %v4522 = vadd.f32 %v2692, %v4520
    %v4523 = vxor.u32 %v4522, 2147483648
    %v4524 = vmul.f32 %v4523, 1.442695
    %v4525 = vpow.pop %v4524
    %v4526 = vadd.f32 %v4525, 1.0
    %v4527 = vrcp.pop %v4526
    %v4528 = vmul.f32 1.0, %v4527
    %v4530 = vrot.slane %v4506, 4
    %v4532 = vmul.f32 %v4518, %v4530
    %v4533 = vadd.f32 %v2780, %v4532
    %v4534 = vtanh.pop %v4533
    %v4535 = vsub.f32 1.0, %v4528
    %v4536 = vmul.f32 %v4535, %v4534
    %v4537 = vrot.slane %v4295, 4
    %v4539 = vmul.f32 %v4528, %v4537
    %v4540 = vadd.f32 %v4536, %v4539
    %v4542 = vrot.slane %v4540, 4
    %v4544 = vmul.f32 %v2219, %v4542
    %v4545 = vmul.f32 %v2229, %v4295
    %v4546 = vadd.f32 %v4544, %v4545
    %v4548 = vsel %vm137, %v4546, 0
    %4550 = vmatprep.subr.mxu0 0.0
    %4551 = vmatpush1.msra.mxu0 %v2784
    %4552 = vmatprep.subr.mxu0 0.0
    %4553 = vmatpush1.msra.mxu0 %v2785
    %4554 = vmatprep.subr.mxu0 0.0
    %4555 = vmatpush1.msra.mxu0 %v2786
    %4556 = vmatprep.subr.mxu0 0.0
    %4557 = vmatpush1.msra.mxu0 %v2787
    %4558 = vmatprep.subr.mxu0 0.0
    %4559 = vmatpush1.msra.mxu0 0.0
    %4560 = vmatprep.subr.mxu0 0.0
    %4561 = vmatpush1.msra.mxu0 0.0
    %4562 = vmatprep.subr.mxu0 0.0
    %4563 = vmatpush1.msra.mxu0 0.0
    %4564 = vmatprep.subr.mxu0 0.0
    %4565 = vmatpush1.msra.mxu0 0.0
    %4566 = vmatprep.subr.mxu0 0.0
    %4567 = vmatpush1.msra.mxu0 0.0
    %4568 = vmatprep.subr.mxu0 0.0
    %4569 = vmatpush1.msra.mxu0 0.0
    %4570 = vmatprep.subr.mxu0 0.0
    %4571 = vmatpush1.msra.mxu0 0.0
    %4572 = vmatprep.subr.mxu0 0.0
    %4573 = vmatpush1.msra.mxu0 0.0
    %4574 = vmatprep.subr.mxu0 0.0
    %4575 = vmatpush1.msra.mxu0 0.0
    %4576 = vmatprep.subr.mxu0 0.0
    %4577 = vmatpush1.msra.mxu0 0.0
    %4578 = vmatprep.subr.mxu0 0.0
    %4579 = vmatpush1.msra.mxu0 0.0
    %4580 = vmatprep.subr.mxu0 0.0
    %4581 = vmatpush1.msra.mxu0 0.0
    %4582 = vmatprep.subr.mxu0 0.0
    %4583 = vmatpush1.msra.mxu0 0.0
    %4584 = vmatprep.subr.mxu0 0.0
    %4585 = vmatpush1.msra.mxu0 0.0
    %4586 = vmatprep.subr.mxu0 0.0
    %4587 = vmatpush1.msra.mxu0 0.0
    %4588 = vmatprep.subr.mxu0 0.0
    %4589 = vmatpush1.msra.mxu0 0.0
    %4590 = vmatprep.subr.mxu0 0.0
    %4591 = vmatpush1.msra.mxu0 0.0
    %4592 = vmatprep.subr.mxu0 0.0
    %4593 = vmatpush1.msra.mxu0 0.0
    %4594 = vmatprep.subr.mxu0 0.0
    %4595 = vmatpush1.msra.mxu0 0.0
    %4596 = vmatprep.subr.mxu0 0.0
    %4597 = vmatpush1.msra.mxu0 0.0
    %4598 = vmatprep.subr.mxu0 0.0
    %4599 = vmatpush1.msra.mxu0 0.0
    %4600 = vmatprep.subr.mxu0 0.0
    %4601 = vmatpush1.msra.mxu0 0.0
    %4602 = vmatprep.subr.mxu0 0.0
    %4603 = vmatpush1.msra.mxu0 0.0
    %4604 = vmatprep.subr.mxu0 0.0
    %4605 = vmatpush1.msra.mxu0 0.0
    %4606 = vmatprep.subr.mxu0 0.0
    %4607 = vmatpush1.msra.mxu0 0.0
    %4608 = vmatprep.subr.mxu0 0.0
    %4609 = vmatpush1.msra.mxu0 0.0
    %4610 = vmatprep.subr.mxu0 0.0
    %4611 = vmatpush1.msra.mxu0 0.0
    %4612 = vmatprep.subr.mxu0 0.0
    %4613 = vmatpush1.msra.mxu0 0.0
    %4614 = vmatprep.mubr.f32.mxu0 0.0
    %4615 = vmatmul.mubr.f32.gmra.mrb[0].mxu0 %v4548
    %v4616 = vpop.f32.mrb[0].mxu0
    %v4617 = vadd.f32 %v2808, %v4616
    %v4618 = vpop.f32.mrb[0].mxu0
    %4619 = vdwg.mxu0
    %4620 = vmatprep.subr.mxu0 0.0
    %4621 = vmatpush1.msra.mxu0 %v2789
    %4622 = vmatprep.subr.mxu0 0.0
    %4623 = vmatpush1.msra.mxu0 %v2790
    %4624 = vmatprep.subr.mxu0 0.0
    %4625 = vmatpush1.msra.mxu0 %v2791
    %4626 = vmatprep.subr.mxu0 0.0
    %4627 = vmatpush1.msra.mxu0 %v2792
    %4628 = vmatprep.subr.mxu0 0.0
    %4629 = vmatpush1.msra.mxu0 0.0
    %4630 = vmatprep.subr.mxu0 0.0
    %4631 = vmatpush1.msra.mxu0 0.0
    %4632 = vmatprep.subr.mxu0 0.0
    %4633 = vmatpush1.msra.mxu0 0.0
    %4634 = vmatprep.subr.mxu0 0.0
    %4635 = vmatpush1.msra.mxu0 0.0
    %4636 = vmatprep.subr.mxu0 0.0
    %4637 = vmatpush1.msra.mxu0 0.0
    %4638 = vmatprep.subr.mxu0 0.0
    %4639 = vmatpush1.msra.mxu0 0.0
    %4640 = vmatprep.subr.mxu0 0.0
    %4641 = vmatpush1.msra.mxu0 0.0
    %4642 = vmatprep.subr.mxu0 0.0
    %4643 = vmatpush1.msra.mxu0 0.0
    %4644 = vmatprep.subr.mxu0 0.0
    %4645 = vmatpush1.msra.mxu0 0.0
    %4646 = vmatprep.subr.mxu0 0.0
    %4647 = vmatpush1.msra.mxu0 0.0
    %4648 = vmatprep.subr.mxu0 0.0
    %4649 = vmatpush1.msra.mxu0 0.0
    %4650 = vmatprep.subr.mxu0 0.0
    %4651 = vmatpush1.msra.mxu0 0.0
    %4652 = vmatprep.subr.mxu0 0.0
    %4653 = vmatpush1.msra.mxu0 0.0
    %4654 = vmatprep.subr.mxu0 0.0
    %4655 = vmatpush1.msra.mxu0 0.0
    %4656 = vmatprep.subr.mxu0 0.0
    %4657 = vmatpush1.msra.mxu0 0.0
    %4658 = vmatprep.subr.mxu0 0.0
    %4659 = vmatpush1.msra.mxu0 0.0
    %4660 = vmatprep.subr.mxu0 0.0
    %4661 = vmatpush1.msra.mxu0 0.0
    %4662 = vmatprep.subr.mxu0 0.0
    %4663 = vmatpush1.msra.mxu0 0.0
    %4664 = vmatprep.subr.mxu0 0.0
    %4665 = vmatpush1.msra.mxu0 0.0
    %4666 = vmatprep.subr.mxu0 0.0
    %4667 = vmatpush1.msra.mxu0 0.0
    %4668 = vmatprep.subr.mxu0 0.0
    %4669 = vmatpush1.msra.mxu0 0.0
    %4670 = vmatprep.subr.mxu0 0.0
    %4671 = vmatpush1.msra.mxu0 0.0
    %4672 = vmatprep.subr.mxu0 0.0
    %4673 = vmatpush1.msra.mxu0 0.0
    %4674 = vmatprep.subr.mxu0 0.0
    %4675 = vmatpush1.msra.mxu0 0.0
    %4676 = vmatprep.subr.mxu0 0.0
    %4677 = vmatpush1.msra.mxu0 0.0
    %4678 = vmatprep.subr.mxu0 0.0
    %4679 = vmatpush1.msra.mxu0 0.0
    %4680 = vmatprep.subr.mxu0 0.0
    %4681 = vmatpush1.msra.mxu0 0.0
    %4682 = vmatprep.subr.mxu0 0.0
    %4683 = vmatpush1.msra.mxu0 0.0
    %4684 = vmatprep.mubr.f32.mxu0 0.0
    %4685 = vmatmul.mubr.f32.gmra.mrb[0].mxu0 %v4548
    %v4686 = vpop.f32.mrb[0].mxu0
    %v4687 = vadd.f32 %v2884, %v4686
    %v4688 = vpop.f32.mrb[0].mxu0
    %4689 = vdwg.mxu0
    %4690 = vmatprep.subr.mxu0 0.0
    %4691 = vmatpush1.msra.mxu0 %v2794
    %4692 = vmatprep.subr.mxu0 0.0
    %4693 = vmatpush1.msra.mxu0 %v2795
    %4694 = vmatprep.subr.mxu0 0.0
    %4695 = vmatpush1.msra.mxu0 %v2796
    %4696 = vmatprep.subr.mxu0 0.0
    %4697 = vmatpush1.msra.mxu0 %v2797
    %4698 = vmatprep.subr.mxu0 0.0
    %4699 = vmatpush1.msra.mxu0 0.0
    %4700 = vmatprep.subr.mxu0 0.0
    %4701 = vmatpush1.msra.mxu0 0.0
    %4702 = vmatprep.subr.mxu0 0.0
    %4703 = vmatpush1.msra.mxu0 0.0
    %4704 = vmatprep.subr.mxu0 0.0
    %4705 = vmatpush1.msra.mxu0 0.0
    %4706 = vmatprep.subr.mxu0 0.0
    %4707 = vmatpush1.msra.mxu0 0.0
    %4708 = vmatprep.subr.mxu0 0.0
    %4709 = vmatpush1.msra.mxu0 0.0
    %4710 = vmatprep.subr.mxu0 0.0
    %4711 = vmatpush1.msra.mxu0 0.0
    %4712 = vmatprep.subr.mxu0 0.0
    %4713 = vmatpush1.msra.mxu0 0.0
    %4714 = vmatprep.subr.mxu0 0.0
    %4715 = vmatpush1.msra.mxu0 0.0
    %4716 = vmatprep.subr.mxu0 0.0
    %4717 = vmatpush1.msra.mxu0 0.0
    %4718 = vmatprep.subr.mxu0 0.0
    %4719 = vmatpush1.msra.mxu0 0.0
    %4720 = vmatprep.subr.mxu0 0.0
    %4721 = vmatpush1.msra.mxu0 0.0
    %4722 = vmatprep.subr.mxu0 0.0
    %4723 = vmatpush1.msra.mxu0 0.0
    %4724 = vmatprep.subr.mxu0 0.0
    %4725 = vmatpush1.msra.mxu0 0.0
    %4726 = vmatprep.subr.mxu0 0.0
    %4727 = vmatpush1.msra.mxu0 0.0
    %4728 = vmatprep.subr.mxu0 0.0
    %4729 = vmatpush1.msra.mxu0 0.0
    %4730 = vmatprep.subr.mxu0 0.0
    %4731 = vmatpush1.msra.mxu0 0.0
    %4732 = vmatprep.subr.mxu0 0.0
    %4733 = vmatpush1.msra.mxu0 0.0
    %4734 = vmatprep.subr.mxu0 0.0
    %4735 = vmatpush1.msra.mxu0 0.0
    %4736 = vmatprep.subr.mxu0 0.0
    %4737 = vmatpush1.msra.mxu0 0.0
    %4738 = vmatprep.subr.mxu0 0.0
    %4739 = vmatpush1.msra.mxu0 0.0
    %4740 = vmatprep.subr.mxu0 0.0
    %4741 = vmatpush1.msra.mxu0 0.0
    %4742 = vmatprep.subr.mxu0 0.0
    %4743 = vmatpush1.msra.mxu0 0.0
    %4744 = vmatprep.subr.mxu0 0.0
    %4745 = vmatpush1.msra.mxu0 0.0
    %4746 = vmatprep.subr.mxu0 0.0
    %4747 = vmatpush1.msra.mxu0 0.0
    %4748 = vmatprep.subr.mxu0 0.0
    %4749 = vmatpush1.msra.mxu0 0.0
    %4750 = vmatprep.subr.mxu0 0.0
    %4751 = vmatpush1.msra.mxu0 0.0
    %4752 = vmatprep.subr.mxu0 0.0
    %4753 = vmatpush1.msra.mxu0 0.0
    %4754 = vmatprep.mubr.f32.mxu0 0.0
    %4755 = vmatmul.mubr.f32.gmra.mrb[0].mxu0 %v4548
    %v4756 = vpop.f32.mrb[0].mxu0
    %v4757 = vadd.f32 %v2960, %v4756
    %v4758 = vpop.f32.mrb[0].mxu0
    %4759 = vdwg.mxu0
    %v4761 = vrot.slane %v4617, 2
    %v4763 = vadd.f32 %v2604, %v4761
    %v4764 = vxor.u32 %v4763, 2147483648
    %v4765 = vmul.f32 %v4764, 1.442695
    %v4766 = vpow.pop %v4765
    %v4767 = vadd.f32 %v4766, 1.0
    %v4768 = vrcp.pop %v4767
    %v4769 = vmul.f32 1.0, %v4768
    %v4771 = vrot.slane %v4687, 2
    %v4773 = vadd.f32 %v2692, %v4771
    %v4774 = vxor.u32 %v4773, 2147483648
    %v4775 = vmul.f32 %v4774, 1.442695
    %v4776 = vpow.pop %v4775
    %v4777 = vadd.f32 %v4776, 1.0
    %v4778 = vrcp.pop %v4777
    %v4779 = vmul.f32 1.0, %v4778
    %v4781 = vrot.slane %v4757, 2
    %v4783 = vmul.f32 %v4769, %v4781
    %v4784 = vadd.f32 %v2780, %v4783
    %v4785 = vtanh.pop %v4784
    %v4786 = vsub.f32 1.0, %v4779
    %v4787 = vmul.f32 %v4786, %v4785
    %v4788 = vrot.slane %v4546, 2
    %v4790 = vmul.f32 %v4779, %v4788
    %v4791 = vadd.f32 %v4787, %v4790
    %v4793 = vrot.slane %v4791, 6
    %v4795 = vmul.f32 %v2480, %v4793
    %v4796 = vmul.f32 %v2490, %v4546
    %v4797 = vadd.f32 %v4795, %v4796
    %v4798 = vrot.slane %v3305, 6
    %v4800 = vrot.slane %v3556, 4
    %v4802 = vrot.slane %v3807, 2
    %v4804 = vrot.slane %v4295, 6
    %v4806 = vrot.slane %v4546, 4
    %v4809 = vrot.slane %v4797, 2
    %v4811 = vsel %vm115, %v3054, %v4798
    %v4812 = vsel %vm117, %v4811, %v4800
    %v4813 = vsel %vm119, %v4812, %v4802
    %v4814 = vsel %vm115, %v4044, %v4804
    %v4815 = vsel %vm117, %v4814, %v4806
    %v4816 = vsel %vm119, %v4815, %v4809
    %4818 = vset.pattern.permute.xlu0 0
    %4819 = vperm.xlu0 %4818, %v120
    %v4820 = vpop.permute.xlu0 %4819
    %4823 = vset.pattern.permute.xlu0 0
    %4824 = vperm.xlu0 %4823, %v123
    %v4825 = vpop.permute.xlu0 %4824
    %v4827 = vmul.f32 %v4820, %v4813
    %v4828 = vmul.f32 %v4825, %v4816
    %v4829 = vsub.f32 1.0, %v120
    %v4830 = vsub.f32 1.0, %v123
    %v4831 = vmul.f32 %v4829, -1.0
    %v4832 = vmul.f32 %v4830, -1.0
    %4834 = vset.pattern.permute.xlu0 0
    %4835 = vperm.xlu0 %4834, %v4831
    %v4836 = vpop.permute.xlu0 %4835
    %4839 = vset.pattern.permute.xlu0 0
    %4840 = vperm.xlu0 %4839, %v4832
    %v4841 = vpop.permute.xlu0 %4840
    %v4843 = vadd.f32 %v4827, %v4836
    %v4844 = vadd.f32 %v4828, %v4841
    %v4845 = vld [vmem:[%s6] sm:$0x1]
    %v4847 = vlaneseq
    %v4848 = vshrl.u32 %v4847, 7
    %v4849 = vsub.s32 0, %v4848
    %v4850 = vrot.slane %v4845, %v4849
    %v4852 = vmul.f32 %v4843, %v4850
    %v4853 = vmul.f32 %v4844, %v4850
    %v4854 = vsel %vm137, %v4852, 0.0
    %4855 = vadd.xlane.f32.xlu0 %v4854
    %v4856 = vpop.xlane.xlu0 %4855
    %v4857 = vsel %vm137, %v4853, 0.0
    %4858 = vadd.xlane.f32.xlu0 %v4857
    %v4859 = vpop.xlane.xlu0 %4858
    %v4860 = vld [vmem:[#allocation2] sm:$0x1]
    %v4862 = vlaneseq
    %v4863 = vshrl.u32 %v4862, 7
    %v4864 = vsub.s32 0, %v4863
    %v4865 = vrot.slane %v4860, %v4864
    %v4867 = vadd.f32 %v4856, %v4865
    %v4868 = vadd.f32 %v4859, %v4865
    %vm4869 = vcmask 7168
    %4870 = vst.msk [vmem:[%s8] sm:$0xff] %vm4869, %v4867
    %4871 = vst.msk [vmem:[%s8 + $0x8] sm:$0xff] %vm4869, %v4868
    // Predicated region
    $region46: #{tpu_custom_call.1} parent=1 // pred_check
      _
    $region47: #{tpu_custom_call.1} parent=1 // pred_check_branch
      %4873 = sbr.rel (0) target = $region49
    $region48: #{tpu_custom_call.1} parent=1 // pred_region
      _
    $region49: #{tpu_custom_call.1} parent=1 // pred_fallthru
      _
    // Predicated region
    $region50: #{tpu_custom_call.1} parent=1 // pred_check
      _
    $region51: #{tpu_custom_call.1} parent=1 // pred_check_branch
      %4875 = sbr.rel (0) target = $region53
    $region52: #{tpu_custom_call.1} parent=1 // pred_region
      _
    $region53: #{tpu_custom_call.1} parent=1 // pred_fallthru
      _
    %4876 = vsyncpa [#allocation4], 1
    %4877 = vsyncpa [#allocation6], 1

</llo_original>
